<compile_context>
chip_gen: v5e
topology: v5e:2x2
jax: 0.10.0
libtpu: 0.0.40
codegen_flags: <defaults>
</compile_context>

<pallas_src>
import functools

import numpy as np
import jax
import jax.numpy as jnp
from jax import lax
from jax.experimental import pallas as pl
from jax.experimental.pallas import tpu as pltpu


# -----------------------------------------------------------------------------
# Fused forward kernel (single invocation, no grid, everything in VMEM).
# -----------------------------------------------------------------------------
def tsem_fused_kernel(xtaps_ref, xlast_ref, xlastT_ref,
                      w1s_ref, shift1_ref, w2_ref, b2_ref,
                      wih_ref, wihT_ref, whhr_ref, whhc_ref, blr_ref, blc_ref,
                      usel_ref,
                      wbig_ref, shift2_ref, wcls_ref, bl_ref,
                      out_ref, z_ref):
    # xtaps_ref:  (B, K, T*F) bf16  pre-shifted, lane-aligned conv taps
    # xlast_ref:  (T, F)      bf16  last batch row (the only one the LSTM output uses)
    # xlastT_ref: (F, T)      bf16  same, transposed (for the column-orientation xproj)
    # w1s_ref:    (C, K)      bf16  Conv2d(1->C,(K,1)) taps, BN1 scale folded in
    # shift1_ref: (C, 1)      f32   folded BN1 shift (includes conv bias)
    # w2_ref:     (1, C)      bf16  1x1 conv (C->1);  b2_ref: (1,1) f32 bias
    # wih_ref:    (F, 4H)     bf16  LSTM W_ih^T, gate order (i,f,o,g); wihT = (4H,F)
    # whhr_ref:   (H, 4H) f32 / whhc_ref: (4H, H) f32   W_hh in both orientations
    # blr_ref:    (1, 4H) f32 / blc_ref:  (4H, 1) f32   b_ih + b_hh, reordered
    # usel_ref:   (H, T*F)    bf16  upsample(x5)+tile selector over the flat index
    # wbig_ref:   (T*F, T*C)  bf16  folded Conv1d('same') on torch-reshaped view + BN2 scale
    # shift2_ref: (1, T*C)    f32   folded BN2 shift (includes conv bias)
    # wcls_ref:   (T*C, NCP)  bf16  folded mean-pool + Linear, padded to NCP lanes
    # bl_ref:     (1, NCP)    f32   classifier bias, padding lanes = -1e30
    # out_ref:    (B, NCP)    f32   softmax probabilities (padding lanes ~ 0)
    # z_ref:      (B, T*F)    f32   VMEM scratch: gated stage-A rows
    B, K, TF = xtaps_ref.shape
    T, F = xlast_ref.shape
    C = w1s_ref.shape[0]
    H = whhr_ref.shape[0]
    f32 = jnp.float32
    bf16 = jnp.bfloat16

    # ---------------- Stage B: LSTM (last batch row only) ----------------------
    # Input projection hoisted out of the recurrence, computed in BOTH orientations
    # so the per-step recurrence never needs a transpose.
    xproj_r = (jnp.dot(xlast_ref[...], wih_ref[...], preferred_element_type=f32)
               + blr_ref[...])                                        # (T, 4H)
    xproj_c = (jnp.dot(wihT_ref[...], xlastT_ref[...], preferred_element_type=f32)
               + blc_ref[...])                                        # (4H, T)

    whh_r = whhr_ref[...]                                             # (H, 4H) f32
    whh_c = whhc_ref[...]                                             # (4H, H) f32

    h_row = jnp.zeros((1, H), f32)
    c_row = jnp.zeros((1, H), f32)
    h_col = jnp.zeros((H, 1), f32)
    c_col = jnp.zeros((H, 1), f32)

    for t in range(T):                                                # static unroll
        # ROW chain: uses previous step's h_col (VPU mul + XLU sublane-reduce,
        # no MXU round trip on the serial dependence chain).
        g_r = xproj_r[t:t + 1, :] + jnp.sum(h_col * whh_r, axis=0, keepdims=True)   # (1,4H)
        sfo_r = jax.nn.sigmoid(g_r[:, :3 * H])                        # i, f, o
        gg_r = jnp.tanh(g_r[:, 3 * H:])                               # g
        c_row = sfo_r[:, H:2 * H] * c_row + sfo_r[:, :H] * gg_r
        new_h_row = sfo_r[:, 2 * H:3 * H] * jnp.tanh(c_row)

        # COLUMN chain: uses previous step's h_row (VPU mul + XLU lane-reduce).
        g_c = xproj_c[:, t:t + 1] + jnp.sum(h_row * whh_c, axis=1, keepdims=True)   # (4H,1)
        sfo_c = jax.nn.sigmoid(g_c[:3 * H, :])
        gg_c = jnp.tanh(g_c[3 * H:, :])
        c_col = sfo_c[H:2 * H, :] * c_col + sfo_c[:H, :] * gg_c
        h_col = sfo_c[2 * H:3 * H, :] * jnp.tanh(c_col)

        h_row = new_h_row

    # Nearest upsample x5 + tiling over the flat (t*F+f) index as one tiny matmul.
    up_tiled = jnp.dot(h_row.astype(bf16), usel_ref[...],
                       preferred_element_type=f32)                    # (1, T*F) f32

    # ---------------- Stage A per row (aligned-tap matmuls) + gating -----------
    w1s = w1s_ref[...]
    shift1 = shift1_ref[...]
    w2 = w2_ref[...]
    b2 = b2_ref[0, 0]
    for b in range(B):                                                # static unroll
        acc = jnp.dot(w1s, xtaps_ref[b], preferred_element_type=f32)  # (C, T*F)
        y1 = jnp.maximum(acc + shift1, 0.0)                           # folded BN1 + ReLU
        g_b = jnp.dot(w2, y1.astype(bf16), preferred_element_type=f32) + b2
        g_b = jnp.maximum(g_b, 0.0)                                   # (1, T*F)
        z_ref[b:b + 1, :] = g_b * up_tiled                            # torch-reshape + gate

    # ---------------- Stage C, batched over B -----------------------------------
    # Conv1d('same')/BN2/ReLU/mean-pool/Linear are pre-folded into wbig / wcls.
    z = z_ref[...].astype(bf16)                                       # (B, T*F)
    y2 = jnp.dot(z, wbig_ref[...], preferred_element_type=f32) + shift2_ref[...]
    y2 = jnp.maximum(y2, 0.0)                                         # (B, T*C)
    logits = (jnp.dot(y2.astype(bf16), wcls_ref[...], preferred_element_type=f32)
              + bl_ref[...])                                          # (B, NCP)
    m = jnp.max(logits, axis=-1, keepdims=True)
    e = jnp.exp(logits - m)                                           # padded lanes -> 0
    out_ref[...] = e / jnp.sum(e, axis=-1, keepdims=True)


# -----------------------------------------------------------------------------
# One-time parameter preparation (BN folding, gate reorder, operator unfolding,
# bf16 casts of MXU operands, lane padding of the classifier).
# -----------------------------------------------------------------------------
def prepare_params(p, *, T, F, H, K, C, n_class, n_class_pad, eps=1e-5):
    left = (K - 1) // 2                        # PyTorch 'same' pad for even kernels
    scale = 5                                  # Upsampling1D(scale_factor=5)
    assert scale * H == T, "upsample-by-5 of hidden must recover time_step"
    bf16 = jnp.bfloat16

    # Stage A: fold BN1 (inference stats) into the conv taps.
    s1 = p['bn1_gamma'] / jnp.sqrt(p['bn1_var'] + eps)
    w1s = (p['w1'][:, 0, :, 0] * s1[:, None]).astype(bf16)              # (C, K)
    shift1 = ((p['b1'] - p['bn1_mean']) * s1 + p['bn1_beta'])[:, None]  # (C, 1) f32
    w2 = p['w2'][0, :, 0, 0][None, :].astype(bf16)                      # (1, C)
    b2 = p['b2'].reshape(1, 1)                                          # (1, 1) f32

    # Stage B: LSTM weights; reorder gates i,f,g,o -> i,f,o,g so the kernel applies
    # one contiguous sigmoid and one tanh per step.  whh stays f32 (VPU operand).
    perm = np.concatenate([np.arange(0, H), np.arange(H, 2 * H),
                           np.arange(3 * H, 4 * H), np.arange(2 * H, 3 * H)])
    wih_g = p['lstm_wih'][perm]                                        # (4H, F)
    whh_g = p['lstm_whh'][perm]                                        # (4H, H)
    b_g = (p['lstm_bih'] + p['lstm_bhh'])[perm]
    wih = wih_g.T.astype(bf16)                                         # (F, 4H)
    wihT = wih_g.astype(bf16)                                          # (4H, F)
    whh_row = whh_g.T.astype(jnp.float32)                              # (H, 4H)
    whh_col = whh_g.astype(jnp.float32)                                # (4H, H)
    blr = b_g[None, :]                                                 # (1, 4H) f32
    blc = b_g[:, None]                                                 # (4H, 1) f32

    # Upsample+tile selector over flat index j = t*F + f:  up_tiled[j] = h[(j%T)//5].
    j = np.arange(T * F)
    usel = np.zeros((H, T * F), np.float32)
    usel[(j % T) // scale, j] = 1.0
    usel = jnp.asarray(usel).astype(bf16)                              # 0/1: exact in bf16

    # Stage C: Conv1d(F->C, K, 'same') on the torch-reshaped (F, T) view, unfolded
    # into a (T*F, T*C) matrix over the flat row, with BN2 scale folded in.
    # Mean-pool + Linear folded into (T*C, NCP), padded to a lane-friendly width.
    sel = np.zeros((K, T, T), np.float32)                              # sel[k, t_in, t_out]
    for k in range(K):
        for t_out in range(T):
            t_in = t_out + k - left
            if 0 <= t_in < T:
                sel[k, t_in, t_out] = 1.0
    s2 = p['bn2_gamma'] / jnp.sqrt(p['bn2_var'] + eps)
    wbig = jnp.einsum('cfk,kpd->fpdc', p['wc'], jnp.asarray(sel)).reshape(F * T, T * C)
    wbig = (wbig * jnp.tile(s2, T)[None, :]).astype(bf16)              # (T*F, T*C)
    shift2 = jnp.tile((p['bc'] - p['bn2_mean']) * s2 + p['bn2_beta'], T)[None, :]  # f32
    wcls = jnp.tile(p['wl'].T, (T, 1)) / T                             # (T*C, n_class)
    wcls = jnp.pad(wcls, ((0, 0), (0, n_class_pad - n_class))).astype(bf16)
    bl = jnp.pad(p['bl'][None, :], ((0, 0), (0, n_class_pad - n_class)),
                 constant_values=-1e30)                                # (1, NCP) f32

    return dict(w1s=w1s, shift1=shift1, w2=w2, b2=b2,
                wih=wih, wihT=wihT, whh_row=whh_row, whh_col=whh_col,
                blr=blr, blc=blc, usel=usel,
                wbig=wbig, shift2=shift2, wcls=wcls, bl=bl)


# -----------------------------------------------------------------------------
# Forward wrapper: one small tap-building fusion + ONE pallas_call + output slice.
# -----------------------------------------------------------------------------
def tsem_forward(x, prepped, *, n_class):
    B, _, T, F = x.shape
    K = prepped['w1s'].shape[1]
    TF = T * F
    NCP = prepped['bl'].shape[1]
    left = (K - 1) // 2
    right = (K - 1) - left

    # Lane-aligned, pre-shifted conv taps: xtaps[b, k, t*F+f] = x[b, t+k-left, f] (0 OOB).
    x_flat = x.reshape(B, TF)                                          # free bitcast
    xpad = jnp.pad(x_flat, ((0, 0), (left * F, right * F)))
    xtaps = jnp.stack([xpad[:, k * F:k * F + TF] for k in range(K)],
                      axis=1).astype(jnp.bfloat16)                     # (B, K, TF)

    # Only the LAST batch row's recurrence feeds h_out[:, -1, :].
    x_last = x[B - 1, 0]                                               # (T, F)
    xlast_bf = x_last.astype(jnp.bfloat16)
    xlastT_bf = x_last.T.astype(jnp.bfloat16)

    out = pl.pallas_call(
        tsem_fused_kernel,
        out_shape=jax.ShapeDtypeStruct((B, NCP), jnp.float32),
        scratch_shapes=[pltpu.VMEM((B, TF), jnp.float32)],
    )(xtaps, xlast_bf, xlastT_bf,
      prepped['w1s'], prepped['shift1'], prepped['w2'], prepped['b2'],
      prepped['wih'], prepped['wihT'], prepped['whh_row'], prepped['whh_col'],
      prepped['blr'], prepped['blc'], prepped['usel'],
      prepped['wbig'], prepped['shift2'], prepped['wcls'], prepped['bl'])
    return out[:, :n_class]


# -----------------------------------------------------------------------------
# Pure-JAX reference (mirrors PyTorch semantics) for validation.
# -----------------------------------------------------------------------------
def tsem_reference(x, p, *, T, F, H, K, C, n_class):
    eps = 1e-5
    B = x.shape[0]
    left = (K - 1) // 2
    right = (K - 1) - left

    xs = x[:, 0]
    xpad = jnp.pad(xs, ((0, 0), (left, right), (0, 0)))
    patches = jnp.stack([xpad[:, k:k + T, :] for k in range(K)], axis=-1)   # (B,T,F,K)
    y = jnp.einsum('btfk,ck->bctf', patches, p['w1'][:, 0, :, 0]) + p['b1'][None, :, None, None]
    y = ((y - p['bn1_mean'][None, :, None, None])
         / jnp.sqrt(p['bn1_var'][None, :, None, None] + eps)
         * p['bn1_gamma'][None, :, None, None] + p['bn1_beta'][None, :, None, None])
    y = jnp.maximum(y, 0.0)
    g = jnp.maximum(jnp.einsum('bctf,c->btf', y, p['w2'][0, :, 0, 0]) + p['b2'][0], 0.0)
    xr = jnp.reshape(g, (B, F, T))                         # torch.reshape, not transpose

    def lstm_step(carry, xt):
        h, c = carry
        gates = xt @ p['lstm_wih'].T + h @ p['lstm_whh'].T + p['lstm_bih'] + p['lstm_bhh']
        i = jax.nn.sigmoid(gates[:, :H])
        f = jax.nn.sigmoid(gates[:, H:2 * H])
        gg = jnp.tanh(gates[:, 2 * H:3 * H])
        o = jax.nn.sigmoid(gates[:, 3 * H:])
        c = f * c + i * gg
        h = o * jnp.tanh(c)
        return (h, c), None

    init = (jnp.zeros((B, H), jnp.float32), jnp.zeros((B, H), jnp.float32))
    (h_fin, _), _ = lax.scan(lstm_step, init, jnp.transpose(xs, (1, 0, 2)))
    temp = h_fin[-1]                                       # h_out[:, -1, :]
    up = jnp.repeat(temp, 5)                               # (T,)

    z = xr * up[None, None, :]                             # (B, F, T)
    zpad = jnp.pad(z, ((0, 0), (0, 0), (left, right)))
    zpatch = jnp.stack([zpad[:, :, k:k + T] for k in range(K)], axis=-1)    # (B,F,T,K)
    out = jnp.einsum('bftk,cfk->bct', zpatch, p['wc']) + p['bc'][None, :, None]
    out = ((out - p['bn2_mean'][None, :, None])
           / jnp.sqrt(p['bn2_var'][None, :, None] + eps)
           * p['bn2_gamma'][None, :, None] + p['bn2_beta'][None, :, None])
    out = jnp.maximum(out, 0.0)
    pooled = jnp.mean(out, axis=2)                         # AvgPool2d((1, T))
    logits = pooled @ p['wl'].T + p['bl']
    return jax.nn.softmax(logits, axis=1)


# -----------------------------------------------------------------------------
# Deterministic parameter init (synthetic; shapes follow TSEM.__init__).
# -----------------------------------------------------------------------------
def init_params(key, *, T, F, H, K, C, n_class):
    ks = jax.random.split(key, 20)
    r = lambda k, shape, s=0.1: (s * jax.random.normal(k, shape)).astype(jnp.float32)
    return {
        'w1': r(ks[0], (C, 1, K, 1)),
        'b1': r(ks[1], (C,)),
        'bn1_gamma': 1.0 + r(ks[2], (C,)),
        'bn1_beta': r(ks[3], (C,)),
        'bn1_mean': r(ks[4], (C,)),
        'bn1_var': 1.0 + jnp.abs(r(ks[5], (C,))),
        'w2': r(ks[6], (1, C, 1, 1), 0.3),
        'b2': r(ks[7], (1,)),
        'lstm_wih': r(ks[8], (4 * H, F), 0.3),
        'lstm_whh': r(ks[9], (4 * H, H), 0.3),
        'lstm_bih': r(ks[10], (4 * H,), 0.3),
        'lstm_bhh': r(ks[11], (4 * H,), 0.3),
        'wc': r(ks[12], (C, F, K)),
        'bc': r(ks[13], (C,)),
        'bn2_gamma': 1.0 + r(ks[14], (C,)),
        'bn2_beta': r(ks[15], (C,)),
        'bn2_mean': r(ks[16], (C,)),
        'bn2_var': 1.0 + jnp.abs(r(ks[17], (C,))),
        'wl': r(ks[18], (n_class, C)),
        'bl': r(ks[19], (n_class,)),
    }


if __name__ == "__main__":
    # Small shapes: input_shape = (time_step=20, features=8), batch=2,
    # window_size=0.2 -> hidden = kernel = 4, filters_num=32, n_class=6.
    B, T, F = 2, 20, 8
    window = 0.2
    H = int(window * T)      # 4  (LSTM hidden size == conv kernel size)
    K = H
    C = 32                   # filters_num
    n_class = 6
    NCP = 8                  # lane-padded classifier width
    assert 5 * H == T, "upsample-by-5 of hidden must recover time_step"

    key = jax.random.PRNGKey(0)
    kx, kp = jax.random.split(key)
    x = jax.random.normal(kx, (B, 1, T, F), dtype=jnp.float32)
    params = init_params(kp, T=T, F=F, H=H, K=K, C=C, n_class=n_class)

    prepped = prepare_params(params, T=T, F=F, H=H, K=K, C=C,
                             n_class=n_class, n_class_pad=NCP)
    fwd = jax.jit(functools.partial(tsem_forward, n_class=n_class))
    out = jax.block_until_ready(fwd(x, prepped))

    ref = tsem_reference(x, params, T=T, F=F, H=H, K=K, C=C, n_class=n_class)
    np.testing.assert_allclose(np.asarray(out), np.asarray(ref), atol=5e-3, rtol=5e-3)
    assert out.shape == (B, n_class)

    print("KERNEL_OK")
</pallas_src>

<mosaic_0001>
module attributes {stable_mosaic.version = 11 : i64} {
  func.func @tsem_fused_kernel(%arg0: memref<2x4x160xbf16, #tpu.memory_space<vmem>>, %arg1: memref<20x8xbf16, #tpu.memory_space<vmem>>, %arg2: memref<8x20xbf16, #tpu.memory_space<vmem>>, %arg3: memref<32x4xbf16, #tpu.memory_space<vmem>>, %arg4: memref<32x1xf32, #tpu.memory_space<vmem>>, %arg5: memref<1x32xbf16, #tpu.memory_space<vmem>>, %arg6: memref<1x1xf32, #tpu.memory_space<vmem>>, %arg7: memref<8x16xbf16, #tpu.memory_space<vmem>>, %arg8: memref<16x8xbf16, #tpu.memory_space<vmem>>, %arg9: memref<4x16xf32, #tpu.memory_space<vmem>>, %arg10: memref<16x4xf32, #tpu.memory_space<vmem>>, %arg11: memref<1x16xf32, #tpu.memory_space<vmem>>, %arg12: memref<16x1xf32, #tpu.memory_space<vmem>>, %arg13: memref<4x160xbf16, #tpu.memory_space<vmem>>, %arg14: memref<160x640xbf16, #tpu.memory_space<vmem>>, %arg15: memref<1x640xf32, #tpu.memory_space<vmem>>, %arg16: memref<640x8xbf16, #tpu.memory_space<vmem>>, %arg17: memref<1x8xf32, #tpu.memory_space<vmem>>, %arg18: memref<2x8xf32, #tpu.memory_space<vmem>>, %arg19: memref<2x160xf32, #tpu.memory_space<vmem>>) attributes {dimension_semantics = [], scalar_prefetch = 0 : i64, scratch_operands = 1 : i64, tpu.core_type = #tpu.core_type<tc>} {
    %c0 = arith.constant 0 : index
    %c0_0 = arith.constant 0 : index
    %0 = vector.load %arg1[%c0, %c0_0] : memref<20x8xbf16, #tpu.memory_space<vmem>>, vector<20x8xbf16>
    %c0_1 = arith.constant 0 : index
    %c0_2 = arith.constant 0 : index
    %1 = vector.load %arg7[%c0_1, %c0_2] : memref<8x16xbf16, #tpu.memory_space<vmem>>, vector<8x16xbf16>
    %cst = arith.constant dense<0.000000e+00> : vector<20x16xf32>
    %2 = tpu.matmul %0, %1, %cst {dimension_numbers = #tpu.dot_dimension_numbers<[1], [0], [0], [1], [0, 0, 1, 1], [], []>} : vector<20x8xbf16>, vector<8x16xbf16>, vector<20x16xf32> -> vector<20x16xf32>
    %c0_3 = arith.constant 0 : index
    %c0_4 = arith.constant 0 : index
    %3 = vector.load %arg11[%c0_3, %c0_4] : memref<1x16xf32, #tpu.memory_space<vmem>>, vector<1x16xf32>
    %4 = vector.broadcast %3 : vector<1x16xf32> to vector<20x16xf32>
    %5 = arith.addf %2, %4 : vector<20x16xf32>
    %c0_5 = arith.constant 0 : index
    %c0_6 = arith.constant 0 : index
    %6 = vector.load %arg8[%c0_5, %c0_6] : memref<16x8xbf16, #tpu.memory_space<vmem>>, vector<16x8xbf16>
    %c0_7 = arith.constant 0 : index
    %c0_8 = arith.constant 0 : index
    %7 = vector.load %arg2[%c0_7, %c0_8] : memref<8x20xbf16, #tpu.memory_space<vmem>>, vector<8x20xbf16>
    %cst_9 = arith.constant dense<0.000000e+00> : vector<16x20xf32>
    %8 = tpu.matmul %6, %7, %cst_9 {dimension_numbers = #tpu.dot_dimension_numbers<[1], [0], [0], [1], [0, 0, 1, 1], [], []>} : vector<16x8xbf16>, vector<8x20xbf16>, vector<16x20xf32> -> vector<16x20xf32>
    %c0_10 = arith.constant 0 : index
    %c0_11 = arith.constant 0 : index
    %9 = vector.load %arg12[%c0_10, %c0_11] : memref<16x1xf32, #tpu.memory_space<vmem>>, vector<16x1xf32>
    %10 = vector.broadcast %9 : vector<16x1xf32> to vector<16x20xf32>
    %11 = arith.addf %8, %10 : vector<16x20xf32>
    %c0_12 = arith.constant 0 : index
    %c0_13 = arith.constant 0 : index
    %12 = vector.load %arg9[%c0_12, %c0_13] : memref<4x16xf32, #tpu.memory_space<vmem>>, vector<4x16xf32>
    %c0_14 = arith.constant 0 : index
    %c0_15 = arith.constant 0 : index
    %13 = vector.load %arg10[%c0_14, %c0_15] : memref<16x4xf32, #tpu.memory_space<vmem>>, vector<16x4xf32>
    %cst_16 = arith.constant 0.000000e+00 : f32
    %14 = vector.broadcast %cst_16 : f32 to vector<1x4xf32>
    %cst_17 = arith.constant 0.000000e+00 : f32
    %15 = vector.broadcast %cst_17 : f32 to vector<1x4xf32>
    %cst_18 = arith.constant 0.000000e+00 : f32
    %16 = vector.broadcast %cst_18 : f32 to vector<4x1xf32>
    %cst_19 = arith.constant 0.000000e+00 : f32
    %17 = vector.broadcast %cst_19 : f32 to vector<4x1xf32>
    %18 = vector.extract_strided_slice %5 {offsets = [0, 0], sizes = [1, 16], strides = [1, 1]} : vector<20x16xf32> to vector<1x16xf32>
    %19 = vector.broadcast %16 : vector<4x1xf32> to vector<4x16xf32>
    %20 = arith.mulf %19, %12 : vector<4x16xf32>
    %cst_20 = arith.constant dense<0.000000e+00> : vector<16xf32>
    %21 = vector.multi_reduction <add>, %20, %cst_20 [0] : vector<4x16xf32> to vector<16xf32>
    %22 = vector.shape_cast %21 : vector<16xf32> to vector<1x16xf32>
    %23 = arith.addf %18, %22 : vector<1x16xf32>
    %24 = vector.extract_strided_slice %23 {offsets = [0, 0], sizes = [1, 12], strides = [1, 1]} : vector<1x16xf32> to vector<1x12xf32>
    %25 = arith.negf %24 : vector<1x12xf32>
    %26 = math.exp %25 : vector<1x12xf32>
    %cst_21 = arith.constant 1.000000e+00 : f32
    %27 = vector.broadcast %cst_21 : f32 to vector<1x12xf32>
    %28 = arith.addf %27, %26 : vector<1x12xf32>
    %29 = arith.divf %27, %28 : vector<1x12xf32>
    %30 = vector.extract_strided_slice %23 {offsets = [0, 12], sizes = [1, 4], strides = [1, 1]} : vector<1x16xf32> to vector<1x4xf32>
    %31 = math.tanh %30 : vector<1x4xf32>
    %32 = vector.extract_strided_slice %29 {offsets = [0, 4], sizes = [1, 4], strides = [1, 1]} : vector<1x12xf32> to vector<1x4xf32>
    %33 = arith.mulf %32, %15 : vector<1x4xf32>
    %34 = vector.extract_strided_slice %29 {offsets = [0, 0], sizes = [1, 4], strides = [1, 1]} : vector<1x12xf32> to vector<1x4xf32>
    %35 = arith.mulf %34, %31 : vector<1x4xf32>
    %36 = arith.addf %33, %35 : vector<1x4xf32>
    %37 = vector.extract_strided_slice %29 {offsets = [0, 8], sizes = [1, 4], strides = [1, 1]} : vector<1x12xf32> to vector<1x4xf32>
    %38 = math.tanh %36 : vector<1x4xf32>
    %39 = arith.mulf %37, %38 : vector<1x4xf32>
    %40 = vector.extract_strided_slice %11 {offsets = [0, 0], sizes = [16, 1], strides = [1, 1]} : vector<16x20xf32> to vector<16x1xf32>
    %41 = vector.broadcast %14 : vector<1x4xf32> to vector<16x4xf32>
    %42 = arith.mulf %41, %13 : vector<16x4xf32>
    %cst_22 = arith.constant dense<0.000000e+00> : vector<16xf32>
    %43 = vector.multi_reduction <add>, %42, %cst_22 [1] : vector<16x4xf32> to vector<16xf32>
    %44 = vector.shape_cast %43 : vector<16xf32> to vector<16x1xf32>
    %45 = arith.addf %40, %44 : vector<16x1xf32>
    %46 = vector.extract_strided_slice %45 {offsets = [0, 0], sizes = [12, 1], strides = [1, 1]} : vector<16x1xf32> to vector<12x1xf32>
    %47 = arith.negf %46 : vector<12x1xf32>
    %48 = math.exp %47 : vector<12x1xf32>
    %cst_23 = arith.constant 1.000000e+00 : f32
    %49 = vector.broadcast %cst_23 : f32 to vector<12x1xf32>
    %50 = arith.addf %49, %48 : vector<12x1xf32>
    %51 = arith.divf %49, %50 : vector<12x1xf32>
    %52 = vector.extract_strided_slice %45 {offsets = [12, 0], sizes = [4, 1], strides = [1, 1]} : vector<16x1xf32> to vector<4x1xf32>
    %53 = math.tanh %52 : vector<4x1xf32>
    %54 = vector.extract_strided_slice %51 {offsets = [4, 0], sizes = [4, 1], strides = [1, 1]} : vector<12x1xf32> to vector<4x1xf32>
    %55 = arith.mulf %54, %17 : vector<4x1xf32>
    %56 = vector.extract_strided_slice %51 {offsets = [0, 0], sizes = [4, 1], strides = [1, 1]} : vector<12x1xf32> to vector<4x1xf32>
    %57 = arith.mulf %56, %53 : vector<4x1xf32>
    %58 = arith.addf %55, %57 : vector<4x1xf32>
    %59 = vector.extract_strided_slice %51 {offsets = [8, 0], sizes = [4, 1], strides = [1, 1]} : vector<12x1xf32> to vector<4x1xf32>
    %60 = math.tanh %58 : vector<4x1xf32>
    %61 = arith.mulf %59, %60 : vector<4x1xf32>
    %62 = vector.extract_strided_slice %5 {offsets = [1, 0], sizes = [1, 16], strides = [1, 1]} : vector<20x16xf32> to vector<1x16xf32>
    %63 = vector.broadcast %61 : vector<4x1xf32> to vector<4x16xf32>
    %64 = arith.mulf %63, %12 : vector<4x16xf32>
    %cst_24 = arith.constant dense<0.000000e+00> : vector<16xf32>
    %65 = vector.multi_reduction <add>, %64, %cst_24 [0] : vector<4x16xf32> to vector<16xf32>
    %66 = vector.shape_cast %65 : vector<16xf32> to vector<1x16xf32>
    %67 = arith.addf %62, %66 : vector<1x16xf32>
    %68 = vector.extract_strided_slice %67 {offsets = [0, 0], sizes = [1, 12], strides = [1, 1]} : vector<1x16xf32> to vector<1x12xf32>
    %69 = arith.negf %68 : vector<1x12xf32>
    %70 = math.exp %69 : vector<1x12xf32>
    %cst_25 = arith.constant 1.000000e+00 : f32
    %71 = vector.broadcast %cst_25 : f32 to vector<1x12xf32>
    %72 = arith.addf %71, %70 : vector<1x12xf32>
    %73 = arith.divf %71, %72 : vector<1x12xf32>
    %74 = vector.extract_strided_slice %67 {offsets = [0, 12], sizes = [1, 4], strides = [1, 1]} : vector<1x16xf32> to vector<1x4xf32>
    %75 = math.tanh %74 : vector<1x4xf32>
    %76 = vector.extract_strided_slice %73 {offsets = [0, 4], sizes = [1, 4], strides = [1, 1]} : vector<1x12xf32> to vector<1x4xf32>
    %77 = arith.mulf %76, %36 : vector<1x4xf32>
    %78 = vector.extract_strided_slice %73 {offsets = [0, 0], sizes = [1, 4], strides = [1, 1]} : vector<1x12xf32> to vector<1x4xf32>
    %79 = arith.mulf %78, %75 : vector<1x4xf32>
    %80 = arith.addf %77, %79 : vector<1x4xf32>
    %81 = vector.extract_strided_slice %73 {offsets = [0, 8], sizes = [1, 4], strides = [1, 1]} : vector<1x12xf32> to vector<1x4xf32>
    %82 = math.tanh %80 : vector<1x4xf32>
    %83 = arith.mulf %81, %82 : vector<1x4xf32>
    %84 = vector.extract_strided_slice %11 {offsets = [0, 1], sizes = [16, 1], strides = [1, 1]} : vector<16x20xf32> to vector<16x1xf32>
    %85 = vector.broadcast %39 : vector<1x4xf32> to vector<16x4xf32>
    %86 = arith.mulf %85, %13 : vector<16x4xf32>
    %cst_26 = arith.constant dense<0.000000e+00> : vector<16xf32>
    %87 = vector.multi_reduction <add>, %86, %cst_26 [1] : vector<16x4xf32> to vector<16xf32>
    %88 = vector.shape_cast %87 : vector<16xf32> to vector<16x1xf32>
    %89 = arith.addf %84, %88 : vector<16x1xf32>
    %90 = vector.extract_strided_slice %89 {offsets = [0, 0], sizes = [12, 1], strides = [1, 1]} : vector<16x1xf32> to vector<12x1xf32>
    %91 = arith.negf %90 : vector<12x1xf32>
    %92 = math.exp %91 : vector<12x1xf32>
    %cst_27 = arith.constant 1.000000e+00 : f32
    %93 = vector.broadcast %cst_27 : f32 to vector<12x1xf32>
    %94 = arith.addf %93, %92 : vector<12x1xf32>
    %95 = arith.divf %93, %94 : vector<12x1xf32>
    %96 = vector.extract_strided_slice %89 {offsets = [12, 0], sizes = [4, 1], strides = [1, 1]} : vector<16x1xf32> to vector<4x1xf32>
    %97 = math.tanh %96 : vector<4x1xf32>
    %98 = vector.extract_strided_slice %95 {offsets = [4, 0], sizes = [4, 1], strides = [1, 1]} : vector<12x1xf32> to vector<4x1xf32>
    %99 = arith.mulf %98, %58 : vector<4x1xf32>
    %100 = vector.extract_strided_slice %95 {offsets = [0, 0], sizes = [4, 1], strides = [1, 1]} : vector<12x1xf32> to vector<4x1xf32>
    %101 = arith.mulf %100, %97 : vector<4x1xf32>
    %102 = arith.addf %99, %101 : vector<4x1xf32>
    %103 = vector.extract_strided_slice %95 {offsets = [8, 0], sizes = [4, 1], strides = [1, 1]} : vector<12x1xf32> to vector<4x1xf32>
    %104 = math.tanh %102 : vector<4x1xf32>
    %105 = arith.mulf %103, %104 : vector<4x1xf32>
    %106 = vector.extract_strided_slice %5 {offsets = [2, 0], sizes = [1, 16], strides = [1, 1]} : vector<20x16xf32> to vector<1x16xf32>
    %107 = vector.broadcast %105 : vector<4x1xf32> to vector<4x16xf32>
    %108 = arith.mulf %107, %12 : vector<4x16xf32>
    %cst_28 = arith.constant dense<0.000000e+00> : vector<16xf32>
    %109 = vector.multi_reduction <add>, %108, %cst_28 [0] : vector<4x16xf32> to vector<16xf32>
    %110 = vector.shape_cast %109 : vector<16xf32> to vector<1x16xf32>
    %111 = arith.addf %106, %110 : vector<1x16xf32>
    %112 = vector.extract_strided_slice %111 {offsets = [0, 0], sizes = [1, 12], strides = [1, 1]} : vector<1x16xf32> to vector<1x12xf32>
    %113 = arith.negf %112 : vector<1x12xf32>
    %114 = math.exp %113 : vector<1x12xf32>
    %cst_29 = arith.constant 1.000000e+00 : f32
    %115 = vector.broadcast %cst_29 : f32 to vector<1x12xf32>
    %116 = arith.addf %115, %114 : vector<1x12xf32>
    %117 = arith.divf %115, %116 : vector<1x12xf32>
    %118 = vector.extract_strided_slice %111 {offsets = [0, 12], sizes = [1, 4], strides = [1, 1]} : vector<1x16xf32> to vector<1x4xf32>
    %119 = math.tanh %118 : vector<1x4xf32>
    %120 = vector.extract_strided_slice %117 {offsets = [0, 4], sizes = [1, 4], strides = [1, 1]} : vector<1x12xf32> to vector<1x4xf32>
    %121 = arith.mulf %120, %80 : vector<1x4xf32>
    %122 = vector.extract_strided_slice %117 {offsets = [0, 0], sizes = [1, 4], strides = [1, 1]} : vector<1x12xf32> to vector<1x4xf32>
    %123 = arith.mulf %122, %119 : vector<1x4xf32>
    %124 = arith.addf %121, %123 : vector<1x4xf32>
    %125 = vector.extract_strided_slice %117 {offsets = [0, 8], sizes = [1, 4], strides = [1, 1]} : vector<1x12xf32> to vector<1x4xf32>
    %126 = math.tanh %124 : vector<1x4xf32>
    %127 = arith.mulf %125, %126 : vector<1x4xf32>
    %128 = vector.extract_strided_slice %11 {offsets = [0, 2], sizes = [16, 1], strides = [1, 1]} : vector<16x20xf32> to vector<16x1xf32>
    %129 = vector.broadcast %83 : vector<1x4xf32> to vector<16x4xf32>
    %130 = arith.mulf %129, %13 : vector<16x4xf32>
    %cst_30 = arith.constant dense<0.000000e+00> : vector<16xf32>
    %131 = vector.multi_reduction <add>, %130, %cst_30 [1] : vector<16x4xf32> to vector<16xf32>
    %132 = vector.shape_cast %131 : vector<16xf32> to vector<16x1xf32>
    %133 = arith.addf %128, %132 : vector<16x1xf32>
    %134 = vector.extract_strided_slice %133 {offsets = [0, 0], sizes = [12, 1], strides = [1, 1]} : vector<16x1xf32> to vector<12x1xf32>
    %135 = arith.negf %134 : vector<12x1xf32>
    %136 = math.exp %135 : vector<12x1xf32>
    %cst_31 = arith.constant 1.000000e+00 : f32
    %137 = vector.broadcast %cst_31 : f32 to vector<12x1xf32>
    %138 = arith.addf %137, %136 : vector<12x1xf32>
    %139 = arith.divf %137, %138 : vector<12x1xf32>
    %140 = vector.extract_strided_slice %133 {offsets = [12, 0], sizes = [4, 1], strides = [1, 1]} : vector<16x1xf32> to vector<4x1xf32>
    %141 = math.tanh %140 : vector<4x1xf32>
    %142 = vector.extract_strided_slice %139 {offsets = [4, 0], sizes = [4, 1], strides = [1, 1]} : vector<12x1xf32> to vector<4x1xf32>
    %143 = arith.mulf %142, %102 : vector<4x1xf32>
    %144 = vector.extract_strided_slice %139 {offsets = [0, 0], sizes = [4, 1], strides = [1, 1]} : vector<12x1xf32> to vector<4x1xf32>
    %145 = arith.mulf %144, %141 : vector<4x1xf32>
    %146 = arith.addf %143, %145 : vector<4x1xf32>
    %147 = vector.extract_strided_slice %139 {offsets = [8, 0], sizes = [4, 1], strides = [1, 1]} : vector<12x1xf32> to vector<4x1xf32>
    %148 = math.tanh %146 : vector<4x1xf32>
    %149 = arith.mulf %147, %148 : vector<4x1xf32>
    %150 = vector.extract_strided_slice %5 {offsets = [3, 0], sizes = [1, 16], strides = [1, 1]} : vector<20x16xf32> to vector<1x16xf32>
    %151 = vector.broadcast %149 : vector<4x1xf32> to vector<4x16xf32>
    %152 = arith.mulf %151, %12 : vector<4x16xf32>
    %cst_32 = arith.constant dense<0.000000e+00> : vector<16xf32>
    %153 = vector.multi_reduction <add>, %152, %cst_32 [0] : vector<4x16xf32> to vector<16xf32>
    %154 = vector.shape_cast %153 : vector<16xf32> to vector<1x16xf32>
    %155 = arith.addf %150, %154 : vector<1x16xf32>
    %156 = vector.extract_strided_slice %155 {offsets = [0, 0], sizes = [1, 12], strides = [1, 1]} : vector<1x16xf32> to vector<1x12xf32>
    %157 = arith.negf %156 : vector<1x12xf32>
    %158 = math.exp %157 : vector<1x12xf32>
    %cst_33 = arith.constant 1.000000e+00 : f32
    %159 = vector.broadcast %cst_33 : f32 to vector<1x12xf32>
    %160 = arith.addf %159, %158 : vector<1x12xf32>
    %161 = arith.divf %159, %160 : vector<1x12xf32>
    %162 = vector.extract_strided_slice %155 {offsets = [0, 12], sizes = [1, 4], strides = [1, 1]} : vector<1x16xf32> to vector<1x4xf32>
    %163 = math.tanh %162 : vector<1x4xf32>
    %164 = vector.extract_strided_slice %161 {offsets = [0, 4], sizes = [1, 4], strides = [1, 1]} : vector<1x12xf32> to vector<1x4xf32>
    %165 = arith.mulf %164, %124 : vector<1x4xf32>
    %166 = vector.extract_strided_slice %161 {offsets = [0, 0], sizes = [1, 4], strides = [1, 1]} : vector<1x12xf32> to vector<1x4xf32>
    %167 = arith.mulf %166, %163 : vector<1x4xf32>
    %168 = arith.addf %165, %167 : vector<1x4xf32>
    %169 = vector.extract_strided_slice %161 {offsets = [0, 8], sizes = [1, 4], strides = [1, 1]} : vector<1x12xf32> to vector<1x4xf32>
    %170 = math.tanh %168 : vector<1x4xf32>
    %171 = arith.mulf %169, %170 : vector<1x4xf32>
    %172 = vector.extract_strided_slice %11 {offsets = [0, 3], sizes = [16, 1], strides = [1, 1]} : vector<16x20xf32> to vector<16x1xf32>
    %173 = vector.broadcast %127 : vector<1x4xf32> to vector<16x4xf32>
    %174 = arith.mulf %173, %13 : vector<16x4xf32>
    %cst_34 = arith.constant dense<0.000000e+00> : vector<16xf32>
    %175 = vector.multi_reduction <add>, %174, %cst_34 [1] : vector<16x4xf32> to vector<16xf32>
    %176 = vector.shape_cast %175 : vector<16xf32> to vector<16x1xf32>
    %177 = arith.addf %172, %176 : vector<16x1xf32>
    %178 = vector.extract_strided_slice %177 {offsets = [0, 0], sizes = [12, 1], strides = [1, 1]} : vector<16x1xf32> to vector<12x1xf32>
    %179 = arith.negf %178 : vector<12x1xf32>
    %180 = math.exp %179 : vector<12x1xf32>
    %cst_35 = arith.constant 1.000000e+00 : f32
    %181 = vector.broadcast %cst_35 : f32 to vector<12x1xf32>
    %182 = arith.addf %181, %180 : vector<12x1xf32>
    %183 = arith.divf %181, %182 : vector<12x1xf32>
    %184 = vector.extract_strided_slice %177 {offsets = [12, 0], sizes = [4, 1], strides = [1, 1]} : vector<16x1xf32> to vector<4x1xf32>
    %185 = math.tanh %184 : vector<4x1xf32>
    %186 = vector.extract_strided_slice %183 {offsets = [4, 0], sizes = [4, 1], strides = [1, 1]} : vector<12x1xf32> to vector<4x1xf32>
    %187 = arith.mulf %186, %146 : vector<4x1xf32>
    %188 = vector.extract_strided_slice %183 {offsets = [0, 0], sizes = [4, 1], strides = [1, 1]} : vector<12x1xf32> to vector<4x1xf32>
    %189 = arith.mulf %188, %185 : vector<4x1xf32>
    %190 = arith.addf %187, %189 : vector<4x1xf32>
    %191 = vector.extract_strided_slice %183 {offsets = [8, 0], sizes = [4, 1], strides = [1, 1]} : vector<12x1xf32> to vector<4x1xf32>
    %192 = math.tanh %190 : vector<4x1xf32>
    %193 = arith.mulf %191, %192 : vector<4x1xf32>
    %194 = vector.extract_strided_slice %5 {offsets = [4, 0], sizes = [1, 16], strides = [1, 1]} : vector<20x16xf32> to vector<1x16xf32>
    %195 = vector.broadcast %193 : vector<4x1xf32> to vector<4x16xf32>
    %196 = arith.mulf %195, %12 : vector<4x16xf32>
    %cst_36 = arith.constant dense<0.000000e+00> : vector<16xf32>
    %197 = vector.multi_reduction <add>, %196, %cst_36 [0] : vector<4x16xf32> to vector<16xf32>
    %198 = vector.shape_cast %197 : vector<16xf32> to vector<1x16xf32>
    %199 = arith.addf %194, %198 : vector<1x16xf32>
    %200 = vector.extract_strided_slice %199 {offsets = [0, 0], sizes = [1, 12], strides = [1, 1]} : vector<1x16xf32> to vector<1x12xf32>
    %201 = arith.negf %200 : vector<1x12xf32>
    %202 = math.exp %201 : vector<1x12xf32>
    %cst_37 = arith.constant 1.000000e+00 : f32
    %203 = vector.broadcast %cst_37 : f32 to vector<1x12xf32>
    %204 = arith.addf %203, %202 : vector<1x12xf32>
    %205 = arith.divf %203, %204 : vector<1x12xf32>
    %206 = vector.extract_strided_slice %199 {offsets = [0, 12], sizes = [1, 4], strides = [1, 1]} : vector<1x16xf32> to vector<1x4xf32>
    %207 = math.tanh %206 : vector<1x4xf32>
    %208 = vector.extract_strided_slice %205 {offsets = [0, 4], sizes = [1, 4], strides = [1, 1]} : vector<1x12xf32> to vector<1x4xf32>
    %209 = arith.mulf %208, %168 : vector<1x4xf32>
    %210 = vector.extract_strided_slice %205 {offsets = [0, 0], sizes = [1, 4], strides = [1, 1]} : vector<1x12xf32> to vector<1x4xf32>
    %211 = arith.mulf %210, %207 : vector<1x4xf32>
    %212 = arith.addf %209, %211 : vector<1x4xf32>
    %213 = vector.extract_strided_slice %205 {offsets = [0, 8], sizes = [1, 4], strides = [1, 1]} : vector<1x12xf32> to vector<1x4xf32>
    %214 = math.tanh %212 : vector<1x4xf32>
    %215 = arith.mulf %213, %214 : vector<1x4xf32>
    %216 = vector.extract_strided_slice %11 {offsets = [0, 4], sizes = [16, 1], strides = [1, 1]} : vector<16x20xf32> to vector<16x1xf32>
    %217 = vector.broadcast %171 : vector<1x4xf32> to vector<16x4xf32>
    %218 = arith.mulf %217, %13 : vector<16x4xf32>
    %cst_38 = arith.constant dense<0.000000e+00> : vector<16xf32>
    %219 = vector.multi_reduction <add>, %218, %cst_38 [1] : vector<16x4xf32> to vector<16xf32>
    %220 = vector.shape_cast %219 : vector<16xf32> to vector<16x1xf32>
    %221 = arith.addf %216, %220 : vector<16x1xf32>
    %222 = vector.extract_strided_slice %221 {offsets = [0, 0], sizes = [12, 1], strides = [1, 1]} : vector<16x1xf32> to vector<12x1xf32>
    %223 = arith.negf %222 : vector<12x1xf32>
    %224 = math.exp %223 : vector<12x1xf32>
    %cst_39 = arith.constant 1.000000e+00 : f32
    %225 = vector.broadcast %cst_39 : f32 to vector<12x1xf32>
    %226 = arith.addf %225, %224 : vector<12x1xf32>
    %227 = arith.divf %225, %226 : vector<12x1xf32>
    %228 = vector.extract_strided_slice %221 {offsets = [12, 0], sizes = [4, 1], strides = [1, 1]} : vector<16x1xf32> to vector<4x1xf32>
    %229 = math.tanh %228 : vector<4x1xf32>
    %230 = vector.extract_strided_slice %227 {offsets = [4, 0], sizes = [4, 1], strides = [1, 1]} : vector<12x1xf32> to vector<4x1xf32>
    %231 = arith.mulf %230, %190 : vector<4x1xf32>
    %232 = vector.extract_strided_slice %227 {offsets = [0, 0], sizes = [4, 1], strides = [1, 1]} : vector<12x1xf32> to vector<4x1xf32>
    %233 = arith.mulf %232, %229 : vector<4x1xf32>
    %234 = arith.addf %231, %233 : vector<4x1xf32>
    %235 = vector.extract_strided_slice %227 {offsets = [8, 0], sizes = [4, 1], strides = [1, 1]} : vector<12x1xf32> to vector<4x1xf32>
    %236 = math.tanh %234 : vector<4x1xf32>
    %237 = arith.mulf %235, %236 : vector<4x1xf32>
    %238 = vector.extract_strided_slice %5 {offsets = [5, 0], sizes = [1, 16], strides = [1, 1]} : vector<20x16xf32> to vector<1x16xf32>
    %239 = vector.broadcast %237 : vector<4x1xf32> to vector<4x16xf32>
    %240 = arith.mulf %239, %12 : vector<4x16xf32>
    %cst_40 = arith.constant dense<0.000000e+00> : vector<16xf32>
    %241 = vector.multi_reduction <add>, %240, %cst_40 [0] : vector<4x16xf32> to vector<16xf32>
    %242 = vector.shape_cast %241 : vector<16xf32> to vector<1x16xf32>
    %243 = arith.addf %238, %242 : vector<1x16xf32>
    %244 = vector.extract_strided_slice %243 {offsets = [0, 0], sizes = [1, 12], strides = [1, 1]} : vector<1x16xf32> to vector<1x12xf32>
    %245 = arith.negf %244 : vector<1x12xf32>
    %246 = math.exp %245 : vector<1x12xf32>
    %cst_41 = arith.constant 1.000000e+00 : f32
    %247 = vector.broadcast %cst_41 : f32 to vector<1x12xf32>
    %248 = arith.addf %247, %246 : vector<1x12xf32>
    %249 = arith.divf %247, %248 : vector<1x12xf32>
    %250 = vector.extract_strided_slice %243 {offsets = [0, 12], sizes = [1, 4], strides = [1, 1]} : vector<1x16xf32> to vector<1x4xf32>
    %251 = math.tanh %250 : vector<1x4xf32>
    %252 = vector.extract_strided_slice %249 {offsets = [0, 4], sizes = [1, 4], strides = [1, 1]} : vector<1x12xf32> to vector<1x4xf32>
    %253 = arith.mulf %252, %212 : vector<1x4xf32>
    %254 = vector.extract_strided_slice %249 {offsets = [0, 0], sizes = [1, 4], strides = [1, 1]} : vector<1x12xf32> to vector<1x4xf32>
    %255 = arith.mulf %254, %251 : vector<1x4xf32>
    %256 = arith.addf %253, %255 : vector<1x4xf32>
    %257 = vector.extract_strided_slice %249 {offsets = [0, 8], sizes = [1, 4], strides = [1, 1]} : vector<1x12xf32> to vector<1x4xf32>
    %258 = math.tanh %256 : vector<1x4xf32>
    %259 = arith.mulf %257, %258 : vector<1x4xf32>
    %260 = vector.extract_strided_slice %11 {offsets = [0, 5], sizes = [16, 1], strides = [1, 1]} : vector<16x20xf32> to vector<16x1xf32>
    %261 = vector.broadcast %215 : vector<1x4xf32> to vector<16x4xf32>
    %262 = arith.mulf %261, %13 : vector<16x4xf32>
    %cst_42 = arith.constant dense<0.000000e+00> : vector<16xf32>
    %263 = vector.multi_reduction <add>, %262, %cst_42 [1] : vector<16x4xf32> to vector<16xf32>
    %264 = vector.shape_cast %263 : vector<16xf32> to vector<16x1xf32>
    %265 = arith.addf %260, %264 : vector<16x1xf32>
    %266 = vector.extract_strided_slice %265 {offsets = [0, 0], sizes = [12, 1], strides = [1, 1]} : vector<16x1xf32> to vector<12x1xf32>
    %267 = arith.negf %266 : vector<12x1xf32>
    %268 = math.exp %267 : vector<12x1xf32>
    %cst_43 = arith.constant 1.000000e+00 : f32
    %269 = vector.broadcast %cst_43 : f32 to vector<12x1xf32>
    %270 = arith.addf %269, %268 : vector<12x1xf32>
    %271 = arith.divf %269, %270 : vector<12x1xf32>
    %272 = vector.extract_strided_slice %265 {offsets = [12, 0], sizes = [4, 1], strides = [1, 1]} : vector<16x1xf32> to vector<4x1xf32>
    %273 = math.tanh %272 : vector<4x1xf32>
    %274 = vector.extract_strided_slice %271 {offsets = [4, 0], sizes = [4, 1], strides = [1, 1]} : vector<12x1xf32> to vector<4x1xf32>
    %275 = arith.mulf %274, %234 : vector<4x1xf32>
    %276 = vector.extract_strided_slice %271 {offsets = [0, 0], sizes = [4, 1], strides = [1, 1]} : vector<12x1xf32> to vector<4x1xf32>
    %277 = arith.mulf %276, %273 : vector<4x1xf32>
    %278 = arith.addf %275, %277 : vector<4x1xf32>
    %279 = vector.extract_strided_slice %271 {offsets = [8, 0], sizes = [4, 1], strides = [1, 1]} : vector<12x1xf32> to vector<4x1xf32>
    %280 = math.tanh %278 : vector<4x1xf32>
    %281 = arith.mulf %279, %280 : vector<4x1xf32>
    %282 = vector.extract_strided_slice %5 {offsets = [6, 0], sizes = [1, 16], strides = [1, 1]} : vector<20x16xf32> to vector<1x16xf32>
    %283 = vector.broadcast %281 : vector<4x1xf32> to vector<4x16xf32>
    %284 = arith.mulf %283, %12 : vector<4x16xf32>
    %cst_44 = arith.constant dense<0.000000e+00> : vector<16xf32>
    %285 = vector.multi_reduction <add>, %284, %cst_44 [0] : vector<4x16xf32> to vector<16xf32>
    %286 = vector.shape_cast %285 : vector<16xf32> to vector<1x16xf32>
    %287 = arith.addf %282, %286 : vector<1x16xf32>
    %288 = vector.extract_strided_slice %287 {offsets = [0, 0], sizes = [1, 12], strides = [1, 1]} : vector<1x16xf32> to vector<1x12xf32>
    %289 = arith.negf %288 : vector<1x12xf32>
    %290 = math.exp %289 : vector<1x12xf32>
    %cst_45 = arith.constant 1.000000e+00 : f32
    %291 = vector.broadcast %cst_45 : f32 to vector<1x12xf32>
    %292 = arith.addf %291, %290 : vector<1x12xf32>
    %293 = arith.divf %291, %292 : vector<1x12xf32>
    %294 = vector.extract_strided_slice %287 {offsets = [0, 12], sizes = [1, 4], strides = [1, 1]} : vector<1x16xf32> to vector<1x4xf32>
    %295 = math.tanh %294 : vector<1x4xf32>
    %296 = vector.extract_strided_slice %293 {offsets = [0, 4], sizes = [1, 4], strides = [1, 1]} : vector<1x12xf32> to vector<1x4xf32>
    %297 = arith.mulf %296, %256 : vector<1x4xf32>
    %298 = vector.extract_strided_slice %293 {offsets = [0, 0], sizes = [1, 4], strides = [1, 1]} : vector<1x12xf32> to vector<1x4xf32>
    %299 = arith.mulf %298, %295 : vector<1x4xf32>
    %300 = arith.addf %297, %299 : vector<1x4xf32>
    %301 = vector.extract_strided_slice %293 {offsets = [0, 8], sizes = [1, 4], strides = [1, 1]} : vector<1x12xf32> to vector<1x4xf32>
    %302 = math.tanh %300 : vector<1x4xf32>
    %303 = arith.mulf %301, %302 : vector<1x4xf32>
    %304 = vector.extract_strided_slice %11 {offsets = [0, 6], sizes = [16, 1], strides = [1, 1]} : vector<16x20xf32> to vector<16x1xf32>
    %305 = vector.broadcast %259 : vector<1x4xf32> to vector<16x4xf32>
    %306 = arith.mulf %305, %13 : vector<16x4xf32>
    %cst_46 = arith.constant dense<0.000000e+00> : vector<16xf32>
    %307 = vector.multi_reduction <add>, %306, %cst_46 [1] : vector<16x4xf32> to vector<16xf32>
    %308 = vector.shape_cast %307 : vector<16xf32> to vector<16x1xf32>
    %309 = arith.addf %304, %308 : vector<16x1xf32>
    %310 = vector.extract_strided_slice %309 {offsets = [0, 0], sizes = [12, 1], strides = [1, 1]} : vector<16x1xf32> to vector<12x1xf32>
    %311 = arith.negf %310 : vector<12x1xf32>
    %312 = math.exp %311 : vector<12x1xf32>
    %cst_47 = arith.constant 1.000000e+00 : f32
    %313 = vector.broadcast %cst_47 : f32 to vector<12x1xf32>
    %314 = arith.addf %313, %312 : vector<12x1xf32>
    %315 = arith.divf %313, %314 : vector<12x1xf32>
    %316 = vector.extract_strided_slice %309 {offsets = [12, 0], sizes = [4, 1], strides = [1, 1]} : vector<16x1xf32> to vector<4x1xf32>
    %317 = math.tanh %316 : vector<4x1xf32>
    %318 = vector.extract_strided_slice %315 {offsets = [4, 0], sizes = [4, 1], strides = [1, 1]} : vector<12x1xf32> to vector<4x1xf32>
    %319 = arith.mulf %318, %278 : vector<4x1xf32>
    %320 = vector.extract_strided_slice %315 {offsets = [0, 0], sizes = [4, 1], strides = [1, 1]} : vector<12x1xf32> to vector<4x1xf32>
    %321 = arith.mulf %320, %317 : vector<4x1xf32>
    %322 = arith.addf %319, %321 : vector<4x1xf32>
    %323 = vector.extract_strided_slice %315 {offsets = [8, 0], sizes = [4, 1], strides = [1, 1]} : vector<12x1xf32> to vector<4x1xf32>
    %324 = math.tanh %322 : vector<4x1xf32>
    %325 = arith.mulf %323, %324 : vector<4x1xf32>
    %326 = vector.extract_strided_slice %5 {offsets = [7, 0], sizes = [1, 16], strides = [1, 1]} : vector<20x16xf32> to vector<1x16xf32>
    %327 = vector.broadcast %325 : vector<4x1xf32> to vector<4x16xf32>
    %328 = arith.mulf %327, %12 : vector<4x16xf32>
    %cst_48 = arith.constant dense<0.000000e+00> : vector<16xf32>
    %329 = vector.multi_reduction <add>, %328, %cst_48 [0] : vector<4x16xf32> to vector<16xf32>
    %330 = vector.shape_cast %329 : vector<16xf32> to vector<1x16xf32>
    %331 = arith.addf %326, %330 : vector<1x16xf32>
    %332 = vector.extract_strided_slice %331 {offsets = [0, 0], sizes = [1, 12], strides = [1, 1]} : vector<1x16xf32> to vector<1x12xf32>
    %333 = arith.negf %332 : vector<1x12xf32>
    %334 = math.exp %333 : vector<1x12xf32>
    %cst_49 = arith.constant 1.000000e+00 : f32
    %335 = vector.broadcast %cst_49 : f32 to vector<1x12xf32>
    %336 = arith.addf %335, %334 : vector<1x12xf32>
    %337 = arith.divf %335, %336 : vector<1x12xf32>
    %338 = vector.extract_strided_slice %331 {offsets = [0, 12], sizes = [1, 4], strides = [1, 1]} : vector<1x16xf32> to vector<1x4xf32>
    %339 = math.tanh %338 : vector<1x4xf32>
    %340 = vector.extract_strided_slice %337 {offsets = [0, 4], sizes = [1, 4], strides = [1, 1]} : vector<1x12xf32> to vector<1x4xf32>
    %341 = arith.mulf %340, %300 : vector<1x4xf32>
    %342 = vector.extract_strided_slice %337 {offsets = [0, 0], sizes = [1, 4], strides = [1, 1]} : vector<1x12xf32> to vector<1x4xf32>
    %343 = arith.mulf %342, %339 : vector<1x4xf32>
    %344 = arith.addf %341, %343 : vector<1x4xf32>
    %345 = vector.extract_strided_slice %337 {offsets = [0, 8], sizes = [1, 4], strides = [1, 1]} : vector<1x12xf32> to vector<1x4xf32>
    %346 = math.tanh %344 : vector<1x4xf32>
    %347 = arith.mulf %345, %346 : vector<1x4xf32>
    %348 = vector.extract_strided_slice %11 {offsets = [0, 7], sizes = [16, 1], strides = [1, 1]} : vector<16x20xf32> to vector<16x1xf32>
    %349 = vector.broadcast %303 : vector<1x4xf32> to vector<16x4xf32>
    %350 = arith.mulf %349, %13 : vector<16x4xf32>
    %cst_50 = arith.constant dense<0.000000e+00> : vector<16xf32>
    %351 = vector.multi_reduction <add>, %350, %cst_50 [1] : vector<16x4xf32> to vector<16xf32>
    %352 = vector.shape_cast %351 : vector<16xf32> to vector<16x1xf32>
    %353 = arith.addf %348, %352 : vector<16x1xf32>
    %354 = vector.extract_strided_slice %353 {offsets = [0, 0], sizes = [12, 1], strides = [1, 1]} : vector<16x1xf32> to vector<12x1xf32>
    %355 = arith.negf %354 : vector<12x1xf32>
    %356 = math.exp %355 : vector<12x1xf32>
    %cst_51 = arith.constant 1.000000e+00 : f32
    %357 = vector.broadcast %cst_51 : f32 to vector<12x1xf32>
    %358 = arith.addf %357, %356 : vector<12x1xf32>
    %359 = arith.divf %357, %358 : vector<12x1xf32>
    %360 = vector.extract_strided_slice %353 {offsets = [12, 0], sizes = [4, 1], strides = [1, 1]} : vector<16x1xf32> to vector<4x1xf32>
    %361 = math.tanh %360 : vector<4x1xf32>
    %362 = vector.extract_strided_slice %359 {offsets = [4, 0], sizes = [4, 1], strides = [1, 1]} : vector<12x1xf32> to vector<4x1xf32>
    %363 = arith.mulf %362, %322 : vector<4x1xf32>
    %364 = vector.extract_strided_slice %359 {offsets = [0, 0], sizes = [4, 1], strides = [1, 1]} : vector<12x1xf32> to vector<4x1xf32>
    %365 = arith.mulf %364, %361 : vector<4x1xf32>
    %366 = arith.addf %363, %365 : vector<4x1xf32>
    %367 = vector.extract_strided_slice %359 {offsets = [8, 0], sizes = [4, 1], strides = [1, 1]} : vector<12x1xf32> to vector<4x1xf32>
    %368 = math.tanh %366 : vector<4x1xf32>
    %369 = arith.mulf %367, %368 : vector<4x1xf32>
    %370 = vector.extract_strided_slice %5 {offsets = [8, 0], sizes = [1, 16], strides = [1, 1]} : vector<20x16xf32> to vector<1x16xf32>
    %371 = vector.broadcast %369 : vector<4x1xf32> to vector<4x16xf32>
    %372 = arith.mulf %371, %12 : vector<4x16xf32>
    %cst_52 = arith.constant dense<0.000000e+00> : vector<16xf32>
    %373 = vector.multi_reduction <add>, %372, %cst_52 [0] : vector<4x16xf32> to vector<16xf32>
    %374 = vector.shape_cast %373 : vector<16xf32> to vector<1x16xf32>
    %375 = arith.addf %370, %374 : vector<1x16xf32>
    %376 = vector.extract_strided_slice %375 {offsets = [0, 0], sizes = [1, 12], strides = [1, 1]} : vector<1x16xf32> to vector<1x12xf32>
    %377 = arith.negf %376 : vector<1x12xf32>
    %378 = math.exp %377 : vector<1x12xf32>
    %cst_53 = arith.constant 1.000000e+00 : f32
    %379 = vector.broadcast %cst_53 : f32 to vector<1x12xf32>
    %380 = arith.addf %379, %378 : vector<1x12xf32>
    %381 = arith.divf %379, %380 : vector<1x12xf32>
    %382 = vector.extract_strided_slice %375 {offsets = [0, 12], sizes = [1, 4], strides = [1, 1]} : vector<1x16xf32> to vector<1x4xf32>
    %383 = math.tanh %382 : vector<1x4xf32>
    %384 = vector.extract_strided_slice %381 {offsets = [0, 4], sizes = [1, 4], strides = [1, 1]} : vector<1x12xf32> to vector<1x4xf32>
    %385 = arith.mulf %384, %344 : vector<1x4xf32>
    %386 = vector.extract_strided_slice %381 {offsets = [0, 0], sizes = [1, 4], strides = [1, 1]} : vector<1x12xf32> to vector<1x4xf32>
    %387 = arith.mulf %386, %383 : vector<1x4xf32>
    %388 = arith.addf %385, %387 : vector<1x4xf32>
    %389 = vector.extract_strided_slice %381 {offsets = [0, 8], sizes = [1, 4], strides = [1, 1]} : vector<1x12xf32> to vector<1x4xf32>
    %390 = math.tanh %388 : vector<1x4xf32>
    %391 = arith.mulf %389, %390 : vector<1x4xf32>
    %392 = vector.extract_strided_slice %11 {offsets = [0, 8], sizes = [16, 1], strides = [1, 1]} : vector<16x20xf32> to vector<16x1xf32>
    %393 = vector.broadcast %347 : vector<1x4xf32> to vector<16x4xf32>
    %394 = arith.mulf %393, %13 : vector<16x4xf32>
    %cst_54 = arith.constant dense<0.000000e+00> : vector<16xf32>
    %395 = vector.multi_reduction <add>, %394, %cst_54 [1] : vector<16x4xf32> to vector<16xf32>
    %396 = vector.shape_cast %395 : vector<16xf32> to vector<16x1xf32>
    %397 = arith.addf %392, %396 : vector<16x1xf32>
    %398 = vector.extract_strided_slice %397 {offsets = [0, 0], sizes = [12, 1], strides = [1, 1]} : vector<16x1xf32> to vector<12x1xf32>
    %399 = arith.negf %398 : vector<12x1xf32>
    %400 = math.exp %399 : vector<12x1xf32>
    %cst_55 = arith.constant 1.000000e+00 : f32
    %401 = vector.broadcast %cst_55 : f32 to vector<12x1xf32>
    %402 = arith.addf %401, %400 : vector<12x1xf32>
    %403 = arith.divf %401, %402 : vector<12x1xf32>
    %404 = vector.extract_strided_slice %397 {offsets = [12, 0], sizes = [4, 1], strides = [1, 1]} : vector<16x1xf32> to vector<4x1xf32>
    %405 = math.tanh %404 : vector<4x1xf32>
    %406 = vector.extract_strided_slice %403 {offsets = [4, 0], sizes = [4, 1], strides = [1, 1]} : vector<12x1xf32> to vector<4x1xf32>
    %407 = arith.mulf %406, %366 : vector<4x1xf32>
    %408 = vector.extract_strided_slice %403 {offsets = [0, 0], sizes = [4, 1], strides = [1, 1]} : vector<12x1xf32> to vector<4x1xf32>
    %409 = arith.mulf %408, %405 : vector<4x1xf32>
    %410 = arith.addf %407, %409 : vector<4x1xf32>
    %411 = vector.extract_strided_slice %403 {offsets = [8, 0], sizes = [4, 1], strides = [1, 1]} : vector<12x1xf32> to vector<4x1xf32>
    %412 = math.tanh %410 : vector<4x1xf32>
    %413 = arith.mulf %411, %412 : vector<4x1xf32>
    %414 = vector.extract_strided_slice %5 {offsets = [9, 0], sizes = [1, 16], strides = [1, 1]} : vector<20x16xf32> to vector<1x16xf32>
    %415 = vector.broadcast %413 : vector<4x1xf32> to vector<4x16xf32>
    %416 = arith.mulf %415, %12 : vector<4x16xf32>
    %cst_56 = arith.constant dense<0.000000e+00> : vector<16xf32>
    %417 = vector.multi_reduction <add>, %416, %cst_56 [0] : vector<4x16xf32> to vector<16xf32>
    %418 = vector.shape_cast %417 : vector<16xf32> to vector<1x16xf32>
    %419 = arith.addf %414, %418 : vector<1x16xf32>
    %420 = vector.extract_strided_slice %419 {offsets = [0, 0], sizes = [1, 12], strides = [1, 1]} : vector<1x16xf32> to vector<1x12xf32>
    %421 = arith.negf %420 : vector<1x12xf32>
    %422 = math.exp %421 : vector<1x12xf32>
    %cst_57 = arith.constant 1.000000e+00 : f32
    %423 = vector.broadcast %cst_57 : f32 to vector<1x12xf32>
    %424 = arith.addf %423, %422 : vector<1x12xf32>
    %425 = arith.divf %423, %424 : vector<1x12xf32>
    %426 = vector.extract_strided_slice %419 {offsets = [0, 12], sizes = [1, 4], strides = [1, 1]} : vector<1x16xf32> to vector<1x4xf32>
    %427 = math.tanh %426 : vector<1x4xf32>
    %428 = vector.extract_strided_slice %425 {offsets = [0, 4], sizes = [1, 4], strides = [1, 1]} : vector<1x12xf32> to vector<1x4xf32>
    %429 = arith.mulf %428, %388 : vector<1x4xf32>
    %430 = vector.extract_strided_slice %425 {offsets = [0, 0], sizes = [1, 4], strides = [1, 1]} : vector<1x12xf32> to vector<1x4xf32>
    %431 = arith.mulf %430, %427 : vector<1x4xf32>
    %432 = arith.addf %429, %431 : vector<1x4xf32>
    %433 = vector.extract_strided_slice %425 {offsets = [0, 8], sizes = [1, 4], strides = [1, 1]} : vector<1x12xf32> to vector<1x4xf32>
    %434 = math.tanh %432 : vector<1x4xf32>
    %435 = arith.mulf %433, %434 : vector<1x4xf32>
    %436 = vector.extract_strided_slice %11 {offsets = [0, 9], sizes = [16, 1], strides = [1, 1]} : vector<16x20xf32> to vector<16x1xf32>
    %437 = vector.broadcast %391 : vector<1x4xf32> to vector<16x4xf32>
    %438 = arith.mulf %437, %13 : vector<16x4xf32>
    %cst_58 = arith.constant dense<0.000000e+00> : vector<16xf32>
    %439 = vector.multi_reduction <add>, %438, %cst_58 [1] : vector<16x4xf32> to vector<16xf32>
    %440 = vector.shape_cast %439 : vector<16xf32> to vector<16x1xf32>
    %441 = arith.addf %436, %440 : vector<16x1xf32>
    %442 = vector.extract_strided_slice %441 {offsets = [0, 0], sizes = [12, 1], strides = [1, 1]} : vector<16x1xf32> to vector<12x1xf32>
    %443 = arith.negf %442 : vector<12x1xf32>
    %444 = math.exp %443 : vector<12x1xf32>
    %cst_59 = arith.constant 1.000000e+00 : f32
    %445 = vector.broadcast %cst_59 : f32 to vector<12x1xf32>
    %446 = arith.addf %445, %444 : vector<12x1xf32>
    %447 = arith.divf %445, %446 : vector<12x1xf32>
    %448 = vector.extract_strided_slice %441 {offsets = [12, 0], sizes = [4, 1], strides = [1, 1]} : vector<16x1xf32> to vector<4x1xf32>
    %449 = math.tanh %448 : vector<4x1xf32>
    %450 = vector.extract_strided_slice %447 {offsets = [4, 0], sizes = [4, 1], strides = [1, 1]} : vector<12x1xf32> to vector<4x1xf32>
    %451 = arith.mulf %450, %410 : vector<4x1xf32>
    %452 = vector.extract_strided_slice %447 {offsets = [0, 0], sizes = [4, 1], strides = [1, 1]} : vector<12x1xf32> to vector<4x1xf32>
    %453 = arith.mulf %452, %449 : vector<4x1xf32>
    %454 = arith.addf %451, %453 : vector<4x1xf32>
    %455 = vector.extract_strided_slice %447 {offsets = [8, 0], sizes = [4, 1], strides = [1, 1]} : vector<12x1xf32> to vector<4x1xf32>
    %456 = math.tanh %454 : vector<4x1xf32>
    %457 = arith.mulf %455, %456 : vector<4x1xf32>
    %458 = vector.extract_strided_slice %5 {offsets = [10, 0], sizes = [1, 16], strides = [1, 1]} : vector<20x16xf32> to vector<1x16xf32>
    %459 = vector.broadcast %457 : vector<4x1xf32> to vector<4x16xf32>
    %460 = arith.mulf %459, %12 : vector<4x16xf32>
    %cst_60 = arith.constant dense<0.000000e+00> : vector<16xf32>
    %461 = vector.multi_reduction <add>, %460, %cst_60 [0] : vector<4x16xf32> to vector<16xf32>
    %462 = vector.shape_cast %461 : vector<16xf32> to vector<1x16xf32>
    %463 = arith.addf %458, %462 : vector<1x16xf32>
    %464 = vector.extract_strided_slice %463 {offsets = [0, 0], sizes = [1, 12], strides = [1, 1]} : vector<1x16xf32> to vector<1x12xf32>
    %465 = arith.negf %464 : vector<1x12xf32>
    %466 = math.exp %465 : vector<1x12xf32>
    %cst_61 = arith.constant 1.000000e+00 : f32
    %467 = vector.broadcast %cst_61 : f32 to vector<1x12xf32>
    %468 = arith.addf %467, %466 : vector<1x12xf32>
    %469 = arith.divf %467, %468 : vector<1x12xf32>
    %470 = vector.extract_strided_slice %463 {offsets = [0, 12], sizes = [1, 4], strides = [1, 1]} : vector<1x16xf32> to vector<1x4xf32>
    %471 = math.tanh %470 : vector<1x4xf32>
    %472 = vector.extract_strided_slice %469 {offsets = [0, 4], sizes = [1, 4], strides = [1, 1]} : vector<1x12xf32> to vector<1x4xf32>
    %473 = arith.mulf %472, %432 : vector<1x4xf32>
    %474 = vector.extract_strided_slice %469 {offsets = [0, 0], sizes = [1, 4], strides = [1, 1]} : vector<1x12xf32> to vector<1x4xf32>
    %475 = arith.mulf %474, %471 : vector<1x4xf32>
    %476 = arith.addf %473, %475 : vector<1x4xf32>
    %477 = vector.extract_strided_slice %469 {offsets = [0, 8], sizes = [1, 4], strides = [1, 1]} : vector<1x12xf32> to vector<1x4xf32>
    %478 = math.tanh %476 : vector<1x4xf32>
    %479 = arith.mulf %477, %478 : vector<1x4xf32>
    %480 = vector.extract_strided_slice %11 {offsets = [0, 10], sizes = [16, 1], strides = [1, 1]} : vector<16x20xf32> to vector<16x1xf32>
    %481 = vector.broadcast %435 : vector<1x4xf32> to vector<16x4xf32>
    %482 = arith.mulf %481, %13 : vector<16x4xf32>
    %cst_62 = arith.constant dense<0.000000e+00> : vector<16xf32>
    %483 = vector.multi_reduction <add>, %482, %cst_62 [1] : vector<16x4xf32> to vector<16xf32>
    %484 = vector.shape_cast %483 : vector<16xf32> to vector<16x1xf32>
    %485 = arith.addf %480, %484 : vector<16x1xf32>
    %486 = vector.extract_strided_slice %485 {offsets = [0, 0], sizes = [12, 1], strides = [1, 1]} : vector<16x1xf32> to vector<12x1xf32>
    %487 = arith.negf %486 : vector<12x1xf32>
    %488 = math.exp %487 : vector<12x1xf32>
    %cst_63 = arith.constant 1.000000e+00 : f32
    %489 = vector.broadcast %cst_63 : f32 to vector<12x1xf32>
    %490 = arith.addf %489, %488 : vector<12x1xf32>
    %491 = arith.divf %489, %490 : vector<12x1xf32>
    %492 = vector.extract_strided_slice %485 {offsets = [12, 0], sizes = [4, 1], strides = [1, 1]} : vector<16x1xf32> to vector<4x1xf32>
    %493 = math.tanh %492 : vector<4x1xf32>
    %494 = vector.extract_strided_slice %491 {offsets = [4, 0], sizes = [4, 1], strides = [1, 1]} : vector<12x1xf32> to vector<4x1xf32>
    %495 = arith.mulf %494, %454 : vector<4x1xf32>
    %496 = vector.extract_strided_slice %491 {offsets = [0, 0], sizes = [4, 1], strides = [1, 1]} : vector<12x1xf32> to vector<4x1xf32>
    %497 = arith.mulf %496, %493 : vector<4x1xf32>
    %498 = arith.addf %495, %497 : vector<4x1xf32>
    %499 = vector.extract_strided_slice %491 {offsets = [8, 0], sizes = [4, 1], strides = [1, 1]} : vector<12x1xf32> to vector<4x1xf32>
    %500 = math.tanh %498 : vector<4x1xf32>
    %501 = arith.mulf %499, %500 : vector<4x1xf32>
    %502 = vector.extract_strided_slice %5 {offsets = [11, 0], sizes = [1, 16], strides = [1, 1]} : vector<20x16xf32> to vector<1x16xf32>
    %503 = vector.broadcast %501 : vector<4x1xf32> to vector<4x16xf32>
    %504 = arith.mulf %503, %12 : vector<4x16xf32>
    %cst_64 = arith.constant dense<0.000000e+00> : vector<16xf32>
    %505 = vector.multi_reduction <add>, %504, %cst_64 [0] : vector<4x16xf32> to vector<16xf32>
    %506 = vector.shape_cast %505 : vector<16xf32> to vector<1x16xf32>
    %507 = arith.addf %502, %506 : vector<1x16xf32>
    %508 = vector.extract_strided_slice %507 {offsets = [0, 0], sizes = [1, 12], strides = [1, 1]} : vector<1x16xf32> to vector<1x12xf32>
    %509 = arith.negf %508 : vector<1x12xf32>
    %510 = math.exp %509 : vector<1x12xf32>
    %cst_65 = arith.constant 1.000000e+00 : f32
    %511 = vector.broadcast %cst_65 : f32 to vector<1x12xf32>
    %512 = arith.addf %511, %510 : vector<1x12xf32>
    %513 = arith.divf %511, %512 : vector<1x12xf32>
    %514 = vector.extract_strided_slice %507 {offsets = [0, 12], sizes = [1, 4], strides = [1, 1]} : vector<1x16xf32> to vector<1x4xf32>
    %515 = math.tanh %514 : vector<1x4xf32>
    %516 = vector.extract_strided_slice %513 {offsets = [0, 4], sizes = [1, 4], strides = [1, 1]} : vector<1x12xf32> to vector<1x4xf32>
    %517 = arith.mulf %516, %476 : vector<1x4xf32>
    %518 = vector.extract_strided_slice %513 {offsets = [0, 0], sizes = [1, 4], strides = [1, 1]} : vector<1x12xf32> to vector<1x4xf32>
    %519 = arith.mulf %518, %515 : vector<1x4xf32>
    %520 = arith.addf %517, %519 : vector<1x4xf32>
    %521 = vector.extract_strided_slice %513 {offsets = [0, 8], sizes = [1, 4], strides = [1, 1]} : vector<1x12xf32> to vector<1x4xf32>
    %522 = math.tanh %520 : vector<1x4xf32>
    %523 = arith.mulf %521, %522 : vector<1x4xf32>
    %524 = vector.extract_strided_slice %11 {offsets = [0, 11], sizes = [16, 1], strides = [1, 1]} : vector<16x20xf32> to vector<16x1xf32>
    %525 = vector.broadcast %479 : vector<1x4xf32> to vector<16x4xf32>
    %526 = arith.mulf %525, %13 : vector<16x4xf32>
    %cst_66 = arith.constant dense<0.000000e+00> : vector<16xf32>
    %527 = vector.multi_reduction <add>, %526, %cst_66 [1] : vector<16x4xf32> to vector<16xf32>
    %528 = vector.shape_cast %527 : vector<16xf32> to vector<16x1xf32>
    %529 = arith.addf %524, %528 : vector<16x1xf32>
    %530 = vector.extract_strided_slice %529 {offsets = [0, 0], sizes = [12, 1], strides = [1, 1]} : vector<16x1xf32> to vector<12x1xf32>
    %531 = arith.negf %530 : vector<12x1xf32>
    %532 = math.exp %531 : vector<12x1xf32>
    %cst_67 = arith.constant 1.000000e+00 : f32
    %533 = vector.broadcast %cst_67 : f32 to vector<12x1xf32>
    %534 = arith.addf %533, %532 : vector<12x1xf32>
    %535 = arith.divf %533, %534 : vector<12x1xf32>
    %536 = vector.extract_strided_slice %529 {offsets = [12, 0], sizes = [4, 1], strides = [1, 1]} : vector<16x1xf32> to vector<4x1xf32>
    %537 = math.tanh %536 : vector<4x1xf32>
    %538 = vector.extract_strided_slice %535 {offsets = [4, 0], sizes = [4, 1], strides = [1, 1]} : vector<12x1xf32> to vector<4x1xf32>
    %539 = arith.mulf %538, %498 : vector<4x1xf32>
    %540 = vector.extract_strided_slice %535 {offsets = [0, 0], sizes = [4, 1], strides = [1, 1]} : vector<12x1xf32> to vector<4x1xf32>
    %541 = arith.mulf %540, %537 : vector<4x1xf32>
    %542 = arith.addf %539, %541 : vector<4x1xf32>
    %543 = vector.extract_strided_slice %535 {offsets = [8, 0], sizes = [4, 1], strides = [1, 1]} : vector<12x1xf32> to vector<4x1xf32>
    %544 = math.tanh %542 : vector<4x1xf32>
    %545 = arith.mulf %543, %544 : vector<4x1xf32>
    %546 = vector.extract_strided_slice %5 {offsets = [12, 0], sizes = [1, 16], strides = [1, 1]} : vector<20x16xf32> to vector<1x16xf32>
    %547 = vector.broadcast %545 : vector<4x1xf32> to vector<4x16xf32>
    %548 = arith.mulf %547, %12 : vector<4x16xf32>
    %cst_68 = arith.constant dense<0.000000e+00> : vector<16xf32>
    %549 = vector.multi_reduction <add>, %548, %cst_68 [0] : vector<4x16xf32> to vector<16xf32>
    %550 = vector.shape_cast %549 : vector<16xf32> to vector<1x16xf32>
    %551 = arith.addf %546, %550 : vector<1x16xf32>
    %552 = vector.extract_strided_slice %551 {offsets = [0, 0], sizes = [1, 12], strides = [1, 1]} : vector<1x16xf32> to vector<1x12xf32>
    %553 = arith.negf %552 : vector<1x12xf32>
    %554 = math.exp %553 : vector<1x12xf32>
    %cst_69 = arith.constant 1.000000e+00 : f32
    %555 = vector.broadcast %cst_69 : f32 to vector<1x12xf32>
    %556 = arith.addf %555, %554 : vector<1x12xf32>
    %557 = arith.divf %555, %556 : vector<1x12xf32>
    %558 = vector.extract_strided_slice %551 {offsets = [0, 12], sizes = [1, 4], strides = [1, 1]} : vector<1x16xf32> to vector<1x4xf32>
    %559 = math.tanh %558 : vector<1x4xf32>
    %560 = vector.extract_strided_slice %557 {offsets = [0, 4], sizes = [1, 4], strides = [1, 1]} : vector<1x12xf32> to vector<1x4xf32>
    %561 = arith.mulf %560, %520 : vector<1x4xf32>
    %562 = vector.extract_strided_slice %557 {offsets = [0, 0], sizes = [1, 4], strides = [1, 1]} : vector<1x12xf32> to vector<1x4xf32>
    %563 = arith.mulf %562, %559 : vector<1x4xf32>
    %564 = arith.addf %561, %563 : vector<1x4xf32>
    %565 = vector.extract_strided_slice %557 {offsets = [0, 8], sizes = [1, 4], strides = [1, 1]} : vector<1x12xf32> to vector<1x4xf32>
    %566 = math.tanh %564 : vector<1x4xf32>
    %567 = arith.mulf %565, %566 : vector<1x4xf32>
    %568 = vector.extract_strided_slice %11 {offsets = [0, 12], sizes = [16, 1], strides = [1, 1]} : vector<16x20xf32> to vector<16x1xf32>
    %569 = vector.broadcast %523 : vector<1x4xf32> to vector<16x4xf32>
    %570 = arith.mulf %569, %13 : vector<16x4xf32>
    %cst_70 = arith.constant dense<0.000000e+00> : vector<16xf32>
    %571 = vector.multi_reduction <add>, %570, %cst_70 [1] : vector<16x4xf32> to vector<16xf32>
    %572 = vector.shape_cast %571 : vector<16xf32> to vector<16x1xf32>
    %573 = arith.addf %568, %572 : vector<16x1xf32>
    %574 = vector.extract_strided_slice %573 {offsets = [0, 0], sizes = [12, 1], strides = [1, 1]} : vector<16x1xf32> to vector<12x1xf32>
    %575 = arith.negf %574 : vector<12x1xf32>
    %576 = math.exp %575 : vector<12x1xf32>
    %cst_71 = arith.constant 1.000000e+00 : f32
    %577 = vector.broadcast %cst_71 : f32 to vector<12x1xf32>
    %578 = arith.addf %577, %576 : vector<12x1xf32>
    %579 = arith.divf %577, %578 : vector<12x1xf32>
    %580 = vector.extract_strided_slice %573 {offsets = [12, 0], sizes = [4, 1], strides = [1, 1]} : vector<16x1xf32> to vector<4x1xf32>
    %581 = math.tanh %580 : vector<4x1xf32>
    %582 = vector.extract_strided_slice %579 {offsets = [4, 0], sizes = [4, 1], strides = [1, 1]} : vector<12x1xf32> to vector<4x1xf32>
    %583 = arith.mulf %582, %542 : vector<4x1xf32>
    %584 = vector.extract_strided_slice %579 {offsets = [0, 0], sizes = [4, 1], strides = [1, 1]} : vector<12x1xf32> to vector<4x1xf32>
    %585 = arith.mulf %584, %581 : vector<4x1xf32>
    %586 = arith.addf %583, %585 : vector<4x1xf32>
    %587 = vector.extract_strided_slice %579 {offsets = [8, 0], sizes = [4, 1], strides = [1, 1]} : vector<12x1xf32> to vector<4x1xf32>
    %588 = math.tanh %586 : vector<4x1xf32>
    %589 = arith.mulf %587, %588 : vector<4x1xf32>
    %590 = vector.extract_strided_slice %5 {offsets = [13, 0], sizes = [1, 16], strides = [1, 1]} : vector<20x16xf32> to vector<1x16xf32>
    %591 = vector.broadcast %589 : vector<4x1xf32> to vector<4x16xf32>
    %592 = arith.mulf %591, %12 : vector<4x16xf32>
    %cst_72 = arith.constant dense<0.000000e+00> : vector<16xf32>
    %593 = vector.multi_reduction <add>, %592, %cst_72 [0] : vector<4x16xf32> to vector<16xf32>
    %594 = vector.shape_cast %593 : vector<16xf32> to vector<1x16xf32>
    %595 = arith.addf %590, %594 : vector<1x16xf32>
    %596 = vector.extract_strided_slice %595 {offsets = [0, 0], sizes = [1, 12], strides = [1, 1]} : vector<1x16xf32> to vector<1x12xf32>
    %597 = arith.negf %596 : vector<1x12xf32>
    %598 = math.exp %597 : vector<1x12xf32>
    %cst_73 = arith.constant 1.000000e+00 : f32
    %599 = vector.broadcast %cst_73 : f32 to vector<1x12xf32>
    %600 = arith.addf %599, %598 : vector<1x12xf32>
    %601 = arith.divf %599, %600 : vector<1x12xf32>
    %602 = vector.extract_strided_slice %595 {offsets = [0, 12], sizes = [1, 4], strides = [1, 1]} : vector<1x16xf32> to vector<1x4xf32>
    %603 = math.tanh %602 : vector<1x4xf32>
    %604 = vector.extract_strided_slice %601 {offsets = [0, 4], sizes = [1, 4], strides = [1, 1]} : vector<1x12xf32> to vector<1x4xf32>
    %605 = arith.mulf %604, %564 : vector<1x4xf32>
    %606 = vector.extract_strided_slice %601 {offsets = [0, 0], sizes = [1, 4], strides = [1, 1]} : vector<1x12xf32> to vector<1x4xf32>
    %607 = arith.mulf %606, %603 : vector<1x4xf32>
    %608 = arith.addf %605, %607 : vector<1x4xf32>
    %609 = vector.extract_strided_slice %601 {offsets = [0, 8], sizes = [1, 4], strides = [1, 1]} : vector<1x12xf32> to vector<1x4xf32>
    %610 = math.tanh %608 : vector<1x4xf32>
    %611 = arith.mulf %609, %610 : vector<1x4xf32>
    %612 = vector.extract_strided_slice %11 {offsets = [0, 13], sizes = [16, 1], strides = [1, 1]} : vector<16x20xf32> to vector<16x1xf32>
    %613 = vector.broadcast %567 : vector<1x4xf32> to vector<16x4xf32>
    %614 = arith.mulf %613, %13 : vector<16x4xf32>
    %cst_74 = arith.constant dense<0.000000e+00> : vector<16xf32>
    %615 = vector.multi_reduction <add>, %614, %cst_74 [1] : vector<16x4xf32> to vector<16xf32>
    %616 = vector.shape_cast %615 : vector<16xf32> to vector<16x1xf32>
    %617 = arith.addf %612, %616 : vector<16x1xf32>
    %618 = vector.extract_strided_slice %617 {offsets = [0, 0], sizes = [12, 1], strides = [1, 1]} : vector<16x1xf32> to vector<12x1xf32>
    %619 = arith.negf %618 : vector<12x1xf32>
    %620 = math.exp %619 : vector<12x1xf32>
    %cst_75 = arith.constant 1.000000e+00 : f32
    %621 = vector.broadcast %cst_75 : f32 to vector<12x1xf32>
    %622 = arith.addf %621, %620 : vector<12x1xf32>
    %623 = arith.divf %621, %622 : vector<12x1xf32>
    %624 = vector.extract_strided_slice %617 {offsets = [12, 0], sizes = [4, 1], strides = [1, 1]} : vector<16x1xf32> to vector<4x1xf32>
    %625 = math.tanh %624 : vector<4x1xf32>
    %626 = vector.extract_strided_slice %623 {offsets = [4, 0], sizes = [4, 1], strides = [1, 1]} : vector<12x1xf32> to vector<4x1xf32>
    %627 = arith.mulf %626, %586 : vector<4x1xf32>
    %628 = vector.extract_strided_slice %623 {offsets = [0, 0], sizes = [4, 1], strides = [1, 1]} : vector<12x1xf32> to vector<4x1xf32>
    %629 = arith.mulf %628, %625 : vector<4x1xf32>
    %630 = arith.addf %627, %629 : vector<4x1xf32>
    %631 = vector.extract_strided_slice %623 {offsets = [8, 0], sizes = [4, 1], strides = [1, 1]} : vector<12x1xf32> to vector<4x1xf32>
    %632 = math.tanh %630 : vector<4x1xf32>
    %633 = arith.mulf %631, %632 : vector<4x1xf32>
    %634 = vector.extract_strided_slice %5 {offsets = [14, 0], sizes = [1, 16], strides = [1, 1]} : vector<20x16xf32> to vector<1x16xf32>
    %635 = vector.broadcast %633 : vector<4x1xf32> to vector<4x16xf32>
    %636 = arith.mulf %635, %12 : vector<4x16xf32>
    %cst_76 = arith.constant dense<0.000000e+00> : vector<16xf32>
    %637 = vector.multi_reduction <add>, %636, %cst_76 [0] : vector<4x16xf32> to vector<16xf32>
    %638 = vector.shape_cast %637 : vector<16xf32> to vector<1x16xf32>
    %639 = arith.addf %634, %638 : vector<1x16xf32>
    %640 = vector.extract_strided_slice %639 {offsets = [0, 0], sizes = [1, 12], strides = [1, 1]} : vector<1x16xf32> to vector<1x12xf32>
    %641 = arith.negf %640 : vector<1x12xf32>
    %642 = math.exp %641 : vector<1x12xf32>
    %cst_77 = arith.constant 1.000000e+00 : f32
    %643 = vector.broadcast %cst_77 : f32 to vector<1x12xf32>
    %644 = arith.addf %643, %642 : vector<1x12xf32>
    %645 = arith.divf %643, %644 : vector<1x12xf32>
    %646 = vector.extract_strided_slice %639 {offsets = [0, 12], sizes = [1, 4], strides = [1, 1]} : vector<1x16xf32> to vector<1x4xf32>
    %647 = math.tanh %646 : vector<1x4xf32>
    %648 = vector.extract_strided_slice %645 {offsets = [0, 4], sizes = [1, 4], strides = [1, 1]} : vector<1x12xf32> to vector<1x4xf32>
    %649 = arith.mulf %648, %608 : vector<1x4xf32>
    %650 = vector.extract_strided_slice %645 {offsets = [0, 0], sizes = [1, 4], strides = [1, 1]} : vector<1x12xf32> to vector<1x4xf32>
    %651 = arith.mulf %650, %647 : vector<1x4xf32>
    %652 = arith.addf %649, %651 : vector<1x4xf32>
    %653 = vector.extract_strided_slice %645 {offsets = [0, 8], sizes = [1, 4], strides = [1, 1]} : vector<1x12xf32> to vector<1x4xf32>
    %654 = math.tanh %652 : vector<1x4xf32>
    %655 = arith.mulf %653, %654 : vector<1x4xf32>
    %656 = vector.extract_strided_slice %11 {offsets = [0, 14], sizes = [16, 1], strides = [1, 1]} : vector<16x20xf32> to vector<16x1xf32>
    %657 = vector.broadcast %611 : vector<1x4xf32> to vector<16x4xf32>
    %658 = arith.mulf %657, %13 : vector<16x4xf32>
    %cst_78 = arith.constant dense<0.000000e+00> : vector<16xf32>
    %659 = vector.multi_reduction <add>, %658, %cst_78 [1] : vector<16x4xf32> to vector<16xf32>
    %660 = vector.shape_cast %659 : vector<16xf32> to vector<16x1xf32>
    %661 = arith.addf %656, %660 : vector<16x1xf32>
    %662 = vector.extract_strided_slice %661 {offsets = [0, 0], sizes = [12, 1], strides = [1, 1]} : vector<16x1xf32> to vector<12x1xf32>
    %663 = arith.negf %662 : vector<12x1xf32>
    %664 = math.exp %663 : vector<12x1xf32>
    %cst_79 = arith.constant 1.000000e+00 : f32
    %665 = vector.broadcast %cst_79 : f32 to vector<12x1xf32>
    %666 = arith.addf %665, %664 : vector<12x1xf32>
    %667 = arith.divf %665, %666 : vector<12x1xf32>
    %668 = vector.extract_strided_slice %661 {offsets = [12, 0], sizes = [4, 1], strides = [1, 1]} : vector<16x1xf32> to vector<4x1xf32>
    %669 = math.tanh %668 : vector<4x1xf32>
    %670 = vector.extract_strided_slice %667 {offsets = [4, 0], sizes = [4, 1], strides = [1, 1]} : vector<12x1xf32> to vector<4x1xf32>
    %671 = arith.mulf %670, %630 : vector<4x1xf32>
    %672 = vector.extract_strided_slice %667 {offsets = [0, 0], sizes = [4, 1], strides = [1, 1]} : vector<12x1xf32> to vector<4x1xf32>
    %673 = arith.mulf %672, %669 : vector<4x1xf32>
    %674 = arith.addf %671, %673 : vector<4x1xf32>
    %675 = vector.extract_strided_slice %667 {offsets = [8, 0], sizes = [4, 1], strides = [1, 1]} : vector<12x1xf32> to vector<4x1xf32>
    %676 = math.tanh %674 : vector<4x1xf32>
    %677 = arith.mulf %675, %676 : vector<4x1xf32>
    %678 = vector.extract_strided_slice %5 {offsets = [15, 0], sizes = [1, 16], strides = [1, 1]} : vector<20x16xf32> to vector<1x16xf32>
    %679 = vector.broadcast %677 : vector<4x1xf32> to vector<4x16xf32>
    %680 = arith.mulf %679, %12 : vector<4x16xf32>
    %cst_80 = arith.constant dense<0.000000e+00> : vector<16xf32>
    %681 = vector.multi_reduction <add>, %680, %cst_80 [0] : vector<4x16xf32> to vector<16xf32>
    %682 = vector.shape_cast %681 : vector<16xf32> to vector<1x16xf32>
    %683 = arith.addf %678, %682 : vector<1x16xf32>
    %684 = vector.extract_strided_slice %683 {offsets = [0, 0], sizes = [1, 12], strides = [1, 1]} : vector<1x16xf32> to vector<1x12xf32>
    %685 = arith.negf %684 : vector<1x12xf32>
    %686 = math.exp %685 : vector<1x12xf32>
    %cst_81 = arith.constant 1.000000e+00 : f32
    %687 = vector.broadcast %cst_81 : f32 to vector<1x12xf32>
    %688 = arith.addf %687, %686 : vector<1x12xf32>
    %689 = arith.divf %687, %688 : vector<1x12xf32>
    %690 = vector.extract_strided_slice %683 {offsets = [0, 12], sizes = [1, 4], strides = [1, 1]} : vector<1x16xf32> to vector<1x4xf32>
    %691 = math.tanh %690 : vector<1x4xf32>
    %692 = vector.extract_strided_slice %689 {offsets = [0, 4], sizes = [1, 4], strides = [1, 1]} : vector<1x12xf32> to vector<1x4xf32>
    %693 = arith.mulf %692, %652 : vector<1x4xf32>
    %694 = vector.extract_strided_slice %689 {offsets = [0, 0], sizes = [1, 4], strides = [1, 1]} : vector<1x12xf32> to vector<1x4xf32>
    %695 = arith.mulf %694, %691 : vector<1x4xf32>
    %696 = arith.addf %693, %695 : vector<1x4xf32>
    %697 = vector.extract_strided_slice %689 {offsets = [0, 8], sizes = [1, 4], strides = [1, 1]} : vector<1x12xf32> to vector<1x4xf32>
    %698 = math.tanh %696 : vector<1x4xf32>
    %699 = arith.mulf %697, %698 : vector<1x4xf32>
    %700 = vector.extract_strided_slice %11 {offsets = [0, 15], sizes = [16, 1], strides = [1, 1]} : vector<16x20xf32> to vector<16x1xf32>
    %701 = vector.broadcast %655 : vector<1x4xf32> to vector<16x4xf32>
    %702 = arith.mulf %701, %13 : vector<16x4xf32>
    %cst_82 = arith.constant dense<0.000000e+00> : vector<16xf32>
    %703 = vector.multi_reduction <add>, %702, %cst_82 [1] : vector<16x4xf32> to vector<16xf32>
    %704 = vector.shape_cast %703 : vector<16xf32> to vector<16x1xf32>
    %705 = arith.addf %700, %704 : vector<16x1xf32>
    %706 = vector.extract_strided_slice %705 {offsets = [0, 0], sizes = [12, 1], strides = [1, 1]} : vector<16x1xf32> to vector<12x1xf32>
    %707 = arith.negf %706 : vector<12x1xf32>
    %708 = math.exp %707 : vector<12x1xf32>
    %cst_83 = arith.constant 1.000000e+00 : f32
    %709 = vector.broadcast %cst_83 : f32 to vector<12x1xf32>
    %710 = arith.addf %709, %708 : vector<12x1xf32>
    %711 = arith.divf %709, %710 : vector<12x1xf32>
    %712 = vector.extract_strided_slice %705 {offsets = [12, 0], sizes = [4, 1], strides = [1, 1]} : vector<16x1xf32> to vector<4x1xf32>
    %713 = math.tanh %712 : vector<4x1xf32>
    %714 = vector.extract_strided_slice %711 {offsets = [4, 0], sizes = [4, 1], strides = [1, 1]} : vector<12x1xf32> to vector<4x1xf32>
    %715 = arith.mulf %714, %674 : vector<4x1xf32>
    %716 = vector.extract_strided_slice %711 {offsets = [0, 0], sizes = [4, 1], strides = [1, 1]} : vector<12x1xf32> to vector<4x1xf32>
    %717 = arith.mulf %716, %713 : vector<4x1xf32>
    %718 = arith.addf %715, %717 : vector<4x1xf32>
    %719 = vector.extract_strided_slice %711 {offsets = [8, 0], sizes = [4, 1], strides = [1, 1]} : vector<12x1xf32> to vector<4x1xf32>
    %720 = math.tanh %718 : vector<4x1xf32>
    %721 = arith.mulf %719, %720 : vector<4x1xf32>
    %722 = vector.extract_strided_slice %5 {offsets = [16, 0], sizes = [1, 16], strides = [1, 1]} : vector<20x16xf32> to vector<1x16xf32>
    %723 = vector.broadcast %721 : vector<4x1xf32> to vector<4x16xf32>
    %724 = arith.mulf %723, %12 : vector<4x16xf32>
    %cst_84 = arith.constant dense<0.000000e+00> : vector<16xf32>
    %725 = vector.multi_reduction <add>, %724, %cst_84 [0] : vector<4x16xf32> to vector<16xf32>
    %726 = vector.shape_cast %725 : vector<16xf32> to vector<1x16xf32>
    %727 = arith.addf %722, %726 : vector<1x16xf32>
    %728 = vector.extract_strided_slice %727 {offsets = [0, 0], sizes = [1, 12], strides = [1, 1]} : vector<1x16xf32> to vector<1x12xf32>
    %729 = arith.negf %728 : vector<1x12xf32>
    %730 = math.exp %729 : vector<1x12xf32>
    %cst_85 = arith.constant 1.000000e+00 : f32
    %731 = vector.broadcast %cst_85 : f32 to vector<1x12xf32>
    %732 = arith.addf %731, %730 : vector<1x12xf32>
    %733 = arith.divf %731, %732 : vector<1x12xf32>
    %734 = vector.extract_strided_slice %727 {offsets = [0, 12], sizes = [1, 4], strides = [1, 1]} : vector<1x16xf32> to vector<1x4xf32>
    %735 = math.tanh %734 : vector<1x4xf32>
    %736 = vector.extract_strided_slice %733 {offsets = [0, 4], sizes = [1, 4], strides = [1, 1]} : vector<1x12xf32> to vector<1x4xf32>
    %737 = arith.mulf %736, %696 : vector<1x4xf32>
    %738 = vector.extract_strided_slice %733 {offsets = [0, 0], sizes = [1, 4], strides = [1, 1]} : vector<1x12xf32> to vector<1x4xf32>
    %739 = arith.mulf %738, %735 : vector<1x4xf32>
    %740 = arith.addf %737, %739 : vector<1x4xf32>
    %741 = vector.extract_strided_slice %733 {offsets = [0, 8], sizes = [1, 4], strides = [1, 1]} : vector<1x12xf32> to vector<1x4xf32>
    %742 = math.tanh %740 : vector<1x4xf32>
    %743 = arith.mulf %741, %742 : vector<1x4xf32>
    %744 = vector.extract_strided_slice %11 {offsets = [0, 16], sizes = [16, 1], strides = [1, 1]} : vector<16x20xf32> to vector<16x1xf32>
    %745 = vector.broadcast %699 : vector<1x4xf32> to vector<16x4xf32>
    %746 = arith.mulf %745, %13 : vector<16x4xf32>
    %cst_86 = arith.constant dense<0.000000e+00> : vector<16xf32>
    %747 = vector.multi_reduction <add>, %746, %cst_86 [1] : vector<16x4xf32> to vector<16xf32>
    %748 = vector.shape_cast %747 : vector<16xf32> to vector<16x1xf32>
    %749 = arith.addf %744, %748 : vector<16x1xf32>
    %750 = vector.extract_strided_slice %749 {offsets = [0, 0], sizes = [12, 1], strides = [1, 1]} : vector<16x1xf32> to vector<12x1xf32>
    %751 = arith.negf %750 : vector<12x1xf32>
    %752 = math.exp %751 : vector<12x1xf32>
    %cst_87 = arith.constant 1.000000e+00 : f32
    %753 = vector.broadcast %cst_87 : f32 to vector<12x1xf32>
    %754 = arith.addf %753, %752 : vector<12x1xf32>
    %755 = arith.divf %753, %754 : vector<12x1xf32>
    %756 = vector.extract_strided_slice %749 {offsets = [12, 0], sizes = [4, 1], strides = [1, 1]} : vector<16x1xf32> to vector<4x1xf32>
    %757 = math.tanh %756 : vector<4x1xf32>
    %758 = vector.extract_strided_slice %755 {offsets = [4, 0], sizes = [4, 1], strides = [1, 1]} : vector<12x1xf32> to vector<4x1xf32>
    %759 = arith.mulf %758, %718 : vector<4x1xf32>
    %760 = vector.extract_strided_slice %755 {offsets = [0, 0], sizes = [4, 1], strides = [1, 1]} : vector<12x1xf32> to vector<4x1xf32>
    %761 = arith.mulf %760, %757 : vector<4x1xf32>
    %762 = arith.addf %759, %761 : vector<4x1xf32>
    %763 = vector.extract_strided_slice %755 {offsets = [8, 0], sizes = [4, 1], strides = [1, 1]} : vector<12x1xf32> to vector<4x1xf32>
    %764 = math.tanh %762 : vector<4x1xf32>
    %765 = arith.mulf %763, %764 : vector<4x1xf32>
    %766 = vector.extract_strided_slice %5 {offsets = [17, 0], sizes = [1, 16], strides = [1, 1]} : vector<20x16xf32> to vector<1x16xf32>
    %767 = vector.broadcast %765 : vector<4x1xf32> to vector<4x16xf32>
    %768 = arith.mulf %767, %12 : vector<4x16xf32>
    %cst_88 = arith.constant dense<0.000000e+00> : vector<16xf32>
    %769 = vector.multi_reduction <add>, %768, %cst_88 [0] : vector<4x16xf32> to vector<16xf32>
    %770 = vector.shape_cast %769 : vector<16xf32> to vector<1x16xf32>
    %771 = arith.addf %766, %770 : vector<1x16xf32>
    %772 = vector.extract_strided_slice %771 {offsets = [0, 0], sizes = [1, 12], strides = [1, 1]} : vector<1x16xf32> to vector<1x12xf32>
    %773 = arith.negf %772 : vector<1x12xf32>
    %774 = math.exp %773 : vector<1x12xf32>
    %cst_89 = arith.constant 1.000000e+00 : f32
    %775 = vector.broadcast %cst_89 : f32 to vector<1x12xf32>
    %776 = arith.addf %775, %774 : vector<1x12xf32>
    %777 = arith.divf %775, %776 : vector<1x12xf32>
    %778 = vector.extract_strided_slice %771 {offsets = [0, 12], sizes = [1, 4], strides = [1, 1]} : vector<1x16xf32> to vector<1x4xf32>
    %779 = math.tanh %778 : vector<1x4xf32>
    %780 = vector.extract_strided_slice %777 {offsets = [0, 4], sizes = [1, 4], strides = [1, 1]} : vector<1x12xf32> to vector<1x4xf32>
    %781 = arith.mulf %780, %740 : vector<1x4xf32>
    %782 = vector.extract_strided_slice %777 {offsets = [0, 0], sizes = [1, 4], strides = [1, 1]} : vector<1x12xf32> to vector<1x4xf32>
    %783 = arith.mulf %782, %779 : vector<1x4xf32>
    %784 = arith.addf %781, %783 : vector<1x4xf32>
    %785 = vector.extract_strided_slice %777 {offsets = [0, 8], sizes = [1, 4], strides = [1, 1]} : vector<1x12xf32> to vector<1x4xf32>
    %786 = math.tanh %784 : vector<1x4xf32>
    %787 = arith.mulf %785, %786 : vector<1x4xf32>
    %788 = vector.extract_strided_slice %11 {offsets = [0, 17], sizes = [16, 1], strides = [1, 1]} : vector<16x20xf32> to vector<16x1xf32>
    %789 = vector.broadcast %743 : vector<1x4xf32> to vector<16x4xf32>
    %790 = arith.mulf %789, %13 : vector<16x4xf32>
    %cst_90 = arith.constant dense<0.000000e+00> : vector<16xf32>
    %791 = vector.multi_reduction <add>, %790, %cst_90 [1] : vector<16x4xf32> to vector<16xf32>
    %792 = vector.shape_cast %791 : vector<16xf32> to vector<16x1xf32>
    %793 = arith.addf %788, %792 : vector<16x1xf32>
    %794 = vector.extract_strided_slice %793 {offsets = [0, 0], sizes = [12, 1], strides = [1, 1]} : vector<16x1xf32> to vector<12x1xf32>
    %795 = arith.negf %794 : vector<12x1xf32>
    %796 = math.exp %795 : vector<12x1xf32>
    %cst_91 = arith.constant 1.000000e+00 : f32
    %797 = vector.broadcast %cst_91 : f32 to vector<12x1xf32>
    %798 = arith.addf %797, %796 : vector<12x1xf32>
    %799 = arith.divf %797, %798 : vector<12x1xf32>
    %800 = vector.extract_strided_slice %793 {offsets = [12, 0], sizes = [4, 1], strides = [1, 1]} : vector<16x1xf32> to vector<4x1xf32>
    %801 = math.tanh %800 : vector<4x1xf32>
    %802 = vector.extract_strided_slice %799 {offsets = [4, 0], sizes = [4, 1], strides = [1, 1]} : vector<12x1xf32> to vector<4x1xf32>
    %803 = arith.mulf %802, %762 : vector<4x1xf32>
    %804 = vector.extract_strided_slice %799 {offsets = [0, 0], sizes = [4, 1], strides = [1, 1]} : vector<12x1xf32> to vector<4x1xf32>
    %805 = arith.mulf %804, %801 : vector<4x1xf32>
    %806 = arith.addf %803, %805 : vector<4x1xf32>
    %807 = vector.extract_strided_slice %799 {offsets = [8, 0], sizes = [4, 1], strides = [1, 1]} : vector<12x1xf32> to vector<4x1xf32>
    %808 = math.tanh %806 : vector<4x1xf32>
    %809 = arith.mulf %807, %808 : vector<4x1xf32>
    %810 = vector.extract_strided_slice %5 {offsets = [18, 0], sizes = [1, 16], strides = [1, 1]} : vector<20x16xf32> to vector<1x16xf32>
    %811 = vector.broadcast %809 : vector<4x1xf32> to vector<4x16xf32>
    %812 = arith.mulf %811, %12 : vector<4x16xf32>
    %cst_92 = arith.constant dense<0.000000e+00> : vector<16xf32>
    %813 = vector.multi_reduction <add>, %812, %cst_92 [0] : vector<4x16xf32> to vector<16xf32>
    %814 = vector.shape_cast %813 : vector<16xf32> to vector<1x16xf32>
    %815 = arith.addf %810, %814 : vector<1x16xf32>
    %816 = vector.extract_strided_slice %815 {offsets = [0, 0], sizes = [1, 12], strides = [1, 1]} : vector<1x16xf32> to vector<1x12xf32>
    %817 = arith.negf %816 : vector<1x12xf32>
    %818 = math.exp %817 : vector<1x12xf32>
    %cst_93 = arith.constant 1.000000e+00 : f32
    %819 = vector.broadcast %cst_93 : f32 to vector<1x12xf32>
    %820 = arith.addf %819, %818 : vector<1x12xf32>
    %821 = arith.divf %819, %820 : vector<1x12xf32>
    %822 = vector.extract_strided_slice %815 {offsets = [0, 12], sizes = [1, 4], strides = [1, 1]} : vector<1x16xf32> to vector<1x4xf32>
    %823 = math.tanh %822 : vector<1x4xf32>
    %824 = vector.extract_strided_slice %821 {offsets = [0, 4], sizes = [1, 4], strides = [1, 1]} : vector<1x12xf32> to vector<1x4xf32>
    %825 = arith.mulf %824, %784 : vector<1x4xf32>
    %826 = vector.extract_strided_slice %821 {offsets = [0, 0], sizes = [1, 4], strides = [1, 1]} : vector<1x12xf32> to vector<1x4xf32>
    %827 = arith.mulf %826, %823 : vector<1x4xf32>
    %828 = arith.addf %825, %827 : vector<1x4xf32>
    %829 = vector.extract_strided_slice %11 {offsets = [0, 18], sizes = [16, 1], strides = [1, 1]} : vector<16x20xf32> to vector<16x1xf32>
    %830 = vector.broadcast %787 : vector<1x4xf32> to vector<16x4xf32>
    %831 = arith.mulf %830, %13 : vector<16x4xf32>
    %cst_94 = arith.constant dense<0.000000e+00> : vector<16xf32>
    %832 = vector.multi_reduction <add>, %831, %cst_94 [1] : vector<16x4xf32> to vector<16xf32>
    %833 = vector.shape_cast %832 : vector<16xf32> to vector<16x1xf32>
    %834 = arith.addf %829, %833 : vector<16x1xf32>
    %835 = vector.extract_strided_slice %834 {offsets = [0, 0], sizes = [12, 1], strides = [1, 1]} : vector<16x1xf32> to vector<12x1xf32>
    %836 = arith.negf %835 : vector<12x1xf32>
    %837 = math.exp %836 : vector<12x1xf32>
    %cst_95 = arith.constant 1.000000e+00 : f32
    %838 = vector.broadcast %cst_95 : f32 to vector<12x1xf32>
    %839 = arith.addf %838, %837 : vector<12x1xf32>
    %840 = arith.divf %838, %839 : vector<12x1xf32>
    %841 = vector.extract_strided_slice %834 {offsets = [12, 0], sizes = [4, 1], strides = [1, 1]} : vector<16x1xf32> to vector<4x1xf32>
    %842 = math.tanh %841 : vector<4x1xf32>
    %843 = vector.extract_strided_slice %840 {offsets = [4, 0], sizes = [4, 1], strides = [1, 1]} : vector<12x1xf32> to vector<4x1xf32>
    %844 = arith.mulf %843, %806 : vector<4x1xf32>
    %845 = vector.extract_strided_slice %840 {offsets = [0, 0], sizes = [4, 1], strides = [1, 1]} : vector<12x1xf32> to vector<4x1xf32>
    %846 = arith.mulf %845, %842 : vector<4x1xf32>
    %847 = arith.addf %844, %846 : vector<4x1xf32>
    %848 = vector.extract_strided_slice %840 {offsets = [8, 0], sizes = [4, 1], strides = [1, 1]} : vector<12x1xf32> to vector<4x1xf32>
    %849 = math.tanh %847 : vector<4x1xf32>
    %850 = arith.mulf %848, %849 : vector<4x1xf32>
    %851 = vector.extract_strided_slice %5 {offsets = [19, 0], sizes = [1, 16], strides = [1, 1]} : vector<20x16xf32> to vector<1x16xf32>
    %852 = vector.broadcast %850 : vector<4x1xf32> to vector<4x16xf32>
    %853 = arith.mulf %852, %12 : vector<4x16xf32>
    %cst_96 = arith.constant dense<0.000000e+00> : vector<16xf32>
    %854 = vector.multi_reduction <add>, %853, %cst_96 [0] : vector<4x16xf32> to vector<16xf32>
    %855 = vector.shape_cast %854 : vector<16xf32> to vector<1x16xf32>
    %856 = arith.addf %851, %855 : vector<1x16xf32>
    %857 = vector.extract_strided_slice %856 {offsets = [0, 0], sizes = [1, 12], strides = [1, 1]} : vector<1x16xf32> to vector<1x12xf32>
    %858 = arith.negf %857 : vector<1x12xf32>
    %859 = math.exp %858 : vector<1x12xf32>
    %cst_97 = arith.constant 1.000000e+00 : f32
    %860 = vector.broadcast %cst_97 : f32 to vector<1x12xf32>
    %861 = arith.addf %860, %859 : vector<1x12xf32>
    %862 = arith.divf %860, %861 : vector<1x12xf32>
    %863 = vector.extract_strided_slice %856 {offsets = [0, 12], sizes = [1, 4], strides = [1, 1]} : vector<1x16xf32> to vector<1x4xf32>
    %864 = math.tanh %863 : vector<1x4xf32>
    %865 = vector.extract_strided_slice %862 {offsets = [0, 4], sizes = [1, 4], strides = [1, 1]} : vector<1x12xf32> to vector<1x4xf32>
    %866 = arith.mulf %865, %828 : vector<1x4xf32>
    %867 = vector.extract_strided_slice %862 {offsets = [0, 0], sizes = [1, 4], strides = [1, 1]} : vector<1x12xf32> to vector<1x4xf32>
    %868 = arith.mulf %867, %864 : vector<1x4xf32>
    %869 = arith.addf %866, %868 : vector<1x4xf32>
    %870 = vector.extract_strided_slice %862 {offsets = [0, 8], sizes = [1, 4], strides = [1, 1]} : vector<1x12xf32> to vector<1x4xf32>
    %871 = math.tanh %869 : vector<1x4xf32>
    %872 = arith.mulf %870, %871 : vector<1x4xf32>
    %873 = arith.truncf %872 : vector<1x4xf32> to vector<1x4xbf16>
    %c0_98 = arith.constant 0 : index
    %c0_99 = arith.constant 0 : index
    %874 = vector.load %arg13[%c0_98, %c0_99] : memref<4x160xbf16, #tpu.memory_space<vmem>>, vector<4x160xbf16>
    %cst_100 = arith.constant dense<0.000000e+00> : vector<1x160xf32>
    %875 = tpu.matmul %873, %874, %cst_100 {dimension_numbers = #tpu.dot_dimension_numbers<[1], [0], [0], [1], [0, 0, 1, 1], [], []>} : vector<1x4xbf16>, vector<4x160xbf16>, vector<1x160xf32> -> vector<1x160xf32>
    %c0_101 = arith.constant 0 : index
    %c0_102 = arith.constant 0 : index
    %876 = vector.load %arg3[%c0_101, %c0_102] : memref<32x4xbf16, #tpu.memory_space<vmem>>, vector<32x4xbf16>
    %c0_103 = arith.constant 0 : index
    %c0_104 = arith.constant 0 : index
    %877 = vector.load %arg4[%c0_103, %c0_104] : memref<32x1xf32, #tpu.memory_space<vmem>>, vector<32x1xf32>
    %c0_105 = arith.constant 0 : index
    %c0_106 = arith.constant 0 : index
    %878 = vector.load %arg5[%c0_105, %c0_106] : memref<1x32xbf16, #tpu.memory_space<vmem>>, vector<1x32xbf16>
    %c0_107 = arith.constant 0 : index
    %c0_108 = arith.constant 0 : index
    %879 = vector.load %arg6[%c0_107, %c0_108] : memref<1x1xf32, #tpu.memory_space<vmem>>, vector<1x1xf32>
    %880 = vector.extract %879[0, 0] : f32 from vector<1x1xf32>
    %c0_109 = arith.constant 0 : index
    %c0_110 = arith.constant 0 : index
    %c0_111 = arith.constant 0 : index
    %881 = vector.load %arg0[%c0_109, %c0_110, %c0_111] : memref<2x4x160xbf16, #tpu.memory_space<vmem>>, vector<1x4x160xbf16>
    %882 = vector.shape_cast %881 : vector<1x4x160xbf16> to vector<4x160xbf16>
    %cst_112 = arith.constant dense<0.000000e+00> : vector<32x160xf32>
    %883 = tpu.matmul %876, %882, %cst_112 {dimension_numbers = #tpu.dot_dimension_numbers<[1], [0], [0], [1], [0, 0, 1, 1], [], []>} : vector<32x4xbf16>, vector<4x160xbf16>, vector<32x160xf32> -> vector<32x160xf32>
    %884 = vector.broadcast %877 : vector<32x1xf32> to vector<32x160xf32>
    %885 = arith.addf %883, %884 : vector<32x160xf32>
    %cst_113 = arith.constant 0.000000e+00 : f32
    %886 = vector.broadcast %cst_113 : f32 to vector<32x160xf32>
    %887 = arith.maximumf %885, %886 : vector<32x160xf32>
    %888 = arith.truncf %887 : vector<32x160xf32> to vector<32x160xbf16>
    %cst_114 = arith.constant dense<0.000000e+00> : vector<1x160xf32>
    %889 = tpu.matmul %878, %888, %cst_114 {dimension_numbers = #tpu.dot_dimension_numbers<[1], [0], [0], [1], [0, 0, 1, 1], [], []>} : vector<1x32xbf16>, vector<32x160xbf16>, vector<1x160xf32> -> vector<1x160xf32>
    %890 = vector.broadcast %880 : f32 to vector<1x160xf32>
    %891 = arith.addf %889, %890 : vector<1x160xf32>
    %cst_115 = arith.constant 0.000000e+00 : f32
    %892 = vector.broadcast %cst_115 : f32 to vector<1x160xf32>
    %893 = arith.maximumf %891, %892 : vector<1x160xf32>
    %894 = arith.mulf %893, %875 : vector<1x160xf32>
    %c0_116 = arith.constant 0 : index
    %c0_117 = arith.constant 0 : index
    %895 = vector.load %arg19[%c0_116, %c0_117] : memref<2x160xf32, #tpu.memory_space<vmem>>, vector<1x160xf32>
    tpu.vector_store %arg19[%c0_116, %c0_117], %894 {strides = array<i32>} : memref<2x160xf32, #tpu.memory_space<vmem>>, vector<1x160xf32>,
    %c1 = arith.constant 1 : index
    %c0_118 = arith.constant 0 : index
    %c0_119 = arith.constant 0 : index
    %896 = vector.load %arg0[%c1, %c0_118, %c0_119] : memref<2x4x160xbf16, #tpu.memory_space<vmem>>, vector<1x4x160xbf16>
    %897 = vector.shape_cast %896 : vector<1x4x160xbf16> to vector<4x160xbf16>
    %cst_120 = arith.constant dense<0.000000e+00> : vector<32x160xf32>
    %898 = tpu.matmul %876, %897, %cst_120 {dimension_numbers = #tpu.dot_dimension_numbers<[1], [0], [0], [1], [0, 0, 1, 1], [], []>} : vector<32x4xbf16>, vector<4x160xbf16>, vector<32x160xf32> -> vector<32x160xf32>
    %899 = vector.broadcast %877 : vector<32x1xf32> to vector<32x160xf32>
    %900 = arith.addf %898, %899 : vector<32x160xf32>
    %cst_121 = arith.constant 0.000000e+00 : f32
    %901 = vector.broadcast %cst_121 : f32 to vector<32x160xf32>
    %902 = arith.maximumf %900, %901 : vector<32x160xf32>
    %903 = arith.truncf %902 : vector<32x160xf32> to vector<32x160xbf16>
    %cst_122 = arith.constant dense<0.000000e+00> : vector<1x160xf32>
    %904 = tpu.matmul %878, %903, %cst_122 {dimension_numbers = #tpu.dot_dimension_numbers<[1], [0], [0], [1], [0, 0, 1, 1], [], []>} : vector<1x32xbf16>, vector<32x160xbf16>, vector<1x160xf32> -> vector<1x160xf32>
    %905 = vector.broadcast %880 : f32 to vector<1x160xf32>
    %906 = arith.addf %904, %905 : vector<1x160xf32>
    %cst_123 = arith.constant 0.000000e+00 : f32
    %907 = vector.broadcast %cst_123 : f32 to vector<1x160xf32>
    %908 = arith.maximumf %906, %907 : vector<1x160xf32>
    %909 = arith.mulf %908, %875 : vector<1x160xf32>
    %c1_124 = arith.constant 1 : index
    %c0_125 = arith.constant 0 : index
    %910 = vector.load %arg19[%c1_124, %c0_125] : memref<2x160xf32, #tpu.memory_space<vmem>>, vector<1x160xf32>
    tpu.vector_store %arg19[%c1_124, %c0_125], %909 {strides = array<i32>} : memref<2x160xf32, #tpu.memory_space<vmem>>, vector<1x160xf32>,
    %c0_126 = arith.constant 0 : index
    %c0_127 = arith.constant 0 : index
    %911 = vector.load %arg19[%c0_126, %c0_127] : memref<2x160xf32, #tpu.memory_space<vmem>>, vector<2x160xf32>
    %912 = arith.truncf %911 : vector<2x160xf32> to vector<2x160xbf16>
    %c0_128 = arith.constant 0 : index
    %c0_129 = arith.constant 0 : index
    %913 = vector.load %arg14[%c0_128, %c0_129] : memref<160x640xbf16, #tpu.memory_space<vmem>>, vector<160x640xbf16>
    %cst_130 = arith.constant dense<0.000000e+00> : vector<2x640xf32>
    %914 = tpu.matmul %912, %913, %cst_130 {dimension_numbers = #tpu.dot_dimension_numbers<[1], [0], [0], [1], [0, 0, 1, 1], [], []>} : vector<2x160xbf16>, vector<160x640xbf16>, vector<2x640xf32> -> vector<2x640xf32>
    %c0_131 = arith.constant 0 : index
    %c0_132 = arith.constant 0 : index
    %915 = vector.load %arg15[%c0_131, %c0_132] : memref<1x640xf32, #tpu.memory_space<vmem>>, vector<1x640xf32>
    %916 = vector.broadcast %915 : vector<1x640xf32> to vector<2x640xf32>
    %917 = arith.addf %914, %916 : vector<2x640xf32>
    %cst_133 = arith.constant 0.000000e+00 : f32
    %918 = vector.broadcast %cst_133 : f32 to vector<2x640xf32>
    %919 = arith.maximumf %917, %918 : vector<2x640xf32>
    %920 = arith.truncf %919 : vector<2x640xf32> to vector<2x640xbf16>
    %c0_134 = arith.constant 0 : index
    %c0_135 = arith.constant 0 : index
    %921 = vector.load %arg16[%c0_134, %c0_135] : memref<640x8xbf16, #tpu.memory_space<vmem>>, vector<640x8xbf16>
    %cst_136 = arith.constant dense<0.000000e+00> : vector<2x8xf32>
    %922 = tpu.matmul %920, %921, %cst_136 {dimension_numbers = #tpu.dot_dimension_numbers<[1], [0], [0], [1], [0, 0, 1, 1], [], []>} : vector<2x640xbf16>, vector<640x8xbf16>, vector<2x8xf32> -> vector<2x8xf32>
    %c0_137 = arith.constant 0 : index
    %c0_138 = arith.constant 0 : index
    %923 = vector.load %arg17[%c0_137, %c0_138] : memref<1x8xf32, #tpu.memory_space<vmem>>, vector<1x8xf32>
    %924 = vector.broadcast %923 : vector<1x8xf32> to vector<2x8xf32>
    %925 = arith.addf %922, %924 : vector<2x8xf32>
    %cst_139 = arith.constant dense<0xFF800000> : vector<2xf32>
    %926 = vector.multi_reduction <maximumf>, %925, %cst_139 [1] : vector<2x8xf32> to vector<2xf32>
    %927 = vector.shape_cast %926 : vector<2xf32> to vector<2x1xf32>
    %928 = vector.broadcast %927 : vector<2x1xf32> to vector<2x8xf32>
    %929 = arith.subf %925, %928 : vector<2x8xf32>
    %930 = math.exp %929 : vector<2x8xf32>
    %cst_140 = arith.constant dense<0.000000e+00> : vector<2xf32>
    %931 = vector.multi_reduction <add>, %930, %cst_140 [1] : vector<2x8xf32> to vector<2xf32>
    %932 = vector.shape_cast %931 : vector<2xf32> to vector<2x1xf32>
    %933 = vector.broadcast %932 : vector<2x1xf32> to vector<2x8xf32>
    %934 = arith.divf %930, %933 : vector<2x8xf32>
    %c0_141 = arith.constant 0 : index
    %c0_142 = arith.constant 0 : index
    %935 = vector.load %arg18[%c0_141, %c0_142] : memref<2x8xf32, #tpu.memory_space<vmem>>, vector<2x8xf32>
    tpu.vector_store %arg18[%c0_141, %c0_142], %934 {strides = array<i32>} : memref<2x8xf32, #tpu.memory_space<vmem>>, vector<2x8xf32>,
    return
  }
}

</mosaic_0001>

<llo_original>
// kernel: tsem_forward.1
$region0: #{tsem_forward.1}
  #allocation0 [shape = 'u32[]', space=smem, size = 0x4, offset = 0x4, fixed_abs, tag = 'smem constant byte address 0x4 - core index']
  #allocation1 [shape = 'u32[72,128]{1,0:T(1,128)}', space=vmem, size = 0x9000, scoped, tag = 'internal scratch']
  #allocation2 [shape = 'f32[2,160]{1,0:T(2,128)}', space=vmem, size = 0x800, scoped, tag = 'scratch operand']
  #allocation3 [shape = 'f32[1,1]{1,0:T(1,128)S(1)}', space=vmem, size = 0x200, scoped, tag = 'scoped memory for tsem_forward.1']
  %s0 = inlined_call_operand.vmem [shape: bf16[2,4,160], index: 0, kind: input, shape index: {}]
  %s1 = inlined_call_operand.vmem [shape: bf16[20,8], index: 1, kind: input, shape index: {}]
  %s2 = inlined_call_operand.vmem [shape: bf16[8,20], index: 2, kind: input, shape index: {}]
  %s3 = inlined_call_operand.vmem [shape: bf16[32,4], index: 3, kind: input, shape index: {}]
  %s4 = inlined_call_operand.vmem [shape: f32[32,1], index: 4, kind: input, shape index: {}]
  %s5 = inlined_call_operand.vmem [shape: bf16[1,32], index: 5, kind: input, shape index: {}]
  %s6 = inlined_call_operand.<no memory space> [shape: f32[1,1], index: 6, kind: input, shape index: {}]
  %s7 = inlined_call_operand.vmem [shape: bf16[8,16], index: 7, kind: input, shape index: {}]
  %s8 = inlined_call_operand.vmem [shape: bf16[16,8], index: 8, kind: input, shape index: {}]
  %s9 = inlined_call_operand.vmem [shape: f32[4,16], index: 9, kind: input, shape index: {}]
  %s10 = inlined_call_operand.vmem [shape: f32[16,4], index: 10, kind: input, shape index: {}]
  %s11 = inlined_call_operand.vmem [shape: f32[1,16], index: 11, kind: input, shape index: {}]
  %s12 = inlined_call_operand.vmem [shape: f32[16,1], index: 12, kind: input, shape index: {}]
  %s13 = inlined_call_operand.vmem [shape: bf16[4,160], index: 13, kind: input, shape index: {}]
  %s14 = inlined_call_operand.hbm [shape: bf16[160,640], index: 14, kind: input, shape index: {}]
  %s15 = inlined_call_operand.vmem [shape: f32[1,640], index: 15, kind: input, shape index: {}]
  %s16 = inlined_call_operand.vmem [shape: bf16[640,8], index: 16, kind: input, shape index: {}]
  %s17 = inlined_call_operand.vmem [shape: f32[1,8], index: 17, kind: input, shape index: {}]
  %s18 = inlined_call_operand.hbm [shape: f32[2,8], index: 18, kind: output, shape index: {}]
  %s19 = sld [smem:[#allocation0]]
  $region86: #{tsem_forward.1} parent=0
    _
  %s21 = ssub.s32 1, %s19
  %s22 = scalar_select 0, %s21, %s19
  %v23 = vstv %s6
  %24 = vst [vmem:[#allocation3] sm:$0x1] %v23
  $region1: #{tsem_forward.1} parent=0
    #allocation4 [shape = 'u8[204800]{0}', space=vmem, size = 0x32000, scoped, tag = 'input window, operand 14, single buffered']
    #allocation5 [shape = 's32[1]{0}', space=sflag, size = 0x4, scoped, tag = 'scoped memory for tsem_forward.1']
    #allocation6 [shape = 's32[1]{0}', space=sflag, size = 0x4, scoped, tag = 'scoped memory for tsem_forward.1']
    #allocation7 [shape = 'u8[1024]{0}', space=vmem, size = 0x400, scoped, tag = 'output window, operand 0, single buffered']
    %25 = vsyncpa [#allocation5], 0
    %26 = vsyncpa [#allocation6], 0
    // Predicated region
    $region2: #{tsem_forward.1} parent=1 // pred_check
      _
    $region3: #{tsem_forward.1} parent=1 // pred_check_branch
      %28 = sbr.rel (0) target = $region5
    $region4: #{tsem_forward.1} parent=1 // pred_region
      _
    $region5: #{tsem_forward.1} parent=1 // pred_fallthru
      _
    // Predicated region
    $region6: #{tsem_forward.1} parent=1 // pred_check
      _
    $region7: #{tsem_forward.1} parent=1 // pred_check_branch
      %30 = sbr.rel (0) target = $region9
    $region8: #{tsem_forward.1} parent=1 // pred_region
      _
    $region9: #{tsem_forward.1} parent=1 // pred_fallthru
      _
    // Predicated region
    $region10: #{tsem_forward.1} parent=1 // pred_check
      _
    $region11: #{tsem_forward.1} parent=1 // pred_check_branch
      %32 = sbr.rel (0) target = $region13
    $region12: #{tsem_forward.1} parent=1 // pred_region
      _
    $region13: #{tsem_forward.1} parent=1 // pred_fallthru
      _
    // Predicated region
    $region14: #{tsem_forward.1} parent=1 // pred_check
      _
    $region15: #{tsem_forward.1} parent=1 // pred_check_branch
      %34 = sbr.rel (0) target = $region17
    $region16: #{tsem_forward.1} parent=1 // pred_region
      _
    $region17: #{tsem_forward.1} parent=1 // pred_fallthru
      _
    // Predicated region
    $region18: #{tsem_forward.1} parent=1 // pred_check
      _
    $region19: #{tsem_forward.1} parent=1 // pred_check_branch
      %36 = sbr.rel (0) target = $region21
    $region20: #{tsem_forward.1} parent=1 // pred_region
      _
    $region21: #{tsem_forward.1} parent=1 // pred_fallthru
      _
    // Predicated region
    $region22: #{tsem_forward.1} parent=1 // pred_check
      _
    $region23: #{tsem_forward.1} parent=1 // pred_check_branch
      %38 = sbr.rel (0) target = $region25
    $region24: #{tsem_forward.1} parent=1 // pred_region
      _
    $region25: #{tsem_forward.1} parent=1 // pred_fallthru
      _
    // Predicated region
    $region26: #{tsem_forward.1} parent=1 // pred_check
      _
    $region27: #{tsem_forward.1} parent=1 // pred_check_branch
      %40 = sbr.rel (0) target = $region29
    $region28: #{tsem_forward.1} parent=1 // pred_region
      _
    $region29: #{tsem_forward.1} parent=1 // pred_fallthru
      _
    // Predicated region
    $region30: #{tsem_forward.1} parent=1 // pred_check
      _
    $region31: #{tsem_forward.1} parent=1 // pred_check_branch
      %42 = sbr.rel (0) target = $region33
    $region32: #{tsem_forward.1} parent=1 // pred_region
      _
    $region33: #{tsem_forward.1} parent=1 // pred_fallthru
      _
    // Predicated region
    $region34: #{tsem_forward.1} parent=1 // pred_check
      _
    $region35: #{tsem_forward.1} parent=1 // pred_check_branch
      %44 = sbr.rel (0) target = $region37
    $region36: #{tsem_forward.1} parent=1 // pred_region
      _
    $region37: #{tsem_forward.1} parent=1 // pred_fallthru
      _
    // Predicated region
    $region38: #{tsem_forward.1} parent=1 // pred_check
      _
    $region39: #{tsem_forward.1} parent=1 // pred_check_branch
      %46 = sbr.rel (0) target = $region41
    $region40: #{tsem_forward.1} parent=1 // pred_region
      _
    $region41: #{tsem_forward.1} parent=1 // pred_fallthru
      _
    // Predicated region
    $region42: #{tsem_forward.1} parent=1 // pred_check
      _
    $region43: #{tsem_forward.1} parent=1 // pred_check_branch
      %48 = sbr.rel (0) target = $region45
    $region44: #{tsem_forward.1} parent=1 // pred_region
      _
    $region45: #{tsem_forward.1} parent=1 // pred_fallthru
      _
    // Predicated region
    $region46: #{tsem_forward.1} parent=1 // pred_check
      _
    $region47: #{tsem_forward.1} parent=1 // pred_check_branch
      %50 = sbr.rel (0) target = $region49
    $region48: #{tsem_forward.1} parent=1 // pred_region
      _
    $region49: #{tsem_forward.1} parent=1 // pred_fallthru
      _
    // Predicated region
    $region50: #{tsem_forward.1} parent=1 // pred_check
      _
    $region51: #{tsem_forward.1} parent=1 // pred_check_branch
      %52 = sbr.rel (0) target = $region53
    $region52: #{tsem_forward.1} parent=1 // pred_region
      _
    $region53: #{tsem_forward.1} parent=1 // pred_fallthru
      _
    // Predicated region
    $region54: #{tsem_forward.1} parent=1 // pred_check
      _
    $region55: #{tsem_forward.1} parent=1 // pred_check_branch
      %54 = sbr.rel (0) target = $region57
    $region56: #{tsem_forward.1} parent=1 // pred_region
      _
    $region57: #{tsem_forward.1} parent=1 // pred_fallthru
      _
    // Predicated region
    $region58: #{tsem_forward.1} parent=1 // pred_check
      _
    $region59: #{tsem_forward.1} parent=1 // pred_check_branch
      %56 = sbr.rel (0) target = $region61
    $region60: #{tsem_forward.1} parent=1 // pred_region
      %58 = vsyncadd [#allocation5], 0
      %s59 = sshll.u32 %s14, 4
      %s60 = int_to_ptr.hbm [resolvable:$true] %s59
      %s61 = sshll.u32 [#allocation4], 4
      %s62 = int_to_ptr.vmem [resolvable:$true] %s61
      %67 = dma.hbm_to_vmem [thread:$0]  %s60, 6400, %s62, [#allocation5], 320, 320, 20
    $region61: #{tsem_forward.1} parent=1 // pred_fallthru
      _
    // Predicated region
    $region62: #{tsem_forward.1} parent=1 // pred_check
      _
    $region63: #{tsem_forward.1} parent=1 // pred_check_branch
      %69 = sbr.rel (0) target = $region65
    $region64: #{tsem_forward.1} parent=1 // pred_region
      _
    $region65: #{tsem_forward.1} parent=1 // pred_fallthru
      _
    // Predicated region
    $region66: #{tsem_forward.1} parent=1 // pred_check
      _
    $region67: #{tsem_forward.1} parent=1 // pred_check_branch
      %71 = sbr.rel (0) target = $region69
    $region68: #{tsem_forward.1} parent=1 // pred_region
      _
    $region69: #{tsem_forward.1} parent=1 // pred_fallthru
      _
    // Predicated region
    $region70: #{tsem_forward.1} parent=1 // pred_check
      _
    $region71: #{tsem_forward.1} parent=1 // pred_check_branch
      %73 = sbr.rel (0) target = $region73
    $region72: #{tsem_forward.1} parent=1 // pred_region
      _
    $region73: #{tsem_forward.1} parent=1 // pred_fallthru
      _
    // Predicated region
    $region74: #{tsem_forward.1} parent=1 // pred_check
      _
    $region75: #{tsem_forward.1} parent=1 // pred_check_branch
      %75 = sbr.rel (0) target = $region77
    $region76: #{tsem_forward.1} parent=1 // pred_region
      %77 = dma.done [#allocation5], 6400
    $region77: #{tsem_forward.1} parent=1 // pred_fallthru
      _
    %v79 = vld [vmem:[%s1] sm:$0xf]
    %v80 = vld [vmem:[%s1 + $0x4] sm:$0xf]
    %v81 = vld [vmem:[%s1 + $0x8] sm:$0x3]
    %v82 = vld [vmem:[%s7] sm:$0xf]
    %v83 = vld [vmem:[%s11] sm:$0x1]
    %v85 = vperm.slane %v83, 0
    %v90 = vunpack.c.l.b16 %v79
    %v91 = vunpack.c.l.b16 %v80
    %v92 = vunpack.c.l.b16 %v81
    %v93 = vpack.c.b16 %v91, %v90
    %v94 = vpack.c.b16 %v92, %v92
    %vm95 = vcmask 64512
    %v97 = vsel %vm95, %v93, 0
    %v100 = vsel %vm95, %v94, 0
    %vm102 = vcmask 1043456
    %v104 = vsel %vm102, %v82, 0
    %106 = vmatpush.bf16.msra.mxu0 0
    %107 = vmatpush.bf16.msra.mxu0 0
    %108 = vmatpush.bf16.msra.mxu0 0
    %109 = vmatpush.bf16.msra.mxu0 0
    %110 = vmatpush.bf16.msra.mxu0 0
    %111 = vmatpush.bf16.msra.mxu0 0
    %112 = vmatpush.bf16.msra.mxu0 0
    %113 = vmatpush.bf16.msra.mxu0 %v104
    %114 = vmatmul.bf16.gmra.mxu0 %v97
    %v115 = vpop.f32.mrf.mxu0
    %v116 = vadd.f32 %v85, %v115
    %v117 = vpop.f32.mrf.mxu0
    %v118 = vadd.f32 %v85, %v117
    %119 = vmatmul.bf16.gmra.mxu0 %v100
    %v120 = vpop.f32.mrf.mxu0
    %v121 = vadd.f32 %v85, %v120
    %v122 = vpop.f32.mrf.mxu0
    %123 = vdwg.mxu0
    %v124 = vld [vmem:[%s8] sm:$0xf]
    %v125 = vld [vmem:[%s8 + $0x4] sm:$0xf]
    %v126 = vld [vmem:[%s2] sm:$0xf]
    %v127 = vld [vmem:[%s12] sm:$0xff]
    %v128 = vld [vmem:[%s12 + $0x8] sm:$0xff]
    %130 = vset.pattern.permute.xlu0 0
    %131 = vperm.xlu0 %130, %v127
    %v132 = vpop.permute.xlu0 %131
    %135 = vset.pattern.permute.xlu0 0
    %136 = vperm.xlu0 %135, %v128
    %v137 = vpop.permute.xlu0 %136
    %v141 = vunpack.c.l.b16 %v124
    %v142 = vunpack.c.l.b16 %v125
    %v143 = vpack.c.b16 %v142, %v141
    %v145 = vsel %vm95, %v143, 0
    %v148 = vsel %vm102, %v126, 0
    %150 = vmatpush.bf16.msra.mxu0 0
    %151 = vmatpush.bf16.msra.mxu0 0
    %152 = vmatpush.bf16.msra.mxu0 0
    %153 = vmatpush.bf16.msra.mxu0 0
    %154 = vmatpush.bf16.msra.mxu0 0
    %155 = vmatpush.bf16.msra.mxu0 0
    %156 = vmatpush.bf16.msra.mxu0 0
    %157 = vmatpush.bf16.msra.mxu0 %v148
    %158 = vmatmul.bf16.gmra.mxu0 %v145
    %v159 = vpop.f32.mrf.mxu0
    %v160 = vadd.f32 %v132, %v159
    %v161 = vpop.f32.mrf.mxu0
    %v162 = vadd.f32 %v137, %v161
    %163 = vdwg.mxu0
    %v164 = vld [vmem:[%s9] sm:$0xf]
    %v165 = vld [vmem:[%s10] sm:$0xff]
    %v166 = vld [vmem:[%s10 + $0x8] sm:$0xff]
    %v167 = vmul.f32 %v164, 0.0
    %vm168 = vcmask 125952
    %v169 = vsel %vm168, %v167, 0.0
    %v170 = vrot.slane %v169, 4
    %v171 = vadd.f32 %v169, %v170
    %v172 = vrot.slane %v171, 2
    %v173 = vadd.f32 %v171, %v172
    %v174 = vrot.slane %v173, 1
    %v175 = vadd.f32 %v173, %v174
    %v176 = vadd.f32 %v116, %v175
    %v177 = vxor.u32 %v176, 2147483648
    %v178 = vmul.f32 %v177, 1.442695
    %v179 = vpow.pop %v178
    %v180 = vadd.f32 %v179, 1.0
    %v181 = vrcp.pop %v180
    %v182 = vmul.f32 %v180, %v181
    %v183 = vsub.f32 1.0, %v182
    %v184 = vmul.f32 %v181, %v183
    %v185 = vadd.f32 %v181, %v184
    %vm186 = vweird.f32 %v180
    %vm187 = vweird.f32 %v181
    %vm188 = vmor %vm186, %vm187
    %v189 = vsel %vm188, %v181, %v185
    %v190 = vand.u32 2147483647, %v180
    %vm191 = vcmp.eq.f32.partialorder %v190, 8.507059e+37
    %v192 = vand.u32 %v180, 2147483648
    %v193 = vor.u32 1.1754944e-38, %v192
    %v194 = vsel %vm191, %v193, %v189
    %v195 = vmul.f32 1.0, %v194
    %v196 = vtanh.pop %v176
    %v197 = vmul.f32 %v195, 0.0
    %199 = vrot.lane.b32.xlu0 %v196, 116
    %v200 = vpop.permute.xlu0 %199
    %v202 = vmul.f32 %v195, %v200
    %204 = vrot.lane.b32.xlu0 %v202, 4
    %v205 = vpop.permute.xlu0 %204
    %v207 = vadd.f32 %v197, %v205
    %v208 = vtanh.pop %v207
    %210 = vrot.lane.b32.xlu0 %v208, 4
    %v211 = vpop.permute.xlu0 %210
    %v213 = vmul.f32 %v195, %v211
    %v214 = vmul.f32 %v165, 0.0
    %v215 = vmul.f32 %v166, 0.0
    %vm216 = vcmask 31744
    %v217 = vsel %vm216, %v214, 0.0
    %218 = vadd.xlane.f32.xlu0 %v217
    %v219 = vpop.xlane.xlu0 %218
    %v220 = vsel %vm216, %v215, 0.0
    %221 = vadd.xlane.f32.xlu0 %v220
    %v222 = vpop.xlane.xlu0 %221
    %v223 = vadd.f32 %v160, %v219
    %v224 = vadd.f32 %v162, %v222
    %v225 = vxor.u32 %v223, 2147483648
    %v226 = vxor.u32 %v224, 2147483648
    %v227 = vmul.f32 %v225, 1.442695
    %v228 = vpow.pop %v227
    %v229 = vmul.f32 %v226, 1.442695
    %v230 = vpow.pop %v229
    %v231 = vadd.f32 %v228, 1.0
    %v232 = vadd.f32 %v230, 1.0
    %v233 = vrcp.pop %v231
    %v234 = vmul.f32 %v231, %v233
    %v235 = vsub.f32 1.0, %v234
    %v236 = vmul.f32 %v233, %v235
    %v237 = vadd.f32 %v233, %v236
    %vm238 = vweird.f32 %v231
    %vm239 = vweird.f32 %v233
    %vm240 = vmor %vm238, %vm239
    %v241 = vsel %vm240, %v233, %v237
    %v242 = vand.u32 2147483647, %v231
    %vm243 = vcmp.eq.f32.partialorder %v242, 8.507059e+37
    %v244 = vand.u32 %v231, 2147483648
    %v245 = vor.u32 1.1754944e-38, %v244
    %v246 = vsel %vm243, %v245, %v241
    %v247 = vmul.f32 1.0, %v246
    %v248 = vrcp.pop %v232
    %v249 = vmul.f32 %v232, %v248
    %v250 = vsub.f32 1.0, %v249
    %v251 = vmul.f32 %v248, %v250
    %v252 = vadd.f32 %v248, %v251
    %vm253 = vweird.f32 %v232
    %vm254 = vweird.f32 %v248
    %vm255 = vmor %vm253, %vm254
    %v256 = vsel %vm255, %v248, %v252
    %v257 = vand.u32 2147483647, %v232
    %vm258 = vcmp.eq.f32.partialorder %v257, 8.507059e+37
    %v259 = vand.u32 %v232, 2147483648
    %v260 = vor.u32 1.1754944e-38, %v259
    %v261 = vsel %vm258, %v260, %v256
    %v262 = vmul.f32 1.0, %v261
    %v263 = vtanh.pop %v224
    %v264 = vmul.f32 %v247, 0.0
    %v266 = vrot.slane %v263, 4
    %v268 = vmul.f32 %v247, %v266
    %v270 = vrot.slane %v268, 4
    %v272 = vadd.f32 %v264, %v270
    %v273 = vtanh.pop %v272
    %v275 = vrot.slane %v273, 4
    %v277 = vmul.f32 %v262, %v275
    %279 = vset.pattern.permute.xlu0 0
    %280 = vperm.xlu0 %279, %v277
    %v281 = vpop.permute.xlu0 %280
    %v283 = vmul.f32 %v281, %v164
    %v284 = vsel %vm168, %v283, 0.0
    %v285 = vrot.slane %v284, 4
    %v286 = vadd.f32 %v284, %v285
    %v287 = vrot.slane %v286, 2
    %v288 = vadd.f32 %v286, %v287
    %v289 = vrot.slane %v288, 1
    %v290 = vadd.f32 %v288, %v289
    %v291 = vadd.f32 %v116, %v290
    %v292 = vxor.u32 %v291, 2147483648
    %v293 = vmul.f32 %v292, 1.442695
    %v294 = vpow.pop %v293
    %v295 = vadd.f32 %v294, 1.0
    %v296 = vrcp.pop %v295
    %v297 = vmul.f32 %v295, %v296
    %v298 = vsub.f32 1.0, %v297
    %v299 = vmul.f32 %v296, %v298
    %v300 = vadd.f32 %v296, %v299
    %vm301 = vweird.f32 %v295
    %vm302 = vweird.f32 %v296
    %vm303 = vmor %vm301, %vm302
    %v304 = vsel %vm303, %v296, %v300
    %v305 = vand.u32 2147483647, %v295
    %vm306 = vcmp.eq.f32.partialorder %v305, 8.507059e+37
    %v307 = vand.u32 %v295, 2147483648
    %v308 = vor.u32 1.1754944e-38, %v307
    %v309 = vsel %vm306, %v308, %v304
    %v310 = vmul.f32 1.0, %v309
    %v311 = vtanh.pop %v291
    %v313 = vrot.slane %v207, 7
    %v315 = vmul.f32 %v310, %v313
    %317 = vrot.lane.b32.xlu0 %v311, 116
    %v318 = vpop.permute.xlu0 %317
    %v320 = vmul.f32 %v310, %v318
    %322 = vrot.lane.b32.xlu0 %v320, 4
    %v323 = vpop.permute.xlu0 %322
    %v325 = vadd.f32 %v315, %v323
    %v326 = vtanh.pop %v325
    %328 = vrot.lane.b32.xlu0 %v326, 4
    %v329 = vpop.permute.xlu0 %328
    %v331 = vmul.f32 %v310, %v329
    %v332 = vperm.slane %v213, 0
    %335 = vrot.lane.b32.xlu0 %v165, 8
    %v336 = vpop.permute.xlu0 %335
    %337 = vrot.lane.b32.xlu0 %v166, 8
    %v338 = vpop.permute.xlu0 %337
    %v341 = vmul.f32 %v332, %v336
    %v342 = vmul.f32 %v332, %v338
    %345 = vrot.lane.b32.xlu0 %v341, 120
    %v346 = vpop.permute.xlu0 %345
    %347 = vrot.lane.b32.xlu0 %v342, 120
    %v348 = vpop.permute.xlu0 %347
    %v351 = vsel %vm216, %v346, 0.0
    %352 = vadd.xlane.f32.xlu0 %v351
    %v353 = vpop.xlane.xlu0 %352
    %v354 = vsel %vm216, %v348, 0.0
    %355 = vadd.xlane.f32.xlu0 %v354
    %v356 = vpop.xlane.xlu0 %355
    %v357 = vadd.f32 %v160, %v353
    %v358 = vadd.f32 %v162, %v356
    %v359 = vxor.u32 %v357, 2147483648
    %v360 = vxor.u32 %v358, 2147483648
    %v361 = vmul.f32 %v359, 1.442695
    %v362 = vpow.pop %v361
    %v363 = vmul.f32 %v360, 1.442695
    %v364 = vpow.pop %v363
    %v365 = vadd.f32 %v362, 1.0
    %v366 = vadd.f32 %v364, 1.0
    %v367 = vrcp.pop %v365
    %v368 = vmul.f32 %v365, %v367
    %v369 = vsub.f32 1.0, %v368
    %v370 = vmul.f32 %v367, %v369
    %v371 = vadd.f32 %v367, %v370
    %vm372 = vweird.f32 %v365
    %vm373 = vweird.f32 %v367
    %vm374 = vmor %vm372, %vm373
    %v375 = vsel %vm374, %v367, %v371
    %v376 = vand.u32 2147483647, %v365
    %vm377 = vcmp.eq.f32.partialorder %v376, 8.507059e+37
    %v378 = vand.u32 %v365, 2147483648
    %v379 = vor.u32 1.1754944e-38, %v378
    %v380 = vsel %vm377, %v379, %v375
    %v381 = vmul.f32 1.0, %v380
    %v382 = vrcp.pop %v366
    %v383 = vmul.f32 %v366, %v382
    %v384 = vsub.f32 1.0, %v383
    %v385 = vmul.f32 %v382, %v384
    %v386 = vadd.f32 %v382, %v385
    %vm387 = vweird.f32 %v366
    %vm388 = vweird.f32 %v382
    %vm389 = vmor %vm387, %vm388
    %v390 = vsel %vm389, %v382, %v386
    %v391 = vand.u32 2147483647, %v366
    %vm392 = vcmp.eq.f32.partialorder %v391, 8.507059e+37
    %v393 = vand.u32 %v366, 2147483648
    %v394 = vor.u32 1.1754944e-38, %v393
    %v395 = vsel %vm392, %v394, %v390
    %v396 = vmul.f32 1.0, %v395
    %v397 = vtanh.pop %v358
    %399 = vrot.lane.b32.xlu0 %v272, 1
    %v400 = vpop.permute.xlu0 %399
    %v402 = vmul.f32 %v381, %v400
    %v404 = vrot.slane %v397, 4
    %v406 = vmul.f32 %v381, %v404
    %v408 = vrot.slane %v406, 4
    %v410 = vadd.f32 %v402, %v408
    %v411 = vtanh.pop %v410
    %v413 = vrot.slane %v411, 4
    %v415 = vmul.f32 %v396, %v413
    %417 = vset.pattern.permute.xlu0 1
    %418 = vperm.xlu0 %417, %v415
    %v419 = vpop.permute.xlu0 %418
    %v421 = vmul.f32 %v419, %v164
    %v422 = vsel %vm168, %v421, 0.0
    %v423 = vrot.slane %v422, 4
    %v424 = vadd.f32 %v422, %v423
    %v425 = vrot.slane %v424, 2
    %v426 = vadd.f32 %v424, %v425
    %v427 = vrot.slane %v426, 1
    %v428 = vadd.f32 %v426, %v427
    %v429 = vadd.f32 %v116, %v428
    %v430 = vxor.u32 %v429, 2147483648
    %v431 = vmul.f32 %v430, 1.442695
    %v432 = vpow.pop %v431
    %v433 = vadd.f32 %v432, 1.0
    %v434 = vrcp.pop %v433
    %v435 = vmul.f32 %v433, %v434
    %v436 = vsub.f32 1.0, %v435
    %v437 = vmul.f32 %v434, %v436
    %v438 = vadd.f32 %v434, %v437
    %vm439 = vweird.f32 %v433
    %vm440 = vweird.f32 %v434
    %vm441 = vmor %vm439, %vm440
    %v442 = vsel %vm441, %v434, %v438
    %v443 = vand.u32 2147483647, %v433
    %vm444 = vcmp.eq.f32.partialorder %v443, 8.507059e+37
    %v445 = vand.u32 %v433, 2147483648
    %v446 = vor.u32 1.1754944e-38, %v445
    %v447 = vsel %vm444, %v446, %v442
    %v448 = vmul.f32 1.0, %v447
    %v449 = vtanh.pop %v429
    %v451 = vrot.slane %v325, 7
    %v453 = vmul.f32 %v448, %v451
    %455 = vrot.lane.b32.xlu0 %v449, 116
    %v456 = vpop.permute.xlu0 %455
    %v458 = vmul.f32 %v448, %v456
    %460 = vrot.lane.b32.xlu0 %v458, 4
    %v461 = vpop.permute.xlu0 %460
    %v463 = vadd.f32 %v453, %v461
    %v464 = vtanh.pop %v463
    %466 = vrot.lane.b32.xlu0 %v464, 4
    %v467 = vpop.permute.xlu0 %466
    %v469 = vmul.f32 %v448, %v467
    %v470 = vperm.slane %v331, 1
    %v471 = vmul.f32 %v470, %v336
    %v472 = vmul.f32 %v470, %v338
    %475 = vrot.lane.b32.xlu0 %v471, 120
    %v476 = vpop.permute.xlu0 %475
    %477 = vrot.lane.b32.xlu0 %v472, 120
    %v478 = vpop.permute.xlu0 %477
    %v481 = vsel %vm216, %v476, 0.0
    %482 = vadd.xlane.f32.xlu0 %v481
    %v483 = vpop.xlane.xlu0 %482
    %v484 = vsel %vm216, %v478, 0.0
    %485 = vadd.xlane.f32.xlu0 %v484
    %v486 = vpop.xlane.xlu0 %485
    %v487 = vadd.f32 %v160, %v483
    %v488 = vadd.f32 %v162, %v486
    %v489 = vxor.u32 %v487, 2147483648
    %v490 = vxor.u32 %v488, 2147483648
    %v491 = vmul.f32 %v489, 1.442695
    %v492 = vpow.pop %v491
    %v493 = vmul.f32 %v490, 1.442695
    %v494 = vpow.pop %v493
    %v495 = vadd.f32 %v492, 1.0
    %v496 = vadd.f32 %v494, 1.0
    %v497 = vrcp.pop %v495
    %v498 = vmul.f32 %v495, %v497
    %v499 = vsub.f32 1.0, %v498
    %v500 = vmul.f32 %v497, %v499
    %v501 = vadd.f32 %v497, %v500
    %vm502 = vweird.f32 %v495
    %vm503 = vweird.f32 %v497
    %vm504 = vmor %vm502, %vm503
    %v505 = vsel %vm504, %v497, %v501
    %v506 = vand.u32 2147483647, %v495
    %vm507 = vcmp.eq.f32.partialorder %v506, 8.507059e+37
    %v508 = vand.u32 %v495, 2147483648
    %v509 = vor.u32 1.1754944e-38, %v508
    %v510 = vsel %vm507, %v509, %v505
    %v511 = vmul.f32 1.0, %v510
    %v512 = vrcp.pop %v496
    %v513 = vmul.f32 %v496, %v512
    %v514 = vsub.f32 1.0, %v513
    %v515 = vmul.f32 %v512, %v514
    %v516 = vadd.f32 %v512, %v515
    %vm517 = vweird.f32 %v496
    %vm518 = vweird.f32 %v512
    %vm519 = vmor %vm517, %vm518
    %v520 = vsel %vm519, %v512, %v516
    %v521 = vand.u32 2147483647, %v496
    %vm522 = vcmp.eq.f32.partialorder %v521, 8.507059e+37
    %v523 = vand.u32 %v496, 2147483648
    %v524 = vor.u32 1.1754944e-38, %v523
    %v525 = vsel %vm522, %v524, %v520
    %v526 = vmul.f32 1.0, %v525
    %v527 = vtanh.pop %v488
    %529 = vrot.lane.b32.xlu0 %v410, 1
    %v530 = vpop.permute.xlu0 %529
    %v532 = vmul.f32 %v511, %v530
    %v534 = vrot.slane %v527, 4
    %v536 = vmul.f32 %v511, %v534
    %v538 = vrot.slane %v536, 4
    %v540 = vadd.f32 %v532, %v538
    %v541 = vtanh.pop %v540
    %v543 = vrot.slane %v541, 4
    %v545 = vmul.f32 %v526, %v543
    %547 = vset.pattern.permute.xlu0 2
    %548 = vperm.xlu0 %547, %v545
    %v549 = vpop.permute.xlu0 %548
    %v551 = vmul.f32 %v549, %v164
    %v552 = vsel %vm168, %v551, 0.0
    %v553 = vrot.slane %v552, 4
    %v554 = vadd.f32 %v552, %v553
    %v555 = vrot.slane %v554, 2
    %v556 = vadd.f32 %v554, %v555
    %v557 = vrot.slane %v556, 1
    %v558 = vadd.f32 %v556, %v557
    %v559 = vadd.f32 %v116, %v558
    %v560 = vxor.u32 %v559, 2147483648
    %v561 = vmul.f32 %v560, 1.442695
    %v562 = vpow.pop %v561
    %v563 = vadd.f32 %v562, 1.0
    %v564 = vrcp.pop %v563
    %v565 = vmul.f32 %v563, %v564
    %v566 = vsub.f32 1.0, %v565
    %v567 = vmul.f32 %v564, %v566
    %v568 = vadd.f32 %v564, %v567
    %vm569 = vweird.f32 %v563
    %vm570 = vweird.f32 %v564
    %vm571 = vmor %vm569, %vm570
    %v572 = vsel %vm571, %v564, %v568
    %v573 = vand.u32 2147483647, %v563
    %vm574 = vcmp.eq.f32.partialorder %v573, 8.507059e+37
    %v575 = vand.u32 %v563, 2147483648
    %v576 = vor.u32 1.1754944e-38, %v575
    %v577 = vsel %vm574, %v576, %v572
    %v578 = vmul.f32 1.0, %v577
    %v579 = vtanh.pop %v559
    %v581 = vrot.slane %v463, 7
    %v583 = vmul.f32 %v578, %v581
    %585 = vrot.lane.b32.xlu0 %v579, 116
    %v586 = vpop.permute.xlu0 %585
    %v588 = vmul.f32 %v578, %v586
    %590 = vrot.lane.b32.xlu0 %v588, 4
    %v591 = vpop.permute.xlu0 %590
    %v593 = vadd.f32 %v583, %v591
    %v594 = vtanh.pop %v593
    %596 = vrot.lane.b32.xlu0 %v594, 4
    %v597 = vpop.permute.xlu0 %596
    %v599 = vmul.f32 %v578, %v597
    %v600 = vperm.slane %v469, 2
    %v601 = vmul.f32 %v600, %v336
    %v602 = vmul.f32 %v600, %v338
    %605 = vrot.lane.b32.xlu0 %v601, 120
    %v606 = vpop.permute.xlu0 %605
    %607 = vrot.lane.b32.xlu0 %v602, 120
    %v608 = vpop.permute.xlu0 %607
    %v611 = vsel %vm216, %v606, 0.0
    %612 = vadd.xlane.f32.xlu0 %v611
    %v613 = vpop.xlane.xlu0 %612
    %v614 = vsel %vm216, %v608, 0.0
    %615 = vadd.xlane.f32.xlu0 %v614
    %v616 = vpop.xlane.xlu0 %615
    %v617 = vadd.f32 %v160, %v613
    %v618 = vadd.f32 %v162, %v616
    %v619 = vxor.u32 %v617, 2147483648
    %v620 = vxor.u32 %v618, 2147483648
    %v621 = vmul.f32 %v619, 1.442695
    %v622 = vpow.pop %v621
    %v623 = vmul.f32 %v620, 1.442695
    %v624 = vpow.pop %v623
    %v625 = vadd.f32 %v622, 1.0
    %v626 = vadd.f32 %v624, 1.0
    %v627 = vrcp.pop %v625
    %v628 = vmul.f32 %v625, %v627
    %v629 = vsub.f32 1.0, %v628
    %v630 = vmul.f32 %v627, %v629
    %v631 = vadd.f32 %v627, %v630
    %vm632 = vweird.f32 %v625
    %vm633 = vweird.f32 %v627
    %vm634 = vmor %vm632, %vm633
    %v635 = vsel %vm634, %v627, %v631
    %v636 = vand.u32 2147483647, %v625
    %vm637 = vcmp.eq.f32.partialorder %v636, 8.507059e+37
    %v638 = vand.u32 %v625, 2147483648
    %v639 = vor.u32 1.1754944e-38, %v638
    %v640 = vsel %vm637, %v639, %v635
    %v641 = vmul.f32 1.0, %v640
    %v642 = vrcp.pop %v626
    %v643 = vmul.f32 %v626, %v642
    %v644 = vsub.f32 1.0, %v643
    %v645 = vmul.f32 %v642, %v644
    %v646 = vadd.f32 %v642, %v645
    %vm647 = vweird.f32 %v626
    %vm648 = vweird.f32 %v642
    %vm649 = vmor %vm647, %vm648
    %v650 = vsel %vm649, %v642, %v646
    %v651 = vand.u32 2147483647, %v626
    %vm652 = vcmp.eq.f32.partialorder %v651, 8.507059e+37
    %v653 = vand.u32 %v626, 2147483648
    %v654 = vor.u32 1.1754944e-38, %v653
    %v655 = vsel %vm652, %v654, %v650
    %v656 = vmul.f32 1.0, %v655
    %v657 = vtanh.pop %v618
    %659 = vrot.lane.b32.xlu0 %v540, 1
    %v660 = vpop.permute.xlu0 %659
    %v662 = vmul.f32 %v641, %v660
    %v664 = vrot.slane %v657, 4
    %v666 = vmul.f32 %v641, %v664
    %v668 = vrot.slane %v666, 4
    %v670 = vadd.f32 %v662, %v668
    %v671 = vtanh.pop %v670
    %v673 = vrot.slane %v671, 4
    %v675 = vmul.f32 %v656, %v673
    %677 = vset.pattern.permute.xlu0 3
    %678 = vperm.xlu0 %677, %v675
    %v679 = vpop.permute.xlu0 %678
    %v681 = vmul.f32 %v679, %v164
    %v682 = vsel %vm168, %v681, 0.0
    %v683 = vrot.slane %v682, 4
    %v684 = vadd.f32 %v682, %v683
    %v685 = vrot.slane %v684, 2
    %v686 = vadd.f32 %v684, %v685
    %v687 = vrot.slane %v686, 1
    %v688 = vadd.f32 %v686, %v687
    %v689 = vadd.f32 %v116, %v688
    %v690 = vxor.u32 %v689, 2147483648
    %v691 = vmul.f32 %v690, 1.442695
    %v692 = vpow.pop %v691
    %v693 = vadd.f32 %v692, 1.0
    %v694 = vrcp.pop %v693
    %v695 = vmul.f32 %v693, %v694
    %v696 = vsub.f32 1.0, %v695
    %v697 = vmul.f32 %v694, %v696
    %v698 = vadd.f32 %v694, %v697
    %vm699 = vweird.f32 %v693
    %vm700 = vweird.f32 %v694
    %vm701 = vmor %vm699, %vm700
    %v702 = vsel %vm701, %v694, %v698
    %v703 = vand.u32 2147483647, %v693
    %vm704 = vcmp.eq.f32.partialorder %v703, 8.507059e+37
    %v705 = vand.u32 %v693, 2147483648
    %v706 = vor.u32 1.1754944e-38, %v705
    %v707 = vsel %vm704, %v706, %v702
    %v708 = vmul.f32 1.0, %v707
    %v709 = vtanh.pop %v689
    %v711 = vrot.slane %v593, 7
    %v713 = vmul.f32 %v708, %v711
    %715 = vrot.lane.b32.xlu0 %v709, 116
    %v716 = vpop.permute.xlu0 %715
    %v718 = vmul.f32 %v708, %v716
    %720 = vrot.lane.b32.xlu0 %v718, 4
    %v721 = vpop.permute.xlu0 %720
    %v723 = vadd.f32 %v713, %v721
    %v724 = vtanh.pop %v723
    %726 = vrot.lane.b32.xlu0 %v724, 4
    %v727 = vpop.permute.xlu0 %726
    %v729 = vmul.f32 %v708, %v727
    %v730 = vperm.slane %v599, 3
    %v731 = vmul.f32 %v730, %v336
    %v732 = vmul.f32 %v730, %v338
    %735 = vrot.lane.b32.xlu0 %v731, 120
    %v736 = vpop.permute.xlu0 %735
    %737 = vrot.lane.b32.xlu0 %v732, 120
    %v738 = vpop.permute.xlu0 %737
    %v741 = vsel %vm216, %v736, 0.0
    %742 = vadd.xlane.f32.xlu0 %v741
    %v743 = vpop.xlane.xlu0 %742
    %v744 = vsel %vm216, %v738, 0.0
    %745 = vadd.xlane.f32.xlu0 %v744
    %v746 = vpop.xlane.xlu0 %745
    %v747 = vadd.f32 %v160, %v743
    %v748 = vadd.f32 %v162, %v746
    %v749 = vxor.u32 %v747, 2147483648
    %v750 = vxor.u32 %v748, 2147483648
    %v751 = vmul.f32 %v749, 1.442695
    %v752 = vpow.pop %v751
    %v753 = vmul.f32 %v750, 1.442695
    %v754 = vpow.pop %v753
    %v755 = vadd.f32 %v752, 1.0
    %v756 = vadd.f32 %v754, 1.0
    %v757 = vrcp.pop %v755
    %v758 = vmul.f32 %v755, %v757
    %v759 = vsub.f32 1.0, %v758
    %v760 = vmul.f32 %v757, %v759
    %v761 = vadd.f32 %v757, %v760
    %vm762 = vweird.f32 %v755
    %vm763 = vweird.f32 %v757
    %vm764 = vmor %vm762, %vm763
    %v765 = vsel %vm764, %v757, %v761
    %v766 = vand.u32 2147483647, %v755
    %vm767 = vcmp.eq.f32.partialorder %v766, 8.507059e+37
    %v768 = vand.u32 %v755, 2147483648
    %v769 = vor.u32 1.1754944e-38, %v768
    %v770 = vsel %vm767, %v769, %v765
    %v771 = vmul.f32 1.0, %v770
    %v772 = vrcp.pop %v756
    %v773 = vmul.f32 %v756, %v772
    %v774 = vsub.f32 1.0, %v773
    %v775 = vmul.f32 %v772, %v774
    %v776 = vadd.f32 %v772, %v775
    %vm777 = vweird.f32 %v756
    %vm778 = vweird.f32 %v772
    %vm779 = vmor %vm777, %vm778
    %v780 = vsel %vm779, %v772, %v776
    %v781 = vand.u32 2147483647, %v756
    %vm782 = vcmp.eq.f32.partialorder %v781, 8.507059e+37
    %v783 = vand.u32 %v756, 2147483648
    %v784 = vor.u32 1.1754944e-38, %v783
    %v785 = vsel %vm782, %v784, %v780
    %v786 = vmul.f32 1.0, %v785
    %v787 = vtanh.pop %v748
    %789 = vrot.lane.b32.xlu0 %v670, 1
    %v790 = vpop.permute.xlu0 %789
    %v792 = vmul.f32 %v771, %v790
    %v794 = vrot.slane %v787, 4
    %v796 = vmul.f32 %v771, %v794
    %v798 = vrot.slane %v796, 4
    %v800 = vadd.f32 %v792, %v798
    %v801 = vtanh.pop %v800
    %v803 = vrot.slane %v801, 4
    %v805 = vmul.f32 %v786, %v803
    %807 = vset.pattern.permute.xlu0 4
    %808 = vperm.xlu0 %807, %v805
    %v809 = vpop.permute.xlu0 %808
    %v811 = vmul.f32 %v809, %v164
    %v812 = vsel %vm168, %v811, 0.0
    %v813 = vrot.slane %v812, 4
    %v814 = vadd.f32 %v812, %v813
    %v815 = vrot.slane %v814, 2
    %v816 = vadd.f32 %v814, %v815
    %v817 = vrot.slane %v816, 1
    %v818 = vadd.f32 %v816, %v817
    %v819 = vadd.f32 %v116, %v818
    %v820 = vxor.u32 %v819, 2147483648
    %v821 = vmul.f32 %v820, 1.442695
    %v822 = vpow.pop %v821
    %v823 = vadd.f32 %v822, 1.0
    %v824 = vrcp.pop %v823
    %v825 = vmul.f32 %v823, %v824
    %v826 = vsub.f32 1.0, %v825
    %v827 = vmul.f32 %v824, %v826
    %v828 = vadd.f32 %v824, %v827
    %vm829 = vweird.f32 %v823
    %vm830 = vweird.f32 %v824
    %vm831 = vmor %vm829, %vm830
    %v832 = vsel %vm831, %v824, %v828
    %v833 = vand.u32 2147483647, %v823
    %vm834 = vcmp.eq.f32.partialorder %v833, 8.507059e+37
    %v835 = vand.u32 %v823, 2147483648
    %v836 = vor.u32 1.1754944e-38, %v835
    %v837 = vsel %vm834, %v836, %v832
    %v838 = vmul.f32 1.0, %v837
    %v839 = vtanh.pop %v819
    %v841 = vrot.slane %v723, 7
    %v843 = vmul.f32 %v838, %v841
    %845 = vrot.lane.b32.xlu0 %v839, 116
    %v846 = vpop.permute.xlu0 %845
    %v848 = vmul.f32 %v838, %v846
    %850 = vrot.lane.b32.xlu0 %v848, 4
    %v851 = vpop.permute.xlu0 %850
    %v853 = vadd.f32 %v843, %v851
    %v854 = vtanh.pop %v853
    %856 = vrot.lane.b32.xlu0 %v854, 4
    %v857 = vpop.permute.xlu0 %856
    %v859 = vmul.f32 %v838, %v857
    %v860 = vperm.slane %v729, 4
    %v861 = vmul.f32 %v860, %v336
    %v862 = vmul.f32 %v860, %v338
    %865 = vrot.lane.b32.xlu0 %v861, 120
    %v866 = vpop.permute.xlu0 %865
    %867 = vrot.lane.b32.xlu0 %v862, 120
    %v868 = vpop.permute.xlu0 %867
    %v871 = vsel %vm216, %v866, 0.0
    %872 = vadd.xlane.f32.xlu0 %v871
    %v873 = vpop.xlane.xlu0 %872
    %v874 = vsel %vm216, %v868, 0.0
    %875 = vadd.xlane.f32.xlu0 %v874
    %v876 = vpop.xlane.xlu0 %875
    %v877 = vadd.f32 %v160, %v873
    %v878 = vadd.f32 %v162, %v876
    %v879 = vxor.u32 %v877, 2147483648
    %v880 = vxor.u32 %v878, 2147483648
    %v881 = vmul.f32 %v879, 1.442695
    %v882 = vpow.pop %v881
    %v883 = vmul.f32 %v880, 1.442695
    %v884 = vpow.pop %v883
    %v885 = vadd.f32 %v882, 1.0
    %v886 = vadd.f32 %v884, 1.0
    %v887 = vrcp.pop %v885
    %v888 = vmul.f32 %v885, %v887
    %v889 = vsub.f32 1.0, %v888
    %v890 = vmul.f32 %v887, %v889
    %v891 = vadd.f32 %v887, %v890
    %vm892 = vweird.f32 %v885
    %vm893 = vweird.f32 %v887
    %vm894 = vmor %vm892, %vm893
    %v895 = vsel %vm894, %v887, %v891
    %v896 = vand.u32 2147483647, %v885
    %vm897 = vcmp.eq.f32.partialorder %v896, 8.507059e+37
    %v898 = vand.u32 %v885, 2147483648
    %v899 = vor.u32 1.1754944e-38, %v898
    %v900 = vsel %vm897, %v899, %v895
    %v901 = vmul.f32 1.0, %v900
    %v902 = vrcp.pop %v886
    %v903 = vmul.f32 %v886, %v902
    %v904 = vsub.f32 1.0, %v903
    %v905 = vmul.f32 %v902, %v904
    %v906 = vadd.f32 %v902, %v905
    %vm907 = vweird.f32 %v886
    %vm908 = vweird.f32 %v902
    %vm909 = vmor %vm907, %vm908
    %v910 = vsel %vm909, %v902, %v906
    %v911 = vand.u32 2147483647, %v886
    %vm912 = vcmp.eq.f32.partialorder %v911, 8.507059e+37
    %v913 = vand.u32 %v886, 2147483648
    %v914 = vor.u32 1.1754944e-38, %v913
    %v915 = vsel %vm912, %v914, %v910
    %v916 = vmul.f32 1.0, %v915
    %v917 = vtanh.pop %v878
    %919 = vrot.lane.b32.xlu0 %v800, 1
    %v920 = vpop.permute.xlu0 %919
    %v922 = vmul.f32 %v901, %v920
    %v924 = vrot.slane %v917, 4
    %v926 = vmul.f32 %v901, %v924
    %v928 = vrot.slane %v926, 4
    %v930 = vadd.f32 %v922, %v928
    %v931 = vtanh.pop %v930
    %v933 = vrot.slane %v931, 4
    %v935 = vmul.f32 %v916, %v933
    %937 = vset.pattern.permute.xlu0 5
    %938 = vperm.xlu0 %937, %v935
    %v939 = vpop.permute.xlu0 %938
    %v941 = vmul.f32 %v939, %v164
    %v942 = vsel %vm168, %v941, 0.0
    %v943 = vrot.slane %v942, 4
    %v944 = vadd.f32 %v942, %v943
    %v945 = vrot.slane %v944, 2
    %v946 = vadd.f32 %v944, %v945
    %v947 = vrot.slane %v946, 1
    %v948 = vadd.f32 %v946, %v947
    %v949 = vadd.f32 %v116, %v948
    %v950 = vxor.u32 %v949, 2147483648
    %v951 = vmul.f32 %v950, 1.442695
    %v952 = vpow.pop %v951
    %v953 = vadd.f32 %v952, 1.0
    %v954 = vrcp.pop %v953
    %v955 = vmul.f32 %v953, %v954
    %v956 = vsub.f32 1.0, %v955
    %v957 = vmul.f32 %v954, %v956
    %v958 = vadd.f32 %v954, %v957
    %vm959 = vweird.f32 %v953
    %vm960 = vweird.f32 %v954
    %vm961 = vmor %vm959, %vm960
    %v962 = vsel %vm961, %v954, %v958
    %v963 = vand.u32 2147483647, %v953
    %vm964 = vcmp.eq.f32.partialorder %v963, 8.507059e+37
    %v965 = vand.u32 %v953, 2147483648
    %v966 = vor.u32 1.1754944e-38, %v965
    %v967 = vsel %vm964, %v966, %v962
    %v968 = vmul.f32 1.0, %v967
    %v969 = vtanh.pop %v949
    %v971 = vrot.slane %v853, 7
    %v973 = vmul.f32 %v968, %v971
    %975 = vrot.lane.b32.xlu0 %v969, 116
    %v976 = vpop.permute.xlu0 %975
    %v978 = vmul.f32 %v968, %v976
    %980 = vrot.lane.b32.xlu0 %v978, 4
    %v981 = vpop.permute.xlu0 %980
    %v983 = vadd.f32 %v973, %v981
    %v984 = vtanh.pop %v983
    %986 = vrot.lane.b32.xlu0 %v984, 4
    %v987 = vpop.permute.xlu0 %986
    %v989 = vmul.f32 %v968, %v987
    %v990 = vperm.slane %v859, 5
    %v991 = vmul.f32 %v990, %v336
    %v992 = vmul.f32 %v990, %v338
    %995 = vrot.lane.b32.xlu0 %v991, 120
    %v996 = vpop.permute.xlu0 %995
    %997 = vrot.lane.b32.xlu0 %v992, 120
    %v998 = vpop.permute.xlu0 %997
    %v1001 = vsel %vm216, %v996, 0.0
    %1002 = vadd.xlane.f32.xlu0 %v1001
    %v1003 = vpop.xlane.xlu0 %1002
    %v1004 = vsel %vm216, %v998, 0.0
    %1005 = vadd.xlane.f32.xlu0 %v1004
    %v1006 = vpop.xlane.xlu0 %1005
    %v1007 = vadd.f32 %v160, %v1003
    %v1008 = vadd.f32 %v162, %v1006
    %v1009 = vxor.u32 %v1007, 2147483648
    %v1010 = vxor.u32 %v1008, 2147483648
    %v1011 = vmul.f32 %v1009, 1.442695
    %v1012 = vpow.pop %v1011
    %v1013 = vmul.f32 %v1010, 1.442695
    %v1014 = vpow.pop %v1013
    %v1015 = vadd.f32 %v1012, 1.0
    %v1016 = vadd.f32 %v1014, 1.0
    %v1017 = vrcp.pop %v1015
    %v1018 = vmul.f32 %v1015, %v1017
    %v1019 = vsub.f32 1.0, %v1018
    %v1020 = vmul.f32 %v1017, %v1019
    %v1021 = vadd.f32 %v1017, %v1020
    %vm1022 = vweird.f32 %v1015
    %vm1023 = vweird.f32 %v1017
    %vm1024 = vmor %vm1022, %vm1023
    %v1025 = vsel %vm1024, %v1017, %v1021
    %v1026 = vand.u32 2147483647, %v1015
    %vm1027 = vcmp.eq.f32.partialorder %v1026, 8.507059e+37
    %v1028 = vand.u32 %v1015, 2147483648
    %v1029 = vor.u32 1.1754944e-38, %v1028
    %v1030 = vsel %vm1027, %v1029, %v1025
    %v1031 = vmul.f32 1.0, %v1030
    %v1032 = vrcp.pop %v1016
    %v1033 = vmul.f32 %v1016, %v1032
    %v1034 = vsub.f32 1.0, %v1033
    %v1035 = vmul.f32 %v1032, %v1034
    %v1036 = vadd.f32 %v1032, %v1035
    %vm1037 = vweird.f32 %v1016
    %vm1038 = vweird.f32 %v1032
    %vm1039 = vmor %vm1037, %vm1038
    %v1040 = vsel %vm1039, %v1032, %v1036
    %v1041 = vand.u32 2147483647, %v1016
    %vm1042 = vcmp.eq.f32.partialorder %v1041, 8.507059e+37
    %v1043 = vand.u32 %v1016, 2147483648
    %v1044 = vor.u32 1.1754944e-38, %v1043
    %v1045 = vsel %vm1042, %v1044, %v1040
    %v1046 = vmul.f32 1.0, %v1045
    %v1047 = vtanh.pop %v1008
    %1049 = vrot.lane.b32.xlu0 %v930, 1
    %v1050 = vpop.permute.xlu0 %1049
    %v1052 = vmul.f32 %v1031, %v1050
    %v1054 = vrot.slane %v1047, 4
    %v1056 = vmul.f32 %v1031, %v1054
    %v1058 = vrot.slane %v1056, 4
    %v1060 = vadd.f32 %v1052, %v1058
    %v1061 = vtanh.pop %v1060
    %v1063 = vrot.slane %v1061, 4
    %v1065 = vmul.f32 %v1046, %v1063
    %1067 = vset.pattern.permute.xlu0 6
    %1068 = vperm.xlu0 %1067, %v1065
    %v1069 = vpop.permute.xlu0 %1068
    %v1071 = vmul.f32 %v1069, %v164
    %v1072 = vsel %vm168, %v1071, 0.0
    %v1073 = vrot.slane %v1072, 4
    %v1074 = vadd.f32 %v1072, %v1073
    %v1075 = vrot.slane %v1074, 2
    %v1076 = vadd.f32 %v1074, %v1075
    %v1077 = vrot.slane %v1076, 1
    %v1078 = vadd.f32 %v1076, %v1077
    %v1079 = vadd.f32 %v116, %v1078
    %v1080 = vxor.u32 %v1079, 2147483648
    %v1081 = vmul.f32 %v1080, 1.442695
    %v1082 = vpow.pop %v1081
    %v1083 = vadd.f32 %v1082, 1.0
    %v1084 = vrcp.pop %v1083
    %v1085 = vmul.f32 %v1083, %v1084
    %v1086 = vsub.f32 1.0, %v1085
    %v1087 = vmul.f32 %v1084, %v1086
    %v1088 = vadd.f32 %v1084, %v1087
    %vm1089 = vweird.f32 %v1083
    %vm1090 = vweird.f32 %v1084
    %vm1091 = vmor %vm1089, %vm1090
    %v1092 = vsel %vm1091, %v1084, %v1088
    %v1093 = vand.u32 2147483647, %v1083
    %vm1094 = vcmp.eq.f32.partialorder %v1093, 8.507059e+37
    %v1095 = vand.u32 %v1083, 2147483648
    %v1096 = vor.u32 1.1754944e-38, %v1095
    %v1097 = vsel %vm1094, %v1096, %v1092
    %v1098 = vmul.f32 1.0, %v1097
    %v1099 = vtanh.pop %v1079
    %v1101 = vrot.slane %v983, 7
    %v1103 = vmul.f32 %v1098, %v1101
    %1105 = vrot.lane.b32.xlu0 %v1099, 116
    %v1106 = vpop.permute.xlu0 %1105
    %v1108 = vmul.f32 %v1098, %v1106
    %1110 = vrot.lane.b32.xlu0 %v1108, 4
    %v1111 = vpop.permute.xlu0 %1110
    %v1113 = vadd.f32 %v1103, %v1111
    %v1114 = vtanh.pop %v1113
    %1116 = vrot.lane.b32.xlu0 %v1114, 4
    %v1117 = vpop.permute.xlu0 %1116
    %v1119 = vmul.f32 %v1098, %v1117
    %v1120 = vperm.slane %v989, 6
    %v1121 = vmul.f32 %v1120, %v336
    %v1122 = vmul.f32 %v1120, %v338
    %1125 = vrot.lane.b32.xlu0 %v1121, 120
    %v1126 = vpop.permute.xlu0 %1125
    %1127 = vrot.lane.b32.xlu0 %v1122, 120
    %v1128 = vpop.permute.xlu0 %1127
    %v1131 = vsel %vm216, %v1126, 0.0
    %1132 = vadd.xlane.f32.xlu0 %v1131
    %v1133 = vpop.xlane.xlu0 %1132
    %v1134 = vsel %vm216, %v1128, 0.0
    %1135 = vadd.xlane.f32.xlu0 %v1134
    %v1136 = vpop.xlane.xlu0 %1135
    %v1137 = vadd.f32 %v160, %v1133
    %v1138 = vadd.f32 %v162, %v1136
    %v1139 = vxor.u32 %v1137, 2147483648
    %v1140 = vxor.u32 %v1138, 2147483648
    %v1141 = vmul.f32 %v1139, 1.442695
    %v1142 = vpow.pop %v1141
    %v1143 = vmul.f32 %v1140, 1.442695
    %v1144 = vpow.pop %v1143
    %v1145 = vadd.f32 %v1142, 1.0
    %v1146 = vadd.f32 %v1144, 1.0
    %v1147 = vrcp.pop %v1145
    %v1148 = vmul.f32 %v1145, %v1147
    %v1149 = vsub.f32 1.0, %v1148
    %v1150 = vmul.f32 %v1147, %v1149
    %v1151 = vadd.f32 %v1147, %v1150
    %vm1152 = vweird.f32 %v1145
    %vm1153 = vweird.f32 %v1147
    %vm1154 = vmor %vm1152, %vm1153
    %v1155 = vsel %vm1154, %v1147, %v1151
    %v1156 = vand.u32 2147483647, %v1145
    %vm1157 = vcmp.eq.f32.partialorder %v1156, 8.507059e+37
    %v1158 = vand.u32 %v1145, 2147483648
    %v1159 = vor.u32 1.1754944e-38, %v1158
    %v1160 = vsel %vm1157, %v1159, %v1155
    %v1161 = vmul.f32 1.0, %v1160
    %v1162 = vrcp.pop %v1146
    %v1163 = vmul.f32 %v1146, %v1162
    %v1164 = vsub.f32 1.0, %v1163
    %v1165 = vmul.f32 %v1162, %v1164
    %v1166 = vadd.f32 %v1162, %v1165
    %vm1167 = vweird.f32 %v1146
    %vm1168 = vweird.f32 %v1162
    %vm1169 = vmor %vm1167, %vm1168
    %v1170 = vsel %vm1169, %v1162, %v1166
    %v1171 = vand.u32 2147483647, %v1146
    %vm1172 = vcmp.eq.f32.partialorder %v1171, 8.507059e+37
    %v1173 = vand.u32 %v1146, 2147483648
    %v1174 = vor.u32 1.1754944e-38, %v1173
    %v1175 = vsel %vm1172, %v1174, %v1170
    %v1176 = vmul.f32 1.0, %v1175
    %v1177 = vtanh.pop %v1138
    %1179 = vrot.lane.b32.xlu0 %v1060, 1
    %v1180 = vpop.permute.xlu0 %1179
    %v1182 = vmul.f32 %v1161, %v1180
    %v1184 = vrot.slane %v1177, 4
    %v1186 = vmul.f32 %v1161, %v1184
    %v1188 = vrot.slane %v1186, 4
    %v1190 = vadd.f32 %v1182, %v1188
    %v1191 = vtanh.pop %v1190
    %v1193 = vrot.slane %v1191, 4
    %v1195 = vmul.f32 %v1176, %v1193
    %1197 = vset.pattern.permute.xlu0 7
    %1198 = vperm.xlu0 %1197, %v1195
    %v1199 = vpop.permute.xlu0 %1198
    %v1201 = vmul.f32 %v1199, %v164
    %v1202 = vsel %vm168, %v1201, 0.0
    %v1203 = vrot.slane %v1202, 4
    %v1204 = vadd.f32 %v1202, %v1203
    %v1205 = vrot.slane %v1204, 2
    %v1206 = vadd.f32 %v1204, %v1205
    %v1207 = vrot.slane %v1206, 1
    %v1208 = vadd.f32 %v1206, %v1207
    %v1209 = vadd.f32 %v118, %v1208
    %v1210 = vxor.u32 %v1209, 2147483648
    %v1211 = vmul.f32 %v1210, 1.442695
    %v1212 = vpow.pop %v1211
    %v1213 = vadd.f32 %v1212, 1.0
    %v1214 = vrcp.pop %v1213
    %v1215 = vmul.f32 %v1213, %v1214
    %v1216 = vsub.f32 1.0, %v1215
    %v1217 = vmul.f32 %v1214, %v1216
    %v1218 = vadd.f32 %v1214, %v1217
    %vm1219 = vweird.f32 %v1213
    %vm1220 = vweird.f32 %v1214
    %vm1221 = vmor %vm1219, %vm1220
    %v1222 = vsel %vm1221, %v1214, %v1218
    %v1223 = vand.u32 2147483647, %v1213
    %vm1224 = vcmp.eq.f32.partialorder %v1223, 8.507059e+37
    %v1225 = vand.u32 %v1213, 2147483648
    %v1226 = vor.u32 1.1754944e-38, %v1225
    %v1227 = vsel %vm1224, %v1226, %v1222
    %v1228 = vmul.f32 1.0, %v1227
    %v1229 = vtanh.pop %v1209
    %v1231 = vrot.slane %v1113, 7
    %v1233 = vmul.f32 %v1228, %v1231
    %1235 = vrot.lane.b32.xlu0 %v1229, 116
    %v1236 = vpop.permute.xlu0 %1235
    %v1238 = vmul.f32 %v1228, %v1236
    %1240 = vrot.lane.b32.xlu0 %v1238, 4
    %v1241 = vpop.permute.xlu0 %1240
    %v1243 = vadd.f32 %v1233, %v1241
    %v1244 = vtanh.pop %v1243
    %1246 = vrot.lane.b32.xlu0 %v1244, 4
    %v1247 = vpop.permute.xlu0 %1246
    %v1249 = vmul.f32 %v1228, %v1247
    %v1250 = vperm.slane %v1119, 7
    %v1251 = vmul.f32 %v1250, %v336
    %v1252 = vmul.f32 %v1250, %v338
    %1255 = vrot.lane.b32.xlu0 %v1251, 120
    %v1256 = vpop.permute.xlu0 %1255
    %1257 = vrot.lane.b32.xlu0 %v1252, 120
    %v1258 = vpop.permute.xlu0 %1257
    %v1261 = vsel %vm216, %v1256, 0.0
    %1262 = vadd.xlane.f32.xlu0 %v1261
    %v1263 = vpop.xlane.xlu0 %1262
    %v1264 = vsel %vm216, %v1258, 0.0
    %1265 = vadd.xlane.f32.xlu0 %v1264
    %v1266 = vpop.xlane.xlu0 %1265
    %v1267 = vadd.f32 %v160, %v1263
    %v1268 = vadd.f32 %v162, %v1266
    %v1269 = vxor.u32 %v1267, 2147483648
    %v1270 = vxor.u32 %v1268, 2147483648
    %v1271 = vmul.f32 %v1269, 1.442695
    %v1272 = vpow.pop %v1271
    %v1273 = vmul.f32 %v1270, 1.442695
    %v1274 = vpow.pop %v1273
    %v1275 = vadd.f32 %v1272, 1.0
    %v1276 = vadd.f32 %v1274, 1.0
    %v1277 = vrcp.pop %v1275
    %v1278 = vmul.f32 %v1275, %v1277
    %v1279 = vsub.f32 1.0, %v1278
    %v1280 = vmul.f32 %v1277, %v1279
    %v1281 = vadd.f32 %v1277, %v1280
    %vm1282 = vweird.f32 %v1275
    %vm1283 = vweird.f32 %v1277
    %vm1284 = vmor %vm1282, %vm1283
    %v1285 = vsel %vm1284, %v1277, %v1281
    %v1286 = vand.u32 2147483647, %v1275
    %vm1287 = vcmp.eq.f32.partialorder %v1286, 8.507059e+37
    %v1288 = vand.u32 %v1275, 2147483648
    %v1289 = vor.u32 1.1754944e-38, %v1288
    %v1290 = vsel %vm1287, %v1289, %v1285
    %v1291 = vmul.f32 1.0, %v1290
    %v1292 = vrcp.pop %v1276
    %v1293 = vmul.f32 %v1276, %v1292
    %v1294 = vsub.f32 1.0, %v1293
    %v1295 = vmul.f32 %v1292, %v1294
    %v1296 = vadd.f32 %v1292, %v1295
    %vm1297 = vweird.f32 %v1276
    %vm1298 = vweird.f32 %v1292
    %vm1299 = vmor %vm1297, %vm1298
    %v1300 = vsel %vm1299, %v1292, %v1296
    %v1301 = vand.u32 2147483647, %v1276
    %vm1302 = vcmp.eq.f32.partialorder %v1301, 8.507059e+37
    %v1303 = vand.u32 %v1276, 2147483648
    %v1304 = vor.u32 1.1754944e-38, %v1303
    %v1305 = vsel %vm1302, %v1304, %v1300
    %v1306 = vmul.f32 1.0, %v1305
    %v1307 = vtanh.pop %v1268
    %1309 = vrot.lane.b32.xlu0 %v1190, 1
    %v1310 = vpop.permute.xlu0 %1309
    %v1312 = vmul.f32 %v1291, %v1310
    %v1314 = vrot.slane %v1307, 4
    %v1316 = vmul.f32 %v1291, %v1314
    %v1318 = vrot.slane %v1316, 4
    %v1320 = vadd.f32 %v1312, %v1318
    %v1321 = vtanh.pop %v1320
    %v1323 = vrot.slane %v1321, 4
    %v1325 = vmul.f32 %v1306, %v1323
    %1327 = vset.pattern.permute.xlu0 8
    %1328 = vperm.xlu0 %1327, %v1325
    %v1329 = vpop.permute.xlu0 %1328
    %v1331 = vmul.f32 %v1329, %v164
    %v1332 = vsel %vm168, %v1331, 0.0
    %v1333 = vrot.slane %v1332, 4
    %v1334 = vadd.f32 %v1332, %v1333
    %v1335 = vrot.slane %v1334, 2
    %v1336 = vadd.f32 %v1334, %v1335
    %v1337 = vrot.slane %v1336, 1
    %v1338 = vadd.f32 %v1336, %v1337
    %v1339 = vadd.f32 %v118, %v1338
    %v1340 = vxor.u32 %v1339, 2147483648
    %v1341 = vmul.f32 %v1340, 1.442695
    %v1342 = vpow.pop %v1341
    %v1343 = vadd.f32 %v1342, 1.0
    %v1344 = vrcp.pop %v1343
    %v1345 = vmul.f32 %v1343, %v1344
    %v1346 = vsub.f32 1.0, %v1345
    %v1347 = vmul.f32 %v1344, %v1346
    %v1348 = vadd.f32 %v1344, %v1347
    %vm1349 = vweird.f32 %v1343
    %vm1350 = vweird.f32 %v1344
    %vm1351 = vmor %vm1349, %vm1350
    %v1352 = vsel %vm1351, %v1344, %v1348
    %v1353 = vand.u32 2147483647, %v1343
    %vm1354 = vcmp.eq.f32.partialorder %v1353, 8.507059e+37
    %v1355 = vand.u32 %v1343, 2147483648
    %v1356 = vor.u32 1.1754944e-38, %v1355
    %v1357 = vsel %vm1354, %v1356, %v1352
    %v1358 = vmul.f32 1.0, %v1357
    %v1359 = vtanh.pop %v1339
    %v1361 = vrot.slane %v1243, 7
    %v1363 = vmul.f32 %v1358, %v1361
    %1365 = vrot.lane.b32.xlu0 %v1359, 116
    %v1366 = vpop.permute.xlu0 %1365
    %v1368 = vmul.f32 %v1358, %v1366
    %1370 = vrot.lane.b32.xlu0 %v1368, 4
    %v1371 = vpop.permute.xlu0 %1370
    %v1373 = vadd.f32 %v1363, %v1371
    %v1374 = vtanh.pop %v1373
    %1376 = vrot.lane.b32.xlu0 %v1374, 4
    %v1377 = vpop.permute.xlu0 %1376
    %v1379 = vmul.f32 %v1358, %v1377
    %v1380 = vperm.slane %v1249, 0
    %v1381 = vmul.f32 %v1380, %v336
    %v1382 = vmul.f32 %v1380, %v338
    %1385 = vrot.lane.b32.xlu0 %v1381, 120
    %v1386 = vpop.permute.xlu0 %1385
    %1387 = vrot.lane.b32.xlu0 %v1382, 120
    %v1388 = vpop.permute.xlu0 %1387
    %v1391 = vsel %vm216, %v1386, 0.0
    %1392 = vadd.xlane.f32.xlu0 %v1391
    %v1393 = vpop.xlane.xlu0 %1392
    %v1394 = vsel %vm216, %v1388, 0.0
    %1395 = vadd.xlane.f32.xlu0 %v1394
    %v1396 = vpop.xlane.xlu0 %1395
    %v1397 = vadd.f32 %v160, %v1393
    %v1398 = vadd.f32 %v162, %v1396
    %v1399 = vxor.u32 %v1397, 2147483648
    %v1400 = vxor.u32 %v1398, 2147483648
    %v1401 = vmul.f32 %v1399, 1.442695
    %v1402 = vpow.pop %v1401
    %v1403 = vmul.f32 %v1400, 1.442695
    %v1404 = vpow.pop %v1403
    %v1405 = vadd.f32 %v1402, 1.0
    %v1406 = vadd.f32 %v1404, 1.0
    %v1407 = vrcp.pop %v1405
    %v1408 = vmul.f32 %v1405, %v1407
    %v1409 = vsub.f32 1.0, %v1408
    %v1410 = vmul.f32 %v1407, %v1409
    %v1411 = vadd.f32 %v1407, %v1410
    %vm1412 = vweird.f32 %v1405
    %vm1413 = vweird.f32 %v1407
    %vm1414 = vmor %vm1412, %vm1413
    %v1415 = vsel %vm1414, %v1407, %v1411
    %v1416 = vand.u32 2147483647, %v1405
    %vm1417 = vcmp.eq.f32.partialorder %v1416, 8.507059e+37
    %v1418 = vand.u32 %v1405, 2147483648
    %v1419 = vor.u32 1.1754944e-38, %v1418
    %v1420 = vsel %vm1417, %v1419, %v1415
    %v1421 = vmul.f32 1.0, %v1420
    %v1422 = vrcp.pop %v1406
    %v1423 = vmul.f32 %v1406, %v1422
    %v1424 = vsub.f32 1.0, %v1423
    %v1425 = vmul.f32 %v1422, %v1424
    %v1426 = vadd.f32 %v1422, %v1425
    %vm1427 = vweird.f32 %v1406
    %vm1428 = vweird.f32 %v1422
    %vm1429 = vmor %vm1427, %vm1428
    %v1430 = vsel %vm1429, %v1422, %v1426
    %v1431 = vand.u32 2147483647, %v1406
    %vm1432 = vcmp.eq.f32.partialorder %v1431, 8.507059e+37
    %v1433 = vand.u32 %v1406, 2147483648
    %v1434 = vor.u32 1.1754944e-38, %v1433
    %v1435 = vsel %vm1432, %v1434, %v1430
    %v1436 = vmul.f32 1.0, %v1435
    %v1437 = vtanh.pop %v1398
    %1439 = vrot.lane.b32.xlu0 %v1320, 1
    %v1440 = vpop.permute.xlu0 %1439
    %v1442 = vmul.f32 %v1421, %v1440
    %v1444 = vrot.slane %v1437, 4
    %v1446 = vmul.f32 %v1421, %v1444
    %v1448 = vrot.slane %v1446, 4
    %v1450 = vadd.f32 %v1442, %v1448
    %v1451 = vtanh.pop %v1450
    %v1453 = vrot.slane %v1451, 4
    %v1455 = vmul.f32 %v1436, %v1453
    %1457 = vset.pattern.permute.xlu0 9
    %1458 = vperm.xlu0 %1457, %v1455
    %v1459 = vpop.permute.xlu0 %1458
    %v1461 = vmul.f32 %v1459, %v164
    %v1462 = vsel %vm168, %v1461, 0.0
    %v1463 = vrot.slane %v1462, 4
    %v1464 = vadd.f32 %v1462, %v1463
    %v1465 = vrot.slane %v1464, 2
    %v1466 = vadd.f32 %v1464, %v1465
    %v1467 = vrot.slane %v1466, 1
    %v1468 = vadd.f32 %v1466, %v1467
    %v1469 = vadd.f32 %v118, %v1468
    %v1470 = vxor.u32 %v1469, 2147483648
    %v1471 = vmul.f32 %v1470, 1.442695
    %v1472 = vpow.pop %v1471
    %v1473 = vadd.f32 %v1472, 1.0
    %v1474 = vrcp.pop %v1473
    %v1475 = vmul.f32 %v1473, %v1474
    %v1476 = vsub.f32 1.0, %v1475
    %v1477 = vmul.f32 %v1474, %v1476
    %v1478 = vadd.f32 %v1474, %v1477
    %vm1479 = vweird.f32 %v1473
    %vm1480 = vweird.f32 %v1474
    %vm1481 = vmor %vm1479, %vm1480
    %v1482 = vsel %vm1481, %v1474, %v1478
    %v1483 = vand.u32 2147483647, %v1473
    %vm1484 = vcmp.eq.f32.partialorder %v1483, 8.507059e+37
    %v1485 = vand.u32 %v1473, 2147483648
    %v1486 = vor.u32 1.1754944e-38, %v1485
    %v1487 = vsel %vm1484, %v1486, %v1482
    %v1488 = vmul.f32 1.0, %v1487
    %v1489 = vtanh.pop %v1469
    %v1491 = vrot.slane %v1373, 7
    %v1493 = vmul.f32 %v1488, %v1491
    %1495 = vrot.lane.b32.xlu0 %v1489, 116
    %v1496 = vpop.permute.xlu0 %1495
    %v1498 = vmul.f32 %v1488, %v1496
    %1500 = vrot.lane.b32.xlu0 %v1498, 4
    %v1501 = vpop.permute.xlu0 %1500
    %v1503 = vadd.f32 %v1493, %v1501
    %v1504 = vtanh.pop %v1503
    %1506 = vrot.lane.b32.xlu0 %v1504, 4
    %v1507 = vpop.permute.xlu0 %1506
    %v1509 = vmul.f32 %v1488, %v1507
    %v1510 = vperm.slane %v1379, 1
    %v1511 = vmul.f32 %v1510, %v336
    %v1512 = vmul.f32 %v1510, %v338
    %1515 = vrot.lane.b32.xlu0 %v1511, 120
    %v1516 = vpop.permute.xlu0 %1515
    %1517 = vrot.lane.b32.xlu0 %v1512, 120
    %v1518 = vpop.permute.xlu0 %1517
    %v1521 = vsel %vm216, %v1516, 0.0
    %1522 = vadd.xlane.f32.xlu0 %v1521
    %v1523 = vpop.xlane.xlu0 %1522
    %v1524 = vsel %vm216, %v1518, 0.0
    %1525 = vadd.xlane.f32.xlu0 %v1524
    %v1526 = vpop.xlane.xlu0 %1525
    %v1527 = vadd.f32 %v160, %v1523
    %v1528 = vadd.f32 %v162, %v1526
    %v1529 = vxor.u32 %v1527, 2147483648
    %v1530 = vxor.u32 %v1528, 2147483648
    %v1531 = vmul.f32 %v1529, 1.442695
    %v1532 = vpow.pop %v1531
    %v1533 = vmul.f32 %v1530, 1.442695
    %v1534 = vpow.pop %v1533
    %v1535 = vadd.f32 %v1532, 1.0
    %v1536 = vadd.f32 %v1534, 1.0
    %v1537 = vrcp.pop %v1535
    %v1538 = vmul.f32 %v1535, %v1537
    %v1539 = vsub.f32 1.0, %v1538
    %v1540 = vmul.f32 %v1537, %v1539
    %v1541 = vadd.f32 %v1537, %v1540
    %vm1542 = vweird.f32 %v1535
    %vm1543 = vweird.f32 %v1537
    %vm1544 = vmor %vm1542, %vm1543
    %v1545 = vsel %vm1544, %v1537, %v1541
    %v1546 = vand.u32 2147483647, %v1535
    %vm1547 = vcmp.eq.f32.partialorder %v1546, 8.507059e+37
    %v1548 = vand.u32 %v1535, 2147483648
    %v1549 = vor.u32 1.1754944e-38, %v1548
    %v1550 = vsel %vm1547, %v1549, %v1545
    %v1551 = vmul.f32 1.0, %v1550
    %v1552 = vrcp.pop %v1536
    %v1553 = vmul.f32 %v1536, %v1552
    %v1554 = vsub.f32 1.0, %v1553
    %v1555 = vmul.f32 %v1552, %v1554
    %v1556 = vadd.f32 %v1552, %v1555
    %vm1557 = vweird.f32 %v1536
    %vm1558 = vweird.f32 %v1552
    %vm1559 = vmor %vm1557, %vm1558
    %v1560 = vsel %vm1559, %v1552, %v1556
    %v1561 = vand.u32 2147483647, %v1536
    %vm1562 = vcmp.eq.f32.partialorder %v1561, 8.507059e+37
    %v1563 = vand.u32 %v1536, 2147483648
    %v1564 = vor.u32 1.1754944e-38, %v1563
    %v1565 = vsel %vm1562, %v1564, %v1560
    %v1566 = vmul.f32 1.0, %v1565
    %v1567 = vtanh.pop %v1528
    %1569 = vrot.lane.b32.xlu0 %v1450, 1
    %v1570 = vpop.permute.xlu0 %1569
    %v1572 = vmul.f32 %v1551, %v1570
    %v1574 = vrot.slane %v1567, 4
    %v1576 = vmul.f32 %v1551, %v1574
    %v1578 = vrot.slane %v1576, 4
    %v1580 = vadd.f32 %v1572, %v1578
    %v1581 = vtanh.pop %v1580
    %v1583 = vrot.slane %v1581, 4
    %v1585 = vmul.f32 %v1566, %v1583
    %1587 = vset.pattern.permute.xlu0 10
    %1588 = vperm.xlu0 %1587, %v1585
    %v1589 = vpop.permute.xlu0 %1588
    %v1591 = vmul.f32 %v1589, %v164
    %v1592 = vsel %vm168, %v1591, 0.0
    %v1593 = vrot.slane %v1592, 4
    %v1594 = vadd.f32 %v1592, %v1593
    %v1595 = vrot.slane %v1594, 2
    %v1596 = vadd.f32 %v1594, %v1595
    %v1597 = vrot.slane %v1596, 1
    %v1598 = vadd.f32 %v1596, %v1597
    %v1599 = vadd.f32 %v118, %v1598
    %v1600 = vxor.u32 %v1599, 2147483648
    %v1601 = vmul.f32 %v1600, 1.442695
    %v1602 = vpow.pop %v1601
    %v1603 = vadd.f32 %v1602, 1.0
    %v1604 = vrcp.pop %v1603
    %v1605 = vmul.f32 %v1603, %v1604
    %v1606 = vsub.f32 1.0, %v1605
    %v1607 = vmul.f32 %v1604, %v1606
    %v1608 = vadd.f32 %v1604, %v1607
    %vm1609 = vweird.f32 %v1603
    %vm1610 = vweird.f32 %v1604
    %vm1611 = vmor %vm1609, %vm1610
    %v1612 = vsel %vm1611, %v1604, %v1608
    %v1613 = vand.u32 2147483647, %v1603
    %vm1614 = vcmp.eq.f32.partialorder %v1613, 8.507059e+37
    %v1615 = vand.u32 %v1603, 2147483648
    %v1616 = vor.u32 1.1754944e-38, %v1615
    %v1617 = vsel %vm1614, %v1616, %v1612
    %v1618 = vmul.f32 1.0, %v1617
    %v1619 = vtanh.pop %v1599
    %v1621 = vrot.slane %v1503, 7
    %v1623 = vmul.f32 %v1618, %v1621
    %1625 = vrot.lane.b32.xlu0 %v1619, 116
    %v1626 = vpop.permute.xlu0 %1625
    %v1628 = vmul.f32 %v1618, %v1626
    %1630 = vrot.lane.b32.xlu0 %v1628, 4
    %v1631 = vpop.permute.xlu0 %1630
    %v1633 = vadd.f32 %v1623, %v1631
    %v1634 = vtanh.pop %v1633
    %1636 = vrot.lane.b32.xlu0 %v1634, 4
    %v1637 = vpop.permute.xlu0 %1636
    %v1639 = vmul.f32 %v1618, %v1637
    %v1640 = vperm.slane %v1509, 2
    %v1641 = vmul.f32 %v1640, %v336
    %v1642 = vmul.f32 %v1640, %v338
    %1645 = vrot.lane.b32.xlu0 %v1641, 120
    %v1646 = vpop.permute.xlu0 %1645
    %1647 = vrot.lane.b32.xlu0 %v1642, 120
    %v1648 = vpop.permute.xlu0 %1647
    %v1651 = vsel %vm216, %v1646, 0.0
    %1652 = vadd.xlane.f32.xlu0 %v1651
    %v1653 = vpop.xlane.xlu0 %1652
    %v1654 = vsel %vm216, %v1648, 0.0
    %1655 = vadd.xlane.f32.xlu0 %v1654
    %v1656 = vpop.xlane.xlu0 %1655
    %v1657 = vadd.f32 %v160, %v1653
    %v1658 = vadd.f32 %v162, %v1656
    %v1659 = vxor.u32 %v1657, 2147483648
    %v1660 = vxor.u32 %v1658, 2147483648
    %v1661 = vmul.f32 %v1659, 1.442695
    %v1662 = vpow.pop %v1661
    %v1663 = vmul.f32 %v1660, 1.442695
    %v1664 = vpow.pop %v1663
    %v1665 = vadd.f32 %v1662, 1.0
    %v1666 = vadd.f32 %v1664, 1.0
    %v1667 = vrcp.pop %v1665
    %v1668 = vmul.f32 %v1665, %v1667
    %v1669 = vsub.f32 1.0, %v1668
    %v1670 = vmul.f32 %v1667, %v1669
    %v1671 = vadd.f32 %v1667, %v1670
    %vm1672 = vweird.f32 %v1665
    %vm1673 = vweird.f32 %v1667
    %vm1674 = vmor %vm1672, %vm1673
    %v1675 = vsel %vm1674, %v1667, %v1671
    %v1676 = vand.u32 2147483647, %v1665
    %vm1677 = vcmp.eq.f32.partialorder %v1676, 8.507059e+37
    %v1678 = vand.u32 %v1665, 2147483648
    %v1679 = vor.u32 1.1754944e-38, %v1678
    %v1680 = vsel %vm1677, %v1679, %v1675
    %v1681 = vmul.f32 1.0, %v1680
    %v1682 = vrcp.pop %v1666
    %v1683 = vmul.f32 %v1666, %v1682
    %v1684 = vsub.f32 1.0, %v1683
    %v1685 = vmul.f32 %v1682, %v1684
    %v1686 = vadd.f32 %v1682, %v1685
    %vm1687 = vweird.f32 %v1666
    %vm1688 = vweird.f32 %v1682
    %vm1689 = vmor %vm1687, %vm1688
    %v1690 = vsel %vm1689, %v1682, %v1686
    %v1691 = vand.u32 2147483647, %v1666
    %vm1692 = vcmp.eq.f32.partialorder %v1691, 8.507059e+37
    %v1693 = vand.u32 %v1666, 2147483648
    %v1694 = vor.u32 1.1754944e-38, %v1693
    %v1695 = vsel %vm1692, %v1694, %v1690
    %v1696 = vmul.f32 1.0, %v1695
    %v1697 = vtanh.pop %v1658
    %1699 = vrot.lane.b32.xlu0 %v1580, 1
    %v1700 = vpop.permute.xlu0 %1699
    %v1702 = vmul.f32 %v1681, %v1700
    %v1704 = vrot.slane %v1697, 4
    %v1706 = vmul.f32 %v1681, %v1704
    %v1708 = vrot.slane %v1706, 4
    %v1710 = vadd.f32 %v1702, %v1708
    %v1711 = vtanh.pop %v1710
    %v1713 = vrot.slane %v1711, 4
    %v1715 = vmul.f32 %v1696, %v1713
    %1717 = vset.pattern.permute.xlu0 11
    %1718 = vperm.xlu0 %1717, %v1715
    %v1719 = vpop.permute.xlu0 %1718
    %v1721 = vmul.f32 %v1719, %v164
    %v1722 = vsel %vm168, %v1721, 0.0
    %v1723 = vrot.slane %v1722, 4
    %v1724 = vadd.f32 %v1722, %v1723
    %v1725 = vrot.slane %v1724, 2
    %v1726 = vadd.f32 %v1724, %v1725
    %v1727 = vrot.slane %v1726, 1
    %v1728 = vadd.f32 %v1726, %v1727
    %v1729 = vadd.f32 %v118, %v1728
    %v1730 = vxor.u32 %v1729, 2147483648
    %v1731 = vmul.f32 %v1730, 1.442695
    %v1732 = vpow.pop %v1731
    %v1733 = vadd.f32 %v1732, 1.0
    %v1734 = vrcp.pop %v1733
    %v1735 = vmul.f32 %v1733, %v1734
    %v1736 = vsub.f32 1.0, %v1735
    %v1737 = vmul.f32 %v1734, %v1736
    %v1738 = vadd.f32 %v1734, %v1737
    %vm1739 = vweird.f32 %v1733
    %vm1740 = vweird.f32 %v1734
    %vm1741 = vmor %vm1739, %vm1740
    %v1742 = vsel %vm1741, %v1734, %v1738
    %v1743 = vand.u32 2147483647, %v1733
    %vm1744 = vcmp.eq.f32.partialorder %v1743, 8.507059e+37
    %v1745 = vand.u32 %v1733, 2147483648
    %v1746 = vor.u32 1.1754944e-38, %v1745
    %v1747 = vsel %vm1744, %v1746, %v1742
    %v1748 = vmul.f32 1.0, %v1747
    %v1749 = vtanh.pop %v1729
    %v1751 = vrot.slane %v1633, 7
    %v1753 = vmul.f32 %v1748, %v1751
    %1755 = vrot.lane.b32.xlu0 %v1749, 116
    %v1756 = vpop.permute.xlu0 %1755
    %v1758 = vmul.f32 %v1748, %v1756
    %1760 = vrot.lane.b32.xlu0 %v1758, 4
    %v1761 = vpop.permute.xlu0 %1760
    %v1763 = vadd.f32 %v1753, %v1761
    %v1764 = vtanh.pop %v1763
    %1766 = vrot.lane.b32.xlu0 %v1764, 4
    %v1767 = vpop.permute.xlu0 %1766
    %v1769 = vmul.f32 %v1748, %v1767
    %v1770 = vperm.slane %v1639, 3
    %v1771 = vmul.f32 %v1770, %v336
    %v1772 = vmul.f32 %v1770, %v338
    %1775 = vrot.lane.b32.xlu0 %v1771, 120
    %v1776 = vpop.permute.xlu0 %1775
    %1777 = vrot.lane.b32.xlu0 %v1772, 120
    %v1778 = vpop.permute.xlu0 %1777
    %v1781 = vsel %vm216, %v1776, 0.0
    %1782 = vadd.xlane.f32.xlu0 %v1781
    %v1783 = vpop.xlane.xlu0 %1782
    %v1784 = vsel %vm216, %v1778, 0.0
    %1785 = vadd.xlane.f32.xlu0 %v1784
    %v1786 = vpop.xlane.xlu0 %1785
    %v1787 = vadd.f32 %v160, %v1783
    %v1788 = vadd.f32 %v162, %v1786
    %v1789 = vxor.u32 %v1787, 2147483648
    %v1790 = vxor.u32 %v1788, 2147483648
    %v1791 = vmul.f32 %v1789, 1.442695
    %v1792 = vpow.pop %v1791
    %v1793 = vmul.f32 %v1790, 1.442695
    %v1794 = vpow.pop %v1793
    %v1795 = vadd.f32 %v1792, 1.0
    %v1796 = vadd.f32 %v1794, 1.0
    %v1797 = vrcp.pop %v1795
    %v1798 = vmul.f32 %v1795, %v1797
    %v1799 = vsub.f32 1.0, %v1798
    %v1800 = vmul.f32 %v1797, %v1799
    %v1801 = vadd.f32 %v1797, %v1800
    %vm1802 = vweird.f32 %v1795
    %vm1803 = vweird.f32 %v1797
    %vm1804 = vmor %vm1802, %vm1803
    %v1805 = vsel %vm1804, %v1797, %v1801
    %v1806 = vand.u32 2147483647, %v1795
    %vm1807 = vcmp.eq.f32.partialorder %v1806, 8.507059e+37
    %v1808 = vand.u32 %v1795, 2147483648
    %v1809 = vor.u32 1.1754944e-38, %v1808
    %v1810 = vsel %vm1807, %v1809, %v1805
    %v1811 = vmul.f32 1.0, %v1810
    %v1812 = vrcp.pop %v1796
    %v1813 = vmul.f32 %v1796, %v1812
    %v1814 = vsub.f32 1.0, %v1813
    %v1815 = vmul.f32 %v1812, %v1814
    %v1816 = vadd.f32 %v1812, %v1815
    %vm1817 = vweird.f32 %v1796
    %vm1818 = vweird.f32 %v1812
    %vm1819 = vmor %vm1817, %vm1818
    %v1820 = vsel %vm1819, %v1812, %v1816
    %v1821 = vand.u32 2147483647, %v1796
    %vm1822 = vcmp.eq.f32.partialorder %v1821, 8.507059e+37
    %v1823 = vand.u32 %v1796, 2147483648
    %v1824 = vor.u32 1.1754944e-38, %v1823
    %v1825 = vsel %vm1822, %v1824, %v1820
    %v1826 = vmul.f32 1.0, %v1825
    %v1827 = vtanh.pop %v1788
    %1829 = vrot.lane.b32.xlu0 %v1710, 1
    %v1830 = vpop.permute.xlu0 %1829
    %v1832 = vmul.f32 %v1811, %v1830
    %v1834 = vrot.slane %v1827, 4
    %v1836 = vmul.f32 %v1811, %v1834
    %v1838 = vrot.slane %v1836, 4
    %v1840 = vadd.f32 %v1832, %v1838
    %v1841 = vtanh.pop %v1840
    %v1843 = vrot.slane %v1841, 4
    %v1845 = vmul.f32 %v1826, %v1843
    %1847 = vset.pattern.permute.xlu0 12
    %1848 = vperm.xlu0 %1847, %v1845
    %v1849 = vpop.permute.xlu0 %1848
    %v1851 = vmul.f32 %v1849, %v164
    %v1852 = vsel %vm168, %v1851, 0.0
    %v1853 = vrot.slane %v1852, 4
    %v1854 = vadd.f32 %v1852, %v1853
    %v1855 = vrot.slane %v1854, 2
    %v1856 = vadd.f32 %v1854, %v1855
    %v1857 = vrot.slane %v1856, 1
    %v1858 = vadd.f32 %v1856, %v1857
    %v1859 = vadd.f32 %v118, %v1858
    %v1860 = vxor.u32 %v1859, 2147483648
    %v1861 = vmul.f32 %v1860, 1.442695
    %v1862 = vpow.pop %v1861
    %v1863 = vadd.f32 %v1862, 1.0
    %v1864 = vrcp.pop %v1863
    %v1865 = vmul.f32 %v1863, %v1864
    %v1866 = vsub.f32 1.0, %v1865
    %v1867 = vmul.f32 %v1864, %v1866
    %v1868 = vadd.f32 %v1864, %v1867
    %vm1869 = vweird.f32 %v1863
    %vm1870 = vweird.f32 %v1864
    %vm1871 = vmor %vm1869, %vm1870
    %v1872 = vsel %vm1871, %v1864, %v1868
    %v1873 = vand.u32 2147483647, %v1863
    %vm1874 = vcmp.eq.f32.partialorder %v1873, 8.507059e+37
    %v1875 = vand.u32 %v1863, 2147483648
    %v1876 = vor.u32 1.1754944e-38, %v1875
    %v1877 = vsel %vm1874, %v1876, %v1872
    %v1878 = vmul.f32 1.0, %v1877
    %v1879 = vtanh.pop %v1859
    %v1881 = vrot.slane %v1763, 7
    %v1883 = vmul.f32 %v1878, %v1881
    %1885 = vrot.lane.b32.xlu0 %v1879, 116
    %v1886 = vpop.permute.xlu0 %1885
    %v1888 = vmul.f32 %v1878, %v1886
    %1890 = vrot.lane.b32.xlu0 %v1888, 4
    %v1891 = vpop.permute.xlu0 %1890
    %v1893 = vadd.f32 %v1883, %v1891
    %v1894 = vtanh.pop %v1893
    %1896 = vrot.lane.b32.xlu0 %v1894, 4
    %v1897 = vpop.permute.xlu0 %1896
    %v1899 = vmul.f32 %v1878, %v1897
    %v1900 = vperm.slane %v1769, 4
    %v1901 = vmul.f32 %v1900, %v336
    %v1902 = vmul.f32 %v1900, %v338
    %1905 = vrot.lane.b32.xlu0 %v1901, 120
    %v1906 = vpop.permute.xlu0 %1905
    %1907 = vrot.lane.b32.xlu0 %v1902, 120
    %v1908 = vpop.permute.xlu0 %1907
    %v1911 = vsel %vm216, %v1906, 0.0
    %1912 = vadd.xlane.f32.xlu0 %v1911
    %v1913 = vpop.xlane.xlu0 %1912
    %v1914 = vsel %vm216, %v1908, 0.0
    %1915 = vadd.xlane.f32.xlu0 %v1914
    %v1916 = vpop.xlane.xlu0 %1915
    %v1917 = vadd.f32 %v160, %v1913
    %v1918 = vadd.f32 %v162, %v1916
    %v1919 = vxor.u32 %v1917, 2147483648
    %v1920 = vxor.u32 %v1918, 2147483648
    %v1921 = vmul.f32 %v1919, 1.442695
    %v1922 = vpow.pop %v1921
    %v1923 = vmul.f32 %v1920, 1.442695
    %v1924 = vpow.pop %v1923
    %v1925 = vadd.f32 %v1922, 1.0
    %v1926 = vadd.f32 %v1924, 1.0
    %v1927 = vrcp.pop %v1925
    %v1928 = vmul.f32 %v1925, %v1927
    %v1929 = vsub.f32 1.0, %v1928
    %v1930 = vmul.f32 %v1927, %v1929
    %v1931 = vadd.f32 %v1927, %v1930
    %vm1932 = vweird.f32 %v1925
    %vm1933 = vweird.f32 %v1927
    %vm1934 = vmor %vm1932, %vm1933
    %v1935 = vsel %vm1934, %v1927, %v1931
    %v1936 = vand.u32 2147483647, %v1925
    %vm1937 = vcmp.eq.f32.partialorder %v1936, 8.507059e+37
    %v1938 = vand.u32 %v1925, 2147483648
    %v1939 = vor.u32 1.1754944e-38, %v1938
    %v1940 = vsel %vm1937, %v1939, %v1935
    %v1941 = vmul.f32 1.0, %v1940
    %v1942 = vrcp.pop %v1926
    %v1943 = vmul.f32 %v1926, %v1942
    %v1944 = vsub.f32 1.0, %v1943
    %v1945 = vmul.f32 %v1942, %v1944
    %v1946 = vadd.f32 %v1942, %v1945
    %vm1947 = vweird.f32 %v1926
    %vm1948 = vweird.f32 %v1942
    %vm1949 = vmor %vm1947, %vm1948
    %v1950 = vsel %vm1949, %v1942, %v1946
    %v1951 = vand.u32 2147483647, %v1926
    %vm1952 = vcmp.eq.f32.partialorder %v1951, 8.507059e+37
    %v1953 = vand.u32 %v1926, 2147483648
    %v1954 = vor.u32 1.1754944e-38, %v1953
    %v1955 = vsel %vm1952, %v1954, %v1950
    %v1956 = vmul.f32 1.0, %v1955
    %v1957 = vtanh.pop %v1918
    %1959 = vrot.lane.b32.xlu0 %v1840, 1
    %v1960 = vpop.permute.xlu0 %1959
    %v1962 = vmul.f32 %v1941, %v1960
    %v1964 = vrot.slane %v1957, 4
    %v1966 = vmul.f32 %v1941, %v1964
    %v1968 = vrot.slane %v1966, 4
    %v1970 = vadd.f32 %v1962, %v1968
    %v1971 = vtanh.pop %v1970
    %v1973 = vrot.slane %v1971, 4
    %v1975 = vmul.f32 %v1956, %v1973
    %1977 = vset.pattern.permute.xlu0 13
    %1978 = vperm.xlu0 %1977, %v1975
    %v1979 = vpop.permute.xlu0 %1978
    %v1981 = vmul.f32 %v1979, %v164
    %v1982 = vsel %vm168, %v1981, 0.0
    %v1983 = vrot.slane %v1982, 4
    %v1984 = vadd.f32 %v1982, %v1983
    %v1985 = vrot.slane %v1984, 2
    %v1986 = vadd.f32 %v1984, %v1985
    %v1987 = vrot.slane %v1986, 1
    %v1988 = vadd.f32 %v1986, %v1987
    %v1989 = vadd.f32 %v118, %v1988
    %v1990 = vxor.u32 %v1989, 2147483648
    %v1991 = vmul.f32 %v1990, 1.442695
    %v1992 = vpow.pop %v1991
    %v1993 = vadd.f32 %v1992, 1.0
    %v1994 = vrcp.pop %v1993
    %v1995 = vmul.f32 %v1993, %v1994
    %v1996 = vsub.f32 1.0, %v1995
    %v1997 = vmul.f32 %v1994, %v1996
    %v1998 = vadd.f32 %v1994, %v1997
    %vm1999 = vweird.f32 %v1993
    %vm2000 = vweird.f32 %v1994
    %vm2001 = vmor %vm1999, %vm2000
    %v2002 = vsel %vm2001, %v1994, %v1998
    %v2003 = vand.u32 2147483647, %v1993
    %vm2004 = vcmp.eq.f32.partialorder %v2003, 8.507059e+37
    %v2005 = vand.u32 %v1993, 2147483648
    %v2006 = vor.u32 1.1754944e-38, %v2005
    %v2007 = vsel %vm2004, %v2006, %v2002
    %v2008 = vmul.f32 1.0, %v2007
    %v2009 = vtanh.pop %v1989
    %v2011 = vrot.slane %v1893, 7
    %v2013 = vmul.f32 %v2008, %v2011
    %2015 = vrot.lane.b32.xlu0 %v2009, 116
    %v2016 = vpop.permute.xlu0 %2015
    %v2018 = vmul.f32 %v2008, %v2016
    %2020 = vrot.lane.b32.xlu0 %v2018, 4
    %v2021 = vpop.permute.xlu0 %2020
    %v2023 = vadd.f32 %v2013, %v2021
    %v2024 = vtanh.pop %v2023
    %2026 = vrot.lane.b32.xlu0 %v2024, 4
    %v2027 = vpop.permute.xlu0 %2026
    %v2029 = vmul.f32 %v2008, %v2027
    %v2030 = vperm.slane %v1899, 5
    %v2031 = vmul.f32 %v2030, %v336
    %v2032 = vmul.f32 %v2030, %v338
    %2035 = vrot.lane.b32.xlu0 %v2031, 120
    %v2036 = vpop.permute.xlu0 %2035
    %2037 = vrot.lane.b32.xlu0 %v2032, 120
    %v2038 = vpop.permute.xlu0 %2037
    %v2041 = vsel %vm216, %v2036, 0.0
    %2042 = vadd.xlane.f32.xlu0 %v2041
    %v2043 = vpop.xlane.xlu0 %2042
    %v2044 = vsel %vm216, %v2038, 0.0
    %2045 = vadd.xlane.f32.xlu0 %v2044
    %v2046 = vpop.xlane.xlu0 %2045
    %v2047 = vadd.f32 %v160, %v2043
    %v2048 = vadd.f32 %v162, %v2046
    %v2049 = vxor.u32 %v2047, 2147483648
    %v2050 = vxor.u32 %v2048, 2147483648
    %v2051 = vmul.f32 %v2049, 1.442695
    %v2052 = vpow.pop %v2051
    %v2053 = vmul.f32 %v2050, 1.442695
    %v2054 = vpow.pop %v2053
    %v2055 = vadd.f32 %v2052, 1.0
    %v2056 = vadd.f32 %v2054, 1.0
    %v2057 = vrcp.pop %v2055
    %v2058 = vmul.f32 %v2055, %v2057
    %v2059 = vsub.f32 1.0, %v2058
    %v2060 = vmul.f32 %v2057, %v2059
    %v2061 = vadd.f32 %v2057, %v2060
    %vm2062 = vweird.f32 %v2055
    %vm2063 = vweird.f32 %v2057
    %vm2064 = vmor %vm2062, %vm2063
    %v2065 = vsel %vm2064, %v2057, %v2061
    %v2066 = vand.u32 2147483647, %v2055
    %vm2067 = vcmp.eq.f32.partialorder %v2066, 8.507059e+37
    %v2068 = vand.u32 %v2055, 2147483648
    %v2069 = vor.u32 1.1754944e-38, %v2068
    %v2070 = vsel %vm2067, %v2069, %v2065
    %v2071 = vmul.f32 1.0, %v2070
    %v2072 = vrcp.pop %v2056
    %v2073 = vmul.f32 %v2056, %v2072
    %v2074 = vsub.f32 1.0, %v2073
    %v2075 = vmul.f32 %v2072, %v2074
    %v2076 = vadd.f32 %v2072, %v2075
    %vm2077 = vweird.f32 %v2056
    %vm2078 = vweird.f32 %v2072
    %vm2079 = vmor %vm2077, %vm2078
    %v2080 = vsel %vm2079, %v2072, %v2076
    %v2081 = vand.u32 2147483647, %v2056
    %vm2082 = vcmp.eq.f32.partialorder %v2081, 8.507059e+37
    %v2083 = vand.u32 %v2056, 2147483648
    %v2084 = vor.u32 1.1754944e-38, %v2083
    %v2085 = vsel %vm2082, %v2084, %v2080
    %v2086 = vmul.f32 1.0, %v2085
    %v2087 = vtanh.pop %v2048
    %2089 = vrot.lane.b32.xlu0 %v1970, 1
    %v2090 = vpop.permute.xlu0 %2089
    %v2092 = vmul.f32 %v2071, %v2090
    %v2094 = vrot.slane %v2087, 4
    %v2096 = vmul.f32 %v2071, %v2094
    %v2098 = vrot.slane %v2096, 4
    %v2100 = vadd.f32 %v2092, %v2098
    %v2101 = vtanh.pop %v2100
    %v2103 = vrot.slane %v2101, 4
    %v2105 = vmul.f32 %v2086, %v2103
    %2107 = vset.pattern.permute.xlu0 14
    %2108 = vperm.xlu0 %2107, %v2105
    %v2109 = vpop.permute.xlu0 %2108
    %v2111 = vmul.f32 %v2109, %v164
    %v2112 = vsel %vm168, %v2111, 0.0
    %v2113 = vrot.slane %v2112, 4
    %v2114 = vadd.f32 %v2112, %v2113
    %v2115 = vrot.slane %v2114, 2
    %v2116 = vadd.f32 %v2114, %v2115
    %v2117 = vrot.slane %v2116, 1
    %v2118 = vadd.f32 %v2116, %v2117
    %v2119 = vadd.f32 %v118, %v2118
    %v2120 = vxor.u32 %v2119, 2147483648
    %v2121 = vmul.f32 %v2120, 1.442695
    %v2122 = vpow.pop %v2121
    %v2123 = vadd.f32 %v2122, 1.0
    %v2124 = vrcp.pop %v2123
    %v2125 = vmul.f32 %v2123, %v2124
    %v2126 = vsub.f32 1.0, %v2125
    %v2127 = vmul.f32 %v2124, %v2126
    %v2128 = vadd.f32 %v2124, %v2127
    %vm2129 = vweird.f32 %v2123
    %vm2130 = vweird.f32 %v2124
    %vm2131 = vmor %vm2129, %vm2130
    %v2132 = vsel %vm2131, %v2124, %v2128
    %v2133 = vand.u32 2147483647, %v2123
    %vm2134 = vcmp.eq.f32.partialorder %v2133, 8.507059e+37
    %v2135 = vand.u32 %v2123, 2147483648
    %v2136 = vor.u32 1.1754944e-38, %v2135
    %v2137 = vsel %vm2134, %v2136, %v2132
    %v2138 = vmul.f32 1.0, %v2137
    %v2139 = vtanh.pop %v2119
    %v2141 = vrot.slane %v2023, 7
    %v2143 = vmul.f32 %v2138, %v2141
    %2145 = vrot.lane.b32.xlu0 %v2139, 116
    %v2146 = vpop.permute.xlu0 %2145
    %v2148 = vmul.f32 %v2138, %v2146
    %2150 = vrot.lane.b32.xlu0 %v2148, 4
    %v2151 = vpop.permute.xlu0 %2150
    %v2153 = vadd.f32 %v2143, %v2151
    %v2154 = vtanh.pop %v2153
    %2156 = vrot.lane.b32.xlu0 %v2154, 4
    %v2157 = vpop.permute.xlu0 %2156
    %v2159 = vmul.f32 %v2138, %v2157
    %v2160 = vperm.slane %v2029, 6
    %v2161 = vmul.f32 %v2160, %v336
    %v2162 = vmul.f32 %v2160, %v338
    %2165 = vrot.lane.b32.xlu0 %v2161, 120
    %v2166 = vpop.permute.xlu0 %2165
    %2167 = vrot.lane.b32.xlu0 %v2162, 120
    %v2168 = vpop.permute.xlu0 %2167
    %v2171 = vsel %vm216, %v2166, 0.0
    %2172 = vadd.xlane.f32.xlu0 %v2171
    %v2173 = vpop.xlane.xlu0 %2172
    %v2174 = vsel %vm216, %v2168, 0.0
    %2175 = vadd.xlane.f32.xlu0 %v2174
    %v2176 = vpop.xlane.xlu0 %2175
    %v2177 = vadd.f32 %v160, %v2173
    %v2178 = vadd.f32 %v162, %v2176
    %v2179 = vxor.u32 %v2177, 2147483648
    %v2180 = vxor.u32 %v2178, 2147483648
    %v2181 = vmul.f32 %v2179, 1.442695
    %v2182 = vpow.pop %v2181
    %v2183 = vmul.f32 %v2180, 1.442695
    %v2184 = vpow.pop %v2183
    %v2185 = vadd.f32 %v2182, 1.0
    %v2186 = vadd.f32 %v2184, 1.0
    %v2187 = vrcp.pop %v2185
    %v2188 = vmul.f32 %v2185, %v2187
    %v2189 = vsub.f32 1.0, %v2188
    %v2190 = vmul.f32 %v2187, %v2189
    %v2191 = vadd.f32 %v2187, %v2190
    %vm2192 = vweird.f32 %v2185
    %vm2193 = vweird.f32 %v2187
    %vm2194 = vmor %vm2192, %vm2193
    %v2195 = vsel %vm2194, %v2187, %v2191
    %v2196 = vand.u32 2147483647, %v2185
    %vm2197 = vcmp.eq.f32.partialorder %v2196, 8.507059e+37
    %v2198 = vand.u32 %v2185, 2147483648
    %v2199 = vor.u32 1.1754944e-38, %v2198
    %v2200 = vsel %vm2197, %v2199, %v2195
    %v2201 = vmul.f32 1.0, %v2200
    %v2202 = vrcp.pop %v2186
    %v2203 = vmul.f32 %v2186, %v2202
    %v2204 = vsub.f32 1.0, %v2203
    %v2205 = vmul.f32 %v2202, %v2204
    %v2206 = vadd.f32 %v2202, %v2205
    %vm2207 = vweird.f32 %v2186
    %vm2208 = vweird.f32 %v2202
    %vm2209 = vmor %vm2207, %vm2208
    %v2210 = vsel %vm2209, %v2202, %v2206
    %v2211 = vand.u32 2147483647, %v2186
    %vm2212 = vcmp.eq.f32.partialorder %v2211, 8.507059e+37
    %v2213 = vand.u32 %v2186, 2147483648
    %v2214 = vor.u32 1.1754944e-38, %v2213
    %v2215 = vsel %vm2212, %v2214, %v2210
    %v2216 = vmul.f32 1.0, %v2215
    %v2217 = vtanh.pop %v2178
    %2219 = vrot.lane.b32.xlu0 %v2100, 1
    %v2220 = vpop.permute.xlu0 %2219
    %v2222 = vmul.f32 %v2201, %v2220
    %v2224 = vrot.slane %v2217, 4
    %v2226 = vmul.f32 %v2201, %v2224
    %v2228 = vrot.slane %v2226, 4
    %v2230 = vadd.f32 %v2222, %v2228
    %v2231 = vtanh.pop %v2230
    %v2233 = vrot.slane %v2231, 4
    %v2235 = vmul.f32 %v2216, %v2233
    %2237 = vset.pattern.permute.xlu0 15
    %2238 = vperm.xlu0 %2237, %v2235
    %v2239 = vpop.permute.xlu0 %2238
    %v2241 = vmul.f32 %v2239, %v164
    %v2242 = vsel %vm168, %v2241, 0.0
    %v2243 = vrot.slane %v2242, 4
    %v2244 = vadd.f32 %v2242, %v2243
    %v2245 = vrot.slane %v2244, 2
    %v2246 = vadd.f32 %v2244, %v2245
    %v2247 = vrot.slane %v2246, 1
    %v2248 = vadd.f32 %v2246, %v2247
    %v2249 = vadd.f32 %v121, %v2248
    %v2250 = vxor.u32 %v2249, 2147483648
    %v2251 = vmul.f32 %v2250, 1.442695
    %v2252 = vpow.pop %v2251
    %v2253 = vadd.f32 %v2252, 1.0
    %v2254 = vrcp.pop %v2253
    %v2255 = vmul.f32 %v2253, %v2254
    %v2256 = vsub.f32 1.0, %v2255
    %v2257 = vmul.f32 %v2254, %v2256
    %v2258 = vadd.f32 %v2254, %v2257
    %vm2259 = vweird.f32 %v2253
    %vm2260 = vweird.f32 %v2254
    %vm2261 = vmor %vm2259, %vm2260
    %v2262 = vsel %vm2261, %v2254, %v2258
    %v2263 = vand.u32 2147483647, %v2253
    %vm2264 = vcmp.eq.f32.partialorder %v2263, 8.507059e+37
    %v2265 = vand.u32 %v2253, 2147483648
    %v2266 = vor.u32 1.1754944e-38, %v2265
    %v2267 = vsel %vm2264, %v2266, %v2262
    %v2268 = vmul.f32 1.0, %v2267
    %v2269 = vtanh.pop %v2249
    %v2271 = vrot.slane %v2153, 7
    %v2273 = vmul.f32 %v2268, %v2271
    %2275 = vrot.lane.b32.xlu0 %v2269, 116
    %v2276 = vpop.permute.xlu0 %2275
    %v2278 = vmul.f32 %v2268, %v2276
    %2280 = vrot.lane.b32.xlu0 %v2278, 4
    %v2281 = vpop.permute.xlu0 %2280
    %v2283 = vadd.f32 %v2273, %v2281
    %v2284 = vtanh.pop %v2283
    %2286 = vrot.lane.b32.xlu0 %v2284, 4
    %v2287 = vpop.permute.xlu0 %2286
    %v2289 = vmul.f32 %v2268, %v2287
    %v2290 = vperm.slane %v2159, 7
    %v2291 = vmul.f32 %v2290, %v336
    %v2292 = vmul.f32 %v2290, %v338
    %2295 = vrot.lane.b32.xlu0 %v2291, 120
    %v2296 = vpop.permute.xlu0 %2295
    %2297 = vrot.lane.b32.xlu0 %v2292, 120
    %v2298 = vpop.permute.xlu0 %2297
    %v2301 = vsel %vm216, %v2296, 0.0
    %2302 = vadd.xlane.f32.xlu0 %v2301
    %v2303 = vpop.xlane.xlu0 %2302
    %v2304 = vsel %vm216, %v2298, 0.0
    %2305 = vadd.xlane.f32.xlu0 %v2304
    %v2306 = vpop.xlane.xlu0 %2305
    %v2307 = vadd.f32 %v160, %v2303
    %v2308 = vadd.f32 %v162, %v2306
    %v2309 = vxor.u32 %v2307, 2147483648
    %v2310 = vxor.u32 %v2308, 2147483648
    %v2311 = vmul.f32 %v2309, 1.442695
    %v2312 = vpow.pop %v2311
    %v2313 = vmul.f32 %v2310, 1.442695
    %v2314 = vpow.pop %v2313
    %v2315 = vadd.f32 %v2312, 1.0
    %v2316 = vadd.f32 %v2314, 1.0
    %v2317 = vrcp.pop %v2315
    %v2318 = vmul.f32 %v2315, %v2317
    %v2319 = vsub.f32 1.0, %v2318
    %v2320 = vmul.f32 %v2317, %v2319
    %v2321 = vadd.f32 %v2317, %v2320
    %vm2322 = vweird.f32 %v2315
    %vm2323 = vweird.f32 %v2317
    %vm2324 = vmor %vm2322, %vm2323
    %v2325 = vsel %vm2324, %v2317, %v2321
    %v2326 = vand.u32 2147483647, %v2315
    %vm2327 = vcmp.eq.f32.partialorder %v2326, 8.507059e+37
    %v2328 = vand.u32 %v2315, 2147483648
    %v2329 = vor.u32 1.1754944e-38, %v2328
    %v2330 = vsel %vm2327, %v2329, %v2325
    %v2331 = vmul.f32 1.0, %v2330
    %v2332 = vrcp.pop %v2316
    %v2333 = vmul.f32 %v2316, %v2332
    %v2334 = vsub.f32 1.0, %v2333
    %v2335 = vmul.f32 %v2332, %v2334
    %v2336 = vadd.f32 %v2332, %v2335
    %vm2337 = vweird.f32 %v2316
    %vm2338 = vweird.f32 %v2332
    %vm2339 = vmor %vm2337, %vm2338
    %v2340 = vsel %vm2339, %v2332, %v2336
    %v2341 = vand.u32 2147483647, %v2316
    %vm2342 = vcmp.eq.f32.partialorder %v2341, 8.507059e+37
    %v2343 = vand.u32 %v2316, 2147483648
    %v2344 = vor.u32 1.1754944e-38, %v2343
    %v2345 = vsel %vm2342, %v2344, %v2340
    %v2346 = vmul.f32 1.0, %v2345
    %v2347 = vtanh.pop %v2308
    %2349 = vrot.lane.b32.xlu0 %v2230, 1
    %v2350 = vpop.permute.xlu0 %2349
    %v2352 = vmul.f32 %v2331, %v2350
    %v2354 = vrot.slane %v2347, 4
    %v2356 = vmul.f32 %v2331, %v2354
    %v2358 = vrot.slane %v2356, 4
    %v2360 = vadd.f32 %v2352, %v2358
    %v2361 = vtanh.pop %v2360
    %v2363 = vrot.slane %v2361, 4
    %v2365 = vmul.f32 %v2346, %v2363
    %2367 = vset.pattern.permute.xlu0 16
    %2368 = vperm.xlu0 %2367, %v2365
    %v2369 = vpop.permute.xlu0 %2368
    %v2371 = vmul.f32 %v2369, %v164
    %v2372 = vsel %vm168, %v2371, 0.0
    %v2373 = vrot.slane %v2372, 4
    %v2374 = vadd.f32 %v2372, %v2373
    %v2375 = vrot.slane %v2374, 2
    %v2376 = vadd.f32 %v2374, %v2375
    %v2377 = vrot.slane %v2376, 1
    %v2378 = vadd.f32 %v2376, %v2377
    %v2379 = vadd.f32 %v121, %v2378
    %v2380 = vxor.u32 %v2379, 2147483648
    %v2381 = vmul.f32 %v2380, 1.442695
    %v2382 = vpow.pop %v2381
    %v2383 = vadd.f32 %v2382, 1.0
    %v2384 = vrcp.pop %v2383
    %v2385 = vmul.f32 %v2383, %v2384
    %v2386 = vsub.f32 1.0, %v2385
    %v2387 = vmul.f32 %v2384, %v2386
    %v2388 = vadd.f32 %v2384, %v2387
    %vm2389 = vweird.f32 %v2383
    %vm2390 = vweird.f32 %v2384
    %vm2391 = vmor %vm2389, %vm2390
    %v2392 = vsel %vm2391, %v2384, %v2388
    %v2393 = vand.u32 2147483647, %v2383
    %vm2394 = vcmp.eq.f32.partialorder %v2393, 8.507059e+37
    %v2395 = vand.u32 %v2383, 2147483648
    %v2396 = vor.u32 1.1754944e-38, %v2395
    %v2397 = vsel %vm2394, %v2396, %v2392
    %v2398 = vmul.f32 1.0, %v2397
    %v2399 = vtanh.pop %v2379
    %v2401 = vrot.slane %v2283, 7
    %v2403 = vmul.f32 %v2398, %v2401
    %2405 = vrot.lane.b32.xlu0 %v2399, 116
    %v2406 = vpop.permute.xlu0 %2405
    %v2408 = vmul.f32 %v2398, %v2406
    %2410 = vrot.lane.b32.xlu0 %v2408, 4
    %v2411 = vpop.permute.xlu0 %2410
    %v2413 = vadd.f32 %v2403, %v2411
    %v2414 = vtanh.pop %v2413
    %2416 = vrot.lane.b32.xlu0 %v2414, 4
    %v2417 = vpop.permute.xlu0 %2416
    %v2419 = vmul.f32 %v2398, %v2417
    %v2420 = vperm.slane %v2289, 0
    %v2421 = vmul.f32 %v2420, %v336
    %v2422 = vmul.f32 %v2420, %v338
    %2425 = vrot.lane.b32.xlu0 %v2421, 120
    %v2426 = vpop.permute.xlu0 %2425
    %2427 = vrot.lane.b32.xlu0 %v2422, 120
    %v2428 = vpop.permute.xlu0 %2427
    %v2431 = vsel %vm216, %v2426, 0.0
    %2432 = vadd.xlane.f32.xlu0 %v2431
    %v2433 = vpop.xlane.xlu0 %2432
    %v2434 = vsel %vm216, %v2428, 0.0
    %2435 = vadd.xlane.f32.xlu0 %v2434
    %v2436 = vpop.xlane.xlu0 %2435
    %v2437 = vadd.f32 %v160, %v2433
    %v2438 = vadd.f32 %v162, %v2436
    %v2439 = vxor.u32 %v2437, 2147483648
    %v2440 = vxor.u32 %v2438, 2147483648
    %v2441 = vmul.f32 %v2439, 1.442695
    %v2442 = vpow.pop %v2441
    %v2443 = vmul.f32 %v2440, 1.442695
    %v2444 = vpow.pop %v2443
    %v2445 = vadd.f32 %v2442, 1.0
    %v2446 = vadd.f32 %v2444, 1.0
    %v2447 = vrcp.pop %v2445
    %v2448 = vmul.f32 %v2445, %v2447
    %v2449 = vsub.f32 1.0, %v2448
    %v2450 = vmul.f32 %v2447, %v2449
    %v2451 = vadd.f32 %v2447, %v2450
    %vm2452 = vweird.f32 %v2445
    %vm2453 = vweird.f32 %v2447
    %vm2454 = vmor %vm2452, %vm2453
    %v2455 = vsel %vm2454, %v2447, %v2451
    %v2456 = vand.u32 2147483647, %v2445
    %vm2457 = vcmp.eq.f32.partialorder %v2456, 8.507059e+37
    %v2458 = vand.u32 %v2445, 2147483648
    %v2459 = vor.u32 1.1754944e-38, %v2458
    %v2460 = vsel %vm2457, %v2459, %v2455
    %v2461 = vmul.f32 1.0, %v2460
    %v2462 = vrcp.pop %v2446
    %v2463 = vmul.f32 %v2446, %v2462
    %v2464 = vsub.f32 1.0, %v2463
    %v2465 = vmul.f32 %v2462, %v2464
    %v2466 = vadd.f32 %v2462, %v2465
    %vm2467 = vweird.f32 %v2446
    %vm2468 = vweird.f32 %v2462
    %vm2469 = vmor %vm2467, %vm2468
    %v2470 = vsel %vm2469, %v2462, %v2466
    %v2471 = vand.u32 2147483647, %v2446
    %vm2472 = vcmp.eq.f32.partialorder %v2471, 8.507059e+37
    %v2473 = vand.u32 %v2446, 2147483648
    %v2474 = vor.u32 1.1754944e-38, %v2473
    %v2475 = vsel %vm2472, %v2474, %v2470
    %v2476 = vmul.f32 1.0, %v2475
    %v2477 = vtanh.pop %v2438
    %2479 = vrot.lane.b32.xlu0 %v2360, 1
    %v2480 = vpop.permute.xlu0 %2479
    %v2482 = vmul.f32 %v2461, %v2480
    %v2484 = vrot.slane %v2477, 4
    %v2486 = vmul.f32 %v2461, %v2484
    %v2488 = vrot.slane %v2486, 4
    %v2490 = vadd.f32 %v2482, %v2488
    %v2491 = vtanh.pop %v2490
    %v2493 = vrot.slane %v2491, 4
    %v2495 = vmul.f32 %v2476, %v2493
    %2497 = vset.pattern.permute.xlu0 17
    %2498 = vperm.xlu0 %2497, %v2495
    %v2499 = vpop.permute.xlu0 %2498
    %v2501 = vmul.f32 %v2499, %v164
    %v2502 = vsel %vm168, %v2501, 0.0
    %v2503 = vrot.slane %v2502, 4
    %v2504 = vadd.f32 %v2502, %v2503
    %v2505 = vrot.slane %v2504, 2
    %v2506 = vadd.f32 %v2504, %v2505
    %v2507 = vrot.slane %v2506, 1
    %v2508 = vadd.f32 %v2506, %v2507
    %v2509 = vadd.f32 %v121, %v2508
    %v2510 = vxor.u32 %v2509, 2147483648
    %v2511 = vmul.f32 %v2510, 1.442695
    %v2512 = vpow.pop %v2511
    %v2513 = vadd.f32 %v2512, 1.0
    %v2514 = vrcp.pop %v2513
    %v2515 = vmul.f32 %v2513, %v2514
    %v2516 = vsub.f32 1.0, %v2515
    %v2517 = vmul.f32 %v2514, %v2516
    %v2518 = vadd.f32 %v2514, %v2517
    %vm2519 = vweird.f32 %v2513
    %vm2520 = vweird.f32 %v2514
    %vm2521 = vmor %vm2519, %vm2520
    %v2522 = vsel %vm2521, %v2514, %v2518
    %v2523 = vand.u32 2147483647, %v2513
    %vm2524 = vcmp.eq.f32.partialorder %v2523, 8.507059e+37
    %v2525 = vand.u32 %v2513, 2147483648
    %v2526 = vor.u32 1.1754944e-38, %v2525
    %v2527 = vsel %vm2524, %v2526, %v2522
    %v2528 = vmul.f32 1.0, %v2527
    %v2529 = vtanh.pop %v2509
    %v2531 = vrot.slane %v2413, 7
    %v2533 = vmul.f32 %v2528, %v2531
    %2535 = vrot.lane.b32.xlu0 %v2529, 116
    %v2536 = vpop.permute.xlu0 %2535
    %v2538 = vmul.f32 %v2528, %v2536
    %2540 = vrot.lane.b32.xlu0 %v2538, 4
    %v2541 = vpop.permute.xlu0 %2540
    %v2543 = vadd.f32 %v2533, %v2541
    %v2544 = vperm.slane %v2419, 1
    %v2545 = vmul.f32 %v2544, %v336
    %v2546 = vmul.f32 %v2544, %v338
    %2549 = vrot.lane.b32.xlu0 %v2545, 120
    %v2550 = vpop.permute.xlu0 %2549
    %2551 = vrot.lane.b32.xlu0 %v2546, 120
    %v2552 = vpop.permute.xlu0 %2551
    %v2555 = vsel %vm216, %v2550, 0.0
    %2556 = vadd.xlane.f32.xlu0 %v2555
    %v2557 = vpop.xlane.xlu0 %2556
    %v2558 = vsel %vm216, %v2552, 0.0
    %2559 = vadd.xlane.f32.xlu0 %v2558
    %v2560 = vpop.xlane.xlu0 %2559
    %v2561 = vadd.f32 %v160, %v2557
    %v2562 = vadd.f32 %v162, %v2560
    %v2563 = vxor.u32 %v2561, 2147483648
    %v2564 = vxor.u32 %v2562, 2147483648
    %v2565 = vmul.f32 %v2563, 1.442695
    %v2566 = vpow.pop %v2565
    %v2567 = vmul.f32 %v2564, 1.442695
    %v2568 = vpow.pop %v2567
    %v2569 = vadd.f32 %v2566, 1.0
    %v2570 = vadd.f32 %v2568, 1.0
    %v2571 = vrcp.pop %v2569
    %v2572 = vmul.f32 %v2569, %v2571
    %v2573 = vsub.f32 1.0, %v2572
    %v2574 = vmul.f32 %v2571, %v2573
    %v2575 = vadd.f32 %v2571, %v2574
    %vm2576 = vweird.f32 %v2569
    %vm2577 = vweird.f32 %v2571
    %vm2578 = vmor %vm2576, %vm2577
    %v2579 = vsel %vm2578, %v2571, %v2575
    %v2580 = vand.u32 2147483647, %v2569
    %vm2581 = vcmp.eq.f32.partialorder %v2580, 8.507059e+37
    %v2582 = vand.u32 %v2569, 2147483648
    %v2583 = vor.u32 1.1754944e-38, %v2582
    %v2584 = vsel %vm2581, %v2583, %v2579
    %v2585 = vmul.f32 1.0, %v2584
    %v2586 = vrcp.pop %v2570
    %v2587 = vmul.f32 %v2570, %v2586
    %v2588 = vsub.f32 1.0, %v2587
    %v2589 = vmul.f32 %v2586, %v2588
    %v2590 = vadd.f32 %v2586, %v2589
    %vm2591 = vweird.f32 %v2570
    %vm2592 = vweird.f32 %v2586
    %vm2593 = vmor %vm2591, %vm2592
    %v2594 = vsel %vm2593, %v2586, %v2590
    %v2595 = vand.u32 2147483647, %v2570
    %vm2596 = vcmp.eq.f32.partialorder %v2595, 8.507059e+37
    %v2597 = vand.u32 %v2570, 2147483648
    %v2598 = vor.u32 1.1754944e-38, %v2597
    %v2599 = vsel %vm2596, %v2598, %v2594
    %v2600 = vmul.f32 1.0, %v2599
    %v2601 = vtanh.pop %v2562
    %2603 = vrot.lane.b32.xlu0 %v2490, 1
    %v2604 = vpop.permute.xlu0 %2603
    %v2606 = vmul.f32 %v2585, %v2604
    %v2608 = vrot.slane %v2601, 4
    %v2610 = vmul.f32 %v2585, %v2608
    %v2612 = vrot.slane %v2610, 4
    %v2614 = vadd.f32 %v2606, %v2612
    %v2615 = vtanh.pop %v2614
    %v2617 = vrot.slane %v2615, 4
    %v2619 = vmul.f32 %v2600, %v2617
    %2621 = vset.pattern.permute.xlu0 18
    %2622 = vperm.xlu0 %2621, %v2619
    %v2623 = vpop.permute.xlu0 %2622
    %v2625 = vmul.f32 %v2623, %v164
    %v2626 = vsel %vm168, %v2625, 0.0
    %v2627 = vrot.slane %v2626, 4
    %v2628 = vadd.f32 %v2626, %v2627
    %v2629 = vrot.slane %v2628, 2
    %v2630 = vadd.f32 %v2628, %v2629
    %v2631 = vrot.slane %v2630, 1
    %v2632 = vadd.f32 %v2630, %v2631
    %v2633 = vadd.f32 %v121, %v2632
    %v2634 = vxor.u32 %v2633, 2147483648
    %v2635 = vmul.f32 %v2634, 1.442695
    %v2636 = vpow.pop %v2635
    %v2637 = vadd.f32 %v2636, 1.0
    %v2638 = vrcp.pop %v2637
    %v2639 = vmul.f32 %v2637, %v2638
    %v2640 = vsub.f32 1.0, %v2639
    %v2641 = vmul.f32 %v2638, %v2640
    %v2642 = vadd.f32 %v2638, %v2641
    %vm2643 = vweird.f32 %v2637
    %vm2644 = vweird.f32 %v2638
    %vm2645 = vmor %vm2643, %vm2644
    %v2646 = vsel %vm2645, %v2638, %v2642
    %v2647 = vand.u32 2147483647, %v2637
    %vm2648 = vcmp.eq.f32.partialorder %v2647, 8.507059e+37
    %v2649 = vand.u32 %v2637, 2147483648
    %v2650 = vor.u32 1.1754944e-38, %v2649
    %v2651 = vsel %vm2648, %v2650, %v2646
    %v2652 = vmul.f32 1.0, %v2651
    %v2653 = vtanh.pop %v2633
    %v2655 = vrot.slane %v2543, 7
    %v2657 = vmul.f32 %v2652, %v2655
    %2659 = vrot.lane.b32.xlu0 %v2653, 116
    %v2660 = vpop.permute.xlu0 %2659
    %v2662 = vmul.f32 %v2652, %v2660
    %2664 = vrot.lane.b32.xlu0 %v2662, 4
    %v2665 = vpop.permute.xlu0 %2664
    %v2667 = vadd.f32 %v2657, %v2665
    %v2668 = vtanh.pop %v2667
    %2670 = vrot.lane.b32.xlu0 %v2668, 4
    %v2671 = vpop.permute.xlu0 %2670
    %v2673 = vmul.f32 %v2652, %v2671
    %v2674 = vpack.c.bf16 %v2673, %v2673
    %v2675 = vld [vmem:[%s13] sm:$0xf]
    %v2677 = vshrl.u32 %v2674, 16
    %v2679 = vrot.slane %v2677, 1
    %2680 = vrot.lane.b32.xlu0 %v2679, 120
    %v2681 = vpop.permute.xlu0 %2680
    %2683 = vst [vmem:[#allocation1] ss:$4 sm:$0xff] %v2675
    %v2684 = vld.sshfl [vmem:[#allocation1] sm:$0xff pattern:$0x73625140]
    %v2685 = vld.sshfl [vmem:[#allocation1 + $0x8] sm:$0xff pattern:$0x73625140]
    %v2687 = vsel %vm216, %v2681, 0
    %vm2689 = vcmask 1041408
    %v2690 = vsel %vm2689, %v2684, 0
    %v2692 = vsel %vm2689, %v2685, 0
    %2694 = vmatpush.bf16.msra.mxu0 0
    %2695 = vmatpush.bf16.msra.mxu0 0
    %2696 = vmatpush.bf16.msra.mxu0 0
    %2697 = vmatpush.bf16.msra.mxu0 0
    %2698 = vmatpush.bf16.msra.mxu0 0
    %2699 = vmatpush.bf16.msra.mxu0 0
    %2700 = vmatpush.bf16.msra.mxu0 0
    %2701 = vmatpush.bf16.msra.mxu0 %v2690
    %2702 = vmatmul.bf16.gmra.mxu0 %v2687
    %v2703 = vpop.f32.mrf.mxu0
    %v2704 = vadd.f32 0.0, %v2703
    %v2705 = vpop.f32.mrf.mxu0
    %2706 = vdwg.mxu0
    %2707 = vmatpush.bf16.msra.mxu0 0
    %2708 = vmatpush.bf16.msra.mxu0 0
    %2709 = vmatpush.bf16.msra.mxu0 0
    %2710 = vmatpush.bf16.msra.mxu0 0
    %2711 = vmatpush.bf16.msra.mxu0 0
    %2712 = vmatpush.bf16.msra.mxu0 0
    %2713 = vmatpush.bf16.msra.mxu0 0
    %2714 = vmatpush.bf16.msra.mxu0 %v2692
    %2715 = vmatmul.bf16.gmra.mxu0 %v2687
    %v2716 = vpop.f32.mrf.mxu0
    %v2717 = vadd.f32 0.0, %v2716
    %v2718 = vpop.f32.mrf.mxu0
    %2719 = vdwg.mxu0
    %v2720 = vld [vmem:[%s3] sm:$0xf]
    %v2721 = vld [vmem:[%s3 + $0x4] sm:$0xf]
    %v2722 = vld [vmem:[%s3 + $0x8] sm:$0xf]
    %v2723 = vld [vmem:[%s3 + $0xc] sm:$0xf]
    %v2724 = vld [vmem:[%s4] sm:$0xff]
    %v2725 = vld [vmem:[%s4 + $0x8] sm:$0xff]
    %v2726 = vld [vmem:[%s4 + $0x10] sm:$0xff]
    %v2727 = vld [vmem:[%s4 + $0x18] sm:$0xff]
    %v2728 = vld [vmem:[%s5] sm:$0x1]
    %v2729 = vld [vmem:[#allocation3] sm:$0x1]
    %s2730 = vtos %v2729
    %v2731 = vld [vmem:[%s0] sm:$0xf]
    %2733 = vset.pattern.permute.xlu0 0
    %2734 = vperm.xlu0 %2733, %v2724
    %v2735 = vpop.permute.xlu0 %2734
    %2738 = vset.pattern.permute.xlu0 0
    %2739 = vperm.xlu0 %2738, %v2725
    %v2740 = vpop.permute.xlu0 %2739
    %2743 = vset.pattern.permute.xlu0 0
    %2744 = vperm.xlu0 %2743, %v2726
    %v2745 = vpop.permute.xlu0 %2744
    %2748 = vset.pattern.permute.xlu0 0
    %2749 = vperm.xlu0 %2748, %v2727
    %v2750 = vpop.permute.xlu0 %2749
    %v2756 = vunpack.c.l.b16 %v2720
    %v2757 = vunpack.c.l.b16 %v2721
    %v2758 = vunpack.c.l.b16 %v2722
    %v2759 = vunpack.c.l.b16 %v2723
    %v2760 = vpack.c.b16 %v2757, %v2756
    %v2761 = vpack.c.b16 %v2759, %v2758
    %2763 = vst [vmem:[#allocation1] ss:$4 sm:$0xff] %v2731
    %v2764 = vld.sshfl [vmem:[#allocation1] sm:$0xff pattern:$0x73625140]
    %v2765 = vld.sshfl [vmem:[#allocation1 + $0x8] sm:$0xff pattern:$0x73625140]
    %v2767 = vsel %vm216, %v2760, 0
    %v2770 = vsel %vm216, %v2761, 0
    %v2772 = vsel %vm2689, %v2764, 0
    %v2774 = vsel %vm2689, %v2765, 0
    %2776 = vmatpush.bf16.msra.mxu0 0
    %2777 = vmatpush.bf16.msra.mxu0 0
    %2778 = vmatpush.bf16.msra.mxu0 0
    %2779 = vmatpush.bf16.msra.mxu0 0
    %2780 = vmatpush.bf16.msra.mxu0 0
    %2781 = vmatpush.bf16.msra.mxu0 0
    %2782 = vmatpush.bf16.msra.mxu0 0
    %2783 = vmatpush.bf16.msra.mxu0 %v2772
    %2784 = vmatmul.bf16.gmra.mxu0 %v2767
    %v2785 = vpop.f32.mrf.mxu0
    %v2786 = vadd.f32 %v2735, %v2785
    %v2787 = vpop.f32.mrf.mxu0
    %v2788 = vadd.f32 %v2740, %v2787
    %2789 = vmatmul.bf16.gmra.mxu0 %v2770
    %v2790 = vpop.f32.mrf.mxu0
    %v2791 = vadd.f32 %v2745, %v2790
    %v2792 = vpop.f32.mrf.mxu0
    %v2793 = vadd.f32 %v2750, %v2792
    %2794 = vdwg.mxu0
    %2795 = vmatpush.bf16.msra.mxu0 0
    %2796 = vmatpush.bf16.msra.mxu0 0
    %2797 = vmatpush.bf16.msra.mxu0 0
    %2798 = vmatpush.bf16.msra.mxu0 0
    %2799 = vmatpush.bf16.msra.mxu0 0
    %2800 = vmatpush.bf16.msra.mxu0 0
    %2801 = vmatpush.bf16.msra.mxu0 0
    %2802 = vmatpush.bf16.msra.mxu0 %v2774
    %2803 = vmatmul.bf16.gmra.mxu0 %v2767
    %v2804 = vpop.f32.mrf.mxu0
    %v2805 = vadd.f32 %v2735, %v2804
    %v2806 = vpop.f32.mrf.mxu0
    %v2807 = vadd.f32 %v2740, %v2806
    %2808 = vmatmul.bf16.gmra.mxu0 %v2770
    %v2809 = vpop.f32.mrf.mxu0
    %v2810 = vadd.f32 %v2745, %v2809
    %v2811 = vpop.f32.mrf.mxu0
    %v2812 = vadd.f32 %v2750, %v2811
    %2813 = vdwg.mxu0
    %v2814 = vmax.f32 %v2786, 0.0
    %v2815 = vmax.f32 %v2805, 0.0
    %v2816 = vmax.f32 %v2788, 0.0
    %v2817 = vmax.f32 %v2807, 0.0
    %v2818 = vmax.f32 %v2791, 0.0
    %v2819 = vmax.f32 %v2810, 0.0
    %v2820 = vmax.f32 %v2793, 0.0
    %v2821 = vmax.f32 %v2812, 0.0
    %v2822 = vpack.c.bf16 %v2816, %v2814
    %v2823 = vpack.c.bf16 %v2817, %v2815
    %v2824 = vpack.c.bf16 %v2820, %v2818
    %v2825 = vpack.c.bf16 %v2821, %v2819
    %v2826 = vstv %s2730
    %vm2827 = vcmask 261120
    %v2829 = vsel %vm2827, %v2728, 0
    %2831 = vmatpush.bf16.msra.mxu0 0
    %2832 = vmatpush.bf16.msra.mxu0 0
    %2833 = vmatpush.bf16.msra.mxu0 0
    %2834 = vmatpush.bf16.msra.mxu0 0
    %2835 = vmatpush.bf16.msra.mxu0 0
    %2836 = vmatpush.bf16.msra.mxu0 0
    %2837 = vmatpush.bf16.msra.mxu0 %v2824
    %2838 = vmatpush.bf16.msra.mxu0 %v2822
    %2839 = vmatmul.bf16.gmra.mxu0 %v2829
    %v2840 = vpop.f32.mrf.mxu0
    %v2841 = vadd.f32 %v2826, %v2840
    %v2842 = vpop.f32.mrf.mxu0
    %2843 = vdwg.mxu0
    %2844 = vmatpush.bf16.msra.mxu0 0
    %2845 = vmatpush.bf16.msra.mxu0 0
    %2846 = vmatpush.bf16.msra.mxu0 0
    %2847 = vmatpush.bf16.msra.mxu0 0
    %2848 = vmatpush.bf16.msra.mxu0 0
    %2849 = vmatpush.bf16.msra.mxu0 0
    %2850 = vmatpush.bf16.msra.mxu0 %v2825
    %2851 = vmatpush.bf16.msra.mxu0 %v2823
    %2852 = vmatmul.bf16.gmra.mxu0 %v2829
    %v2853 = vpop.f32.mrf.mxu0
    %v2854 = vadd.f32 %v2826, %v2853
    %v2855 = vpop.f32.mrf.mxu0
    %2856 = vdwg.mxu0
    %v2857 = vmax.f32 %v2841, 0.0
    %v2858 = vmax.f32 %v2854, 0.0
    %v2859 = vmul.f32 %v2857, %v2704
    %v2860 = vmul.f32 %v2858, %v2717
    %v2863 = vrot.slane %v2860, 7
    %vm2864 = vcmask 1040384
    %v2865 = vsel %vm2864, %v2859, %v2863
    %v2867 = vlaneseq
    %vm2868 = vcmp.ge.s32.totalorder %v2867, 0
    %vm2869 = vcmp.lt.s32.totalorder %v2867, 160
    %vm2870 = vmand %vm2868, %vm2869
    %2871 = vst.msk [vmem:[#allocation2] ss:$2 sm:$0x3] %vm2870, %v2865
    %s2872 = scalar_lea.vmem %s0, 4
    %v2873 = vld [vmem:[%s2872] sm:$0xf]
    %2875 = vst [vmem:[#allocation1] ss:$4 sm:$0xff] %v2873
    %v2876 = vld.sshfl [vmem:[#allocation1] sm:$0xff pattern:$0x73625140]
    %v2877 = vld.sshfl [vmem:[#allocation1 + $0x8] sm:$0xff pattern:$0x73625140]
    %v2878 = vsel %vm2689, %v2876, 0
    %v2880 = vsel %vm2689, %v2877, 0
    %2882 = vmatpush.bf16.msra.mxu0 0
    %2883 = vmatpush.bf16.msra.mxu0 0
    %2884 = vmatpush.bf16.msra.mxu0 0
    %2885 = vmatpush.bf16.msra.mxu0 0
    %2886 = vmatpush.bf16.msra.mxu0 0
    %2887 = vmatpush.bf16.msra.mxu0 0
    %2888 = vmatpush.bf16.msra.mxu0 0
    %2889 = vmatpush.bf16.msra.mxu0 %v2878
    %2890 = vmatmul.bf16.gmra.mxu0 %v2767
    %v2891 = vpop.f32.mrf.mxu0
    %v2892 = vadd.f32 %v2735, %v2891
    %v2893 = vpop.f32.mrf.mxu0
    %v2894 = vadd.f32 %v2740, %v2893
    %2895 = vmatmul.bf16.gmra.mxu0 %v2770
    %v2896 = vpop.f32.mrf.mxu0
    %v2897 = vadd.f32 %v2745, %v2896
    %v2898 = vpop.f32.mrf.mxu0
    %v2899 = vadd.f32 %v2750, %v2898
    %2900 = vdwg.mxu0
    %2901 = vmatpush.bf16.msra.mxu0 0
    %2902 = vmatpush.bf16.msra.mxu0 0
    %2903 = vmatpush.bf16.msra.mxu0 0
    %2904 = vmatpush.bf16.msra.mxu0 0
    %2905 = vmatpush.bf16.msra.mxu0 0
    %2906 = vmatpush.bf16.msra.mxu0 0
    %2907 = vmatpush.bf16.msra.mxu0 0
    %2908 = vmatpush.bf16.msra.mxu0 %v2880
    %2909 = vmatmul.bf16.gmra.mxu0 %v2767
    %v2910 = vpop.f32.mrf.mxu0
    %v2911 = vadd.f32 %v2735, %v2910
    %v2912 = vpop.f32.mrf.mxu0
    %v2913 = vadd.f32 %v2740, %v2912
    %2914 = vmatmul.bf16.gmra.mxu0 %v2770
    %v2915 = vpop.f32.mrf.mxu0
    %v2916 = vadd.f32 %v2745, %v2915
    %v2917 = vpop.f32.mrf.mxu0
    %v2918 = vadd.f32 %v2750, %v2917
    %2919 = vdwg.mxu0
    %v2920 = vmax.f32 %v2892, 0.0
    %v2921 = vmax.f32 %v2911, 0.0
    %v2922 = vmax.f32 %v2894, 0.0
    %v2923 = vmax.f32 %v2913, 0.0
    %v2924 = vmax.f32 %v2897, 0.0
    %v2925 = vmax.f32 %v2916, 0.0
    %v2926 = vmax.f32 %v2899, 0.0
    %v2927 = vmax.f32 %v2918, 0.0
    %v2928 = vpack.c.bf16 %v2922, %v2920
    %v2929 = vpack.c.bf16 %v2923, %v2921
    %v2930 = vpack.c.bf16 %v2926, %v2924
    %v2931 = vpack.c.bf16 %v2927, %v2925
    %2932 = vmatpush.bf16.msra.mxu0 0
    %2933 = vmatpush.bf16.msra.mxu0 0
    %2934 = vmatpush.bf16.msra.mxu0 0
    %2935 = vmatpush.bf16.msra.mxu0 0
    %2936 = vmatpush.bf16.msra.mxu0 0
    %2937 = vmatpush.bf16.msra.mxu0 0
    %2938 = vmatpush.bf16.msra.mxu0 %v2930
    %2939 = vmatpush.bf16.msra.mxu0 %v2928
    %2940 = vmatmul.bf16.gmra.mxu0 %v2829
    %v2941 = vpop.f32.mrf.mxu0
    %v2942 = vadd.f32 %v2826, %v2941
    %v2943 = vpop.f32.mrf.mxu0
    %2944 = vdwg.mxu0
    %2945 = vmatpush.bf16.msra.mxu0 0
    %2946 = vmatpush.bf16.msra.mxu0 0
    %2947 = vmatpush.bf16.msra.mxu0 0
    %2948 = vmatpush.bf16.msra.mxu0 0
    %2949 = vmatpush.bf16.msra.mxu0 0
    %2950 = vmatpush.bf16.msra.mxu0 0
    %2951 = vmatpush.bf16.msra.mxu0 %v2931
    %2952 = vmatpush.bf16.msra.mxu0 %v2929
    %2953 = vmatmul.bf16.gmra.mxu0 %v2829
    %v2954 = vpop.f32.mrf.mxu0
    %v2955 = vadd.f32 %v2826, %v2954
    %v2956 = vpop.f32.mrf.mxu0
    %2957 = vdwg.mxu0
    %v2958 = vmax.f32 %v2942, 0.0
    %v2959 = vmax.f32 %v2955, 0.0
    %v2960 = vmul.f32 %v2958, %v2704
    %v2961 = vmul.f32 %v2959, %v2717
    %v2964 = vrot.slane %v2961, 7
    %v2965 = vsel %vm2864, %v2960, %v2964
    %s2967 = scalar_lea.vmem [#allocation2], 1
    %2968 = vst.msk [vmem:[%s2967] ss:$2 sm:$0x3] %vm2870, %v2965
    %v2969 = vld [vmem:[#allocation2] sm:$0xf]
    %2971 = vst [vmem:[#allocation1] ss:$4 sm:$0xff] %v2969
    %v2972 = vld.sshfl [vmem:[#allocation1] sm:$0xff pattern:$0x73625140]
    %v2973 = vld.sshfl [vmem:[#allocation1 + $0x8] sm:$0xff pattern:$0x73625140]
    %v2976 = vpack.c.bf16 %v2972, %v2972
    %v2977 = vpack.c.bf16 %v2973, %v2973
    %v2978 = vld [vmem:[#allocation4] sm:$0xff]
    %v2979 = vld [vmem:[#allocation4 + $0x8] sm:$0xff]
    %v2980 = vld [vmem:[#allocation4 + $0x10] sm:$0xf]
    %v2981 = vld [vmem:[#allocation4 + $0x14] sm:$0xff]
    %v2982 = vld [vmem:[#allocation4 + $0x1c] sm:$0xff]
    %v2983 = vld [vmem:[#allocation4 + $0x24] sm:$0xf]
    %v2984 = vld [vmem:[#allocation4 + $0x28] sm:$0xff]
    %v2985 = vld [vmem:[#allocation4 + $0x30] sm:$0xff]
    %v2986 = vld [vmem:[#allocation4 + $0x38] sm:$0xf]
    %v2987 = vld [vmem:[#allocation4 + $0x3c] sm:$0xff]
    %v2988 = vld [vmem:[#allocation4 + $0x44] sm:$0xff]
    %v2989 = vld [vmem:[#allocation4 + $0x4c] sm:$0xf]
    %v2990 = vld [vmem:[#allocation4 + $0x50] sm:$0xff]
    %v2991 = vld [vmem:[#allocation4 + $0x58] sm:$0xff]
    %v2992 = vld [vmem:[#allocation4 + $0x60] sm:$0xf]
    %v2993 = vld [vmem:[#allocation4 + $0x64] sm:$0xff]
    %v2994 = vld [vmem:[#allocation4 + $0x6c] sm:$0xff]
    %v2995 = vld [vmem:[#allocation4 + $0x74] sm:$0xf]
    %v2996 = vld [vmem:[#allocation4 + $0x78] sm:$0xff]
    %v2997 = vld [vmem:[#allocation4 + $0x80] sm:$0xff]
    %v2998 = vld [vmem:[#allocation4 + $0x88] sm:$0xf]
    %v2999 = vld [vmem:[#allocation4 + $0x8c] sm:$0xff]
    %v3000 = vld [vmem:[#allocation4 + $0x94] sm:$0xff]
    %v3001 = vld [vmem:[#allocation4 + $0x9c] sm:$0xf]
    %v3002 = vld [vmem:[#allocation4 + $0xa0] sm:$0xff]
    %v3003 = vld [vmem:[#allocation4 + $0xa8] sm:$0xff]
    %v3004 = vld [vmem:[#allocation4 + $0xb0] sm:$0xf]
    %v3005 = vld [vmem:[#allocation4 + $0xb4] sm:$0xff]
    %v3006 = vld [vmem:[#allocation4 + $0xbc] sm:$0xff]
    %v3007 = vld [vmem:[#allocation4 + $0xc4] sm:$0xf]
    %v3008 = vld [vmem:[#allocation4 + $0xc8] sm:$0xff]
    %v3009 = vld [vmem:[#allocation4 + $0xd0] sm:$0xff]
    %v3010 = vld [vmem:[#allocation4 + $0xd8] sm:$0xf]
    %v3011 = vld [vmem:[#allocation4 + $0xdc] sm:$0xff]
    %v3012 = vld [vmem:[#allocation4 + $0xe4] sm:$0xff]
    %v3013 = vld [vmem:[#allocation4 + $0xec] sm:$0xf]
    %v3014 = vld [vmem:[#allocation4 + $0xf0] sm:$0xff]
    %v3015 = vld [vmem:[#allocation4 + $0xf8] sm:$0xff]
    %v3016 = vld [vmem:[#allocation4 + $0x100] sm:$0xf]
    %v3017 = vld [vmem:[#allocation4 + $0x104] sm:$0xff]
    %v3018 = vld [vmem:[#allocation4 + $0x10c] sm:$0xff]
    %v3019 = vld [vmem:[#allocation4 + $0x114] sm:$0xf]
    %v3020 = vld [vmem:[#allocation4 + $0x118] sm:$0xff]
    %v3021 = vld [vmem:[#allocation4 + $0x120] sm:$0xff]
    %v3022 = vld [vmem:[#allocation4 + $0x128] sm:$0xf]
    %v3023 = vld [vmem:[#allocation4 + $0x12c] sm:$0xff]
    %v3024 = vld [vmem:[#allocation4 + $0x134] sm:$0xff]
    %v3025 = vld [vmem:[#allocation4 + $0x13c] sm:$0xf]
    %v3026 = vld [vmem:[#allocation4 + $0x140] sm:$0xff]
    %v3027 = vld [vmem:[#allocation4 + $0x148] sm:$0xff]
    %v3028 = vld [vmem:[#allocation4 + $0x150] sm:$0xf]
    %v3029 = vld [vmem:[#allocation4 + $0x154] sm:$0xff]
    %v3030 = vld [vmem:[#allocation4 + $0x15c] sm:$0xff]
    %v3031 = vld [vmem:[#allocation4 + $0x164] sm:$0xf]
    %v3032 = vld [vmem:[#allocation4 + $0x168] sm:$0xff]
    %v3033 = vld [vmem:[#allocation4 + $0x170] sm:$0xff]
    %v3034 = vld [vmem:[#allocation4 + $0x178] sm:$0xf]
    %v3035 = vld [vmem:[#allocation4 + $0x17c] sm:$0xff]
    %v3036 = vld [vmem:[#allocation4 + $0x184] sm:$0xff]
    %v3037 = vld [vmem:[#allocation4 + $0x18c] sm:$0xf]
    %v3038 = vld [vmem:[%s15] sm:$0x1f]
    %v3040 = vperm.slane %v3038, 0
    %v3041 = vperm.slane %v3038, 1
    %v3042 = vperm.slane %v3038, 2
    %v3043 = vperm.slane %v3038, 3
    %v3044 = vperm.slane %v3038, 4
    %v3110 = vunpack.c.l.b16 %v2978
    %v3111 = vunpack.c.h.b16 %v2978
    %v3112 = vunpack.c.l.b16 %v2979
    %v3113 = vunpack.c.h.b16 %v2979
    %v3114 = vunpack.c.l.b16 %v2980
    %v3115 = vunpack.c.l.b16 %v2981
    %v3116 = vunpack.c.h.b16 %v2981
    %v3117 = vunpack.c.l.b16 %v2982
    %v3118 = vunpack.c.h.b16 %v2982
    %v3119 = vunpack.c.l.b16 %v2983
    %v3120 = vunpack.c.l.b16 %v2984
    %v3121 = vunpack.c.h.b16 %v2984
    %v3122 = vunpack.c.l.b16 %v2985
    %v3123 = vunpack.c.h.b16 %v2985
    %v3124 = vunpack.c.l.b16 %v2986
    %v3125 = vunpack.c.l.b16 %v2987
    %v3126 = vunpack.c.h.b16 %v2987
    %v3127 = vunpack.c.l.b16 %v2988
    %v3128 = vunpack.c.h.b16 %v2988
    %v3129 = vunpack.c.l.b16 %v2989
    %v3130 = vunpack.c.l.b16 %v2990
    %v3131 = vunpack.c.h.b16 %v2990
    %v3132 = vunpack.c.l.b16 %v2991
    %v3133 = vunpack.c.h.b16 %v2991
    %v3134 = vunpack.c.l.b16 %v2992
    %v3135 = vunpack.c.l.b16 %v2993
    %v3136 = vunpack.c.h.b16 %v2993
    %v3137 = vunpack.c.l.b16 %v2994
    %v3138 = vunpack.c.h.b16 %v2994
    %v3139 = vunpack.c.l.b16 %v2995
    %v3140 = vunpack.c.l.b16 %v2996
    %v3141 = vunpack.c.h.b16 %v2996
    %v3142 = vunpack.c.l.b16 %v2997
    %v3143 = vunpack.c.h.b16 %v2997
    %v3144 = vunpack.c.l.b16 %v2998
    %v3145 = vunpack.c.l.b16 %v2999
    %v3146 = vunpack.c.h.b16 %v2999
    %v3147 = vunpack.c.l.b16 %v3000
    %v3148 = vunpack.c.h.b16 %v3000
    %v3149 = vunpack.c.l.b16 %v3001
    %v3150 = vunpack.c.l.b16 %v3002
    %v3151 = vunpack.c.h.b16 %v3002
    %v3152 = vunpack.c.l.b16 %v3003
    %v3153 = vunpack.c.h.b16 %v3003
    %v3154 = vunpack.c.l.b16 %v3004
    %v3155 = vunpack.c.l.b16 %v3005
    %v3156 = vunpack.c.h.b16 %v3005
    %v3157 = vunpack.c.l.b16 %v3006
    %v3158 = vunpack.c.h.b16 %v3006
    %v3159 = vunpack.c.l.b16 %v3007
    %v3160 = vunpack.c.l.b16 %v3008
    %v3161 = vunpack.c.h.b16 %v3008
    %v3162 = vunpack.c.l.b16 %v3009
    %v3163 = vunpack.c.h.b16 %v3009
    %v3164 = vunpack.c.l.b16 %v3010
    %v3165 = vunpack.c.l.b16 %v3011
    %v3166 = vunpack.c.h.b16 %v3011
    %v3167 = vunpack.c.l.b16 %v3012
    %v3168 = vunpack.c.h.b16 %v3012
    %v3169 = vunpack.c.l.b16 %v3013
    %v3170 = vunpack.c.l.b16 %v3014
    %v3171 = vunpack.c.h.b16 %v3014
    %v3172 = vunpack.c.l.b16 %v3015
    %v3173 = vunpack.c.h.b16 %v3015
    %v3174 = vunpack.c.l.b16 %v3016
    %v3175 = vunpack.c.l.b16 %v3017
    %v3176 = vunpack.c.h.b16 %v3017
    %v3177 = vunpack.c.l.b16 %v3018
    %v3178 = vunpack.c.h.b16 %v3018
    %v3179 = vunpack.c.l.b16 %v3019
    %v3180 = vunpack.c.l.b16 %v3020
    %v3181 = vunpack.c.h.b16 %v3020
    %v3182 = vunpack.c.l.b16 %v3021
    %v3183 = vunpack.c.h.b16 %v3021
    %v3184 = vunpack.c.l.b16 %v3022
    %v3185 = vunpack.c.l.b16 %v3023
    %v3186 = vunpack.c.h.b16 %v3023
    %v3187 = vunpack.c.l.b16 %v3024
    %v3188 = vunpack.c.h.b16 %v3024
    %v3189 = vunpack.c.l.b16 %v3025
    %v3190 = vunpack.c.l.b16 %v3026
    %v3191 = vunpack.c.h.b16 %v3026
    %v3192 = vunpack.c.l.b16 %v3027
    %v3193 = vunpack.c.h.b16 %v3027
    %v3194 = vunpack.c.l.b16 %v3028
    %v3195 = vunpack.c.l.b16 %v3029
    %v3196 = vunpack.c.h.b16 %v3029
    %v3197 = vunpack.c.l.b16 %v3030
    %v3198 = vunpack.c.h.b16 %v3030
    %v3199 = vunpack.c.l.b16 %v3031
    %v3200 = vunpack.c.l.b16 %v3032
    %v3201 = vunpack.c.h.b16 %v3032
    %v3202 = vunpack.c.l.b16 %v3033
    %v3203 = vunpack.c.h.b16 %v3033
    %v3204 = vunpack.c.l.b16 %v3034
    %v3205 = vunpack.c.l.b16 %v3035
    %v3206 = vunpack.c.h.b16 %v3035
    %v3207 = vunpack.c.l.b16 %v3036
    %v3208 = vunpack.c.h.b16 %v3036
    %v3209 = vunpack.c.l.b16 %v3037
    %v3210 = vpack.c.b16 %v3115, %v3110
    %v3211 = vpack.c.b16 %v3116, %v3111
    %v3212 = vpack.c.b16 %v3117, %v3112
    %v3213 = vpack.c.b16 %v3118, %v3113
    %v3214 = vpack.c.b16 %v3119, %v3114
    %v3215 = vpack.c.b16 %v3125, %v3120
    %v3216 = vpack.c.b16 %v3126, %v3121
    %v3217 = vpack.c.b16 %v3127, %v3122
    %v3218 = vpack.c.b16 %v3128, %v3123
    %v3219 = vpack.c.b16 %v3129, %v3124
    %v3220 = vpack.c.b16 %v3135, %v3130
    %v3221 = vpack.c.b16 %v3136, %v3131
    %v3222 = vpack.c.b16 %v3137, %v3132
    %v3223 = vpack.c.b16 %v3138, %v3133
    %v3224 = vpack.c.b16 %v3139, %v3134
    %v3225 = vpack.c.b16 %v3145, %v3140
    %v3226 = vpack.c.b16 %v3146, %v3141
    %v3227 = vpack.c.b16 %v3147, %v3142
    %v3228 = vpack.c.b16 %v3148, %v3143
    %v3229 = vpack.c.b16 %v3149, %v3144
    %v3230 = vpack.c.b16 %v3155, %v3150
    %v3231 = vpack.c.b16 %v3156, %v3151
    %v3232 = vpack.c.b16 %v3157, %v3152
    %v3233 = vpack.c.b16 %v3158, %v3153
    %v3234 = vpack.c.b16 %v3159, %v3154
    %v3235 = vpack.c.b16 %v3165, %v3160
    %v3236 = vpack.c.b16 %v3166, %v3161
    %v3237 = vpack.c.b16 %v3167, %v3162
    %v3238 = vpack.c.b16 %v3168, %v3163
    %v3239 = vpack.c.b16 %v3169, %v3164
    %v3240 = vpack.c.b16 %v3175, %v3170
    %v3241 = vpack.c.b16 %v3176, %v3171
    %v3242 = vpack.c.b16 %v3177, %v3172
    %v3243 = vpack.c.b16 %v3178, %v3173
    %v3244 = vpack.c.b16 %v3179, %v3174
    %v3245 = vpack.c.b16 %v3185, %v3180
    %v3246 = vpack.c.b16 %v3186, %v3181
    %v3247 = vpack.c.b16 %v3187, %v3182
    %v3248 = vpack.c.b16 %v3188, %v3183
    %v3249 = vpack.c.b16 %v3189, %v3184
    %v3250 = vpack.c.b16 %v3195, %v3190
    %v3251 = vpack.c.b16 %v3196, %v3191
    %v3252 = vpack.c.b16 %v3197, %v3192
    %v3253 = vpack.c.b16 %v3198, %v3193
    %v3254 = vpack.c.b16 %v3199, %v3194
    %v3255 = vpack.c.b16 %v3205, %v3200
    %v3256 = vpack.c.b16 %v3206, %v3201
    %v3257 = vpack.c.b16 %v3207, %v3202
    %v3258 = vpack.c.b16 %v3208, %v3203
    %v3259 = vpack.c.b16 %v3209, %v3204
    %v3311 = vsel %vm2827, %v2977, 0
    %3313 = vmatpush.bf16.msra.mxu0 %v3245
    %3314 = vmatpush.bf16.msra.mxu0 %v3240
    %3315 = vmatpush.bf16.msra.mxu0 %v3235
    %3316 = vmatpush.bf16.msra.mxu0 %v3230
    %3317 = vmatpush.bf16.msra.mxu0 %v3225
    %3318 = vmatpush.bf16.msra.mxu0 %v3220
    %3319 = vmatpush.bf16.msra.mxu0 %v3215
    %3320 = vmatpush.bf16.msra.mxu0 %v3210
    %3321 = vmatmul.bf16.gmra.mxu0 %v2976
    %v3322 = vpop.f32.mrf.mxu0
    %v3323 = vadd.f32 %v3040, %v3322
    %v3324 = vpop.f32.mrf.mxu0
    %3325 = vdwg.mxu0
    %3326 = vmatpush.bf16.msra.mxu0 0
    %3327 = vmatpush.bf16.msra.mxu0 0
    %3328 = vmatpush.bf16.msra.mxu0 0
    %3329 = vmatpush.bf16.msra.mxu0 0
    %3330 = vmatpush.bf16.msra.mxu0 0
    %3331 = vmatpush.bf16.msra.mxu0 0
    %3332 = vmatpush.bf16.msra.mxu0 %v3255
    %3333 = vmatpush.bf16.msra.mxu0 %v3250
    %3334 = vmatmul.bf16.gmra.mxu0 %v3311
    %v3335 = vpop.f32.mrf.mxu0
    %v3336 = vadd.f32 %v3323, %v3335
    %v3337 = vpop.f32.mrf.mxu0
    %3338 = vdwg.mxu0
    %3339 = vmatpush.bf16.msra.mxu0 %v3246
    %3340 = vmatpush.bf16.msra.mxu0 %v3241
    %3341 = vmatpush.bf16.msra.mxu0 %v3236
    %3342 = vmatpush.bf16.msra.mxu0 %v3231
    %3343 = vmatpush.bf16.msra.mxu0 %v3226
    %3344 = vmatpush.bf16.msra.mxu0 %v3221
    %3345 = vmatpush.bf16.msra.mxu0 %v3216
    %3346 = vmatpush.bf16.msra.mxu0 %v3211
    %3347 = vmatmul.bf16.gmra.mxu0 %v2976
    %v3348 = vpop.f32.mrf.mxu0
    %v3349 = vadd.f32 %v3041, %v3348
    %v3350 = vpop.f32.mrf.mxu0
    %3351 = vdwg.mxu0
    %3352 = vmatpush.bf16.msra.mxu0 0
    %3353 = vmatpush.bf16.msra.mxu0 0
    %3354 = vmatpush.bf16.msra.mxu0 0
    %3355 = vmatpush.bf16.msra.mxu0 0
    %3356 = vmatpush.bf16.msra.mxu0 0
    %3357 = vmatpush.bf16.msra.mxu0 0
    %3358 = vmatpush.bf16.msra.mxu0 %v3256
    %3359 = vmatpush.bf16.msra.mxu0 %v3251
    %3360 = vmatmul.bf16.gmra.mxu0 %v3311
    %v3361 = vpop.f32.mrf.mxu0
    %v3362 = vadd.f32 %v3349, %v3361
    %v3363 = vpop.f32.mrf.mxu0
    %3364 = vdwg.mxu0
    %3365 = vmatpush.bf16.msra.mxu0 %v3247
    %3366 = vmatpush.bf16.msra.mxu0 %v3242
    %3367 = vmatpush.bf16.msra.mxu0 %v3237
    %3368 = vmatpush.bf16.msra.mxu0 %v3232
    %3369 = vmatpush.bf16.msra.mxu0 %v3227
    %3370 = vmatpush.bf16.msra.mxu0 %v3222
    %3371 = vmatpush.bf16.msra.mxu0 %v3217
    %3372 = vmatpush.bf16.msra.mxu0 %v3212
    %3373 = vmatmul.bf16.gmra.mxu0 %v2976
    %v3374 = vpop.f32.mrf.mxu0
    %v3375 = vadd.f32 %v3042, %v3374
    %v3376 = vpop.f32.mrf.mxu0
    %3377 = vdwg.mxu0
    %3378 = vmatpush.bf16.msra.mxu0 0
    %3379 = vmatpush.bf16.msra.mxu0 0
    %3380 = vmatpush.bf16.msra.mxu0 0
    %3381 = vmatpush.bf16.msra.mxu0 0
    %3382 = vmatpush.bf16.msra.mxu0 0
    %3383 = vmatpush.bf16.msra.mxu0 0
    %3384 = vmatpush.bf16.msra.mxu0 %v3257
    %3385 = vmatpush.bf16.msra.mxu0 %v3252
    %3386 = vmatmul.bf16.gmra.mxu0 %v3311
    %v3387 = vpop.f32.mrf.mxu0
    %v3388 = vadd.f32 %v3375, %v3387
    %v3389 = vpop.f32.mrf.mxu0
    %3390 = vdwg.mxu0
    %3391 = vmatpush.bf16.msra.mxu0 %v3248
    %3392 = vmatpush.bf16.msra.mxu0 %v3243
    %3393 = vmatpush.bf16.msra.mxu0 %v3238
    %3394 = vmatpush.bf16.msra.mxu0 %v3233
    %3395 = vmatpush.bf16.msra.mxu0 %v3228
    %3396 = vmatpush.bf16.msra.mxu0 %v3223
    %3397 = vmatpush.bf16.msra.mxu0 %v3218
    %3398 = vmatpush.bf16.msra.mxu0 %v3213
    %3399 = vmatmul.bf16.gmra.mxu0 %v2976
    %v3400 = vpop.f32.mrf.mxu0
    %v3401 = vadd.f32 %v3043, %v3400
    %v3402 = vpop.f32.mrf.mxu0
    %3403 = vdwg.mxu0
    %3404 = vmatpush.bf16.msra.mxu0 0
    %3405 = vmatpush.bf16.msra.mxu0 0
    %3406 = vmatpush.bf16.msra.mxu0 0
    %3407 = vmatpush.bf16.msra.mxu0 0
    %3408 = vmatpush.bf16.msra.mxu0 0
    %3409 = vmatpush.bf16.msra.mxu0 0
    %3410 = vmatpush.bf16.msra.mxu0 %v3258
    %3411 = vmatpush.bf16.msra.mxu0 %v3253
    %3412 = vmatmul.bf16.gmra.mxu0 %v3311
    %v3413 = vpop.f32.mrf.mxu0
    %v3414 = vadd.f32 %v3401, %v3413
    %v3415 = vpop.f32.mrf.mxu0
    %3416 = vdwg.mxu0
    %3417 = vmatpush.bf16.msra.mxu0 %v3249
    %3418 = vmatpush.bf16.msra.mxu0 %v3244
    %3419 = vmatpush.bf16.msra.mxu0 %v3239
    %3420 = vmatpush.bf16.msra.mxu0 %v3234
    %3421 = vmatpush.bf16.msra.mxu0 %v3229
    %3422 = vmatpush.bf16.msra.mxu0 %v3224
    %3423 = vmatpush.bf16.msra.mxu0 %v3219
    %3424 = vmatpush.bf16.msra.mxu0 %v3214
    %3425 = vmatmul.bf16.gmra.mxu0 %v2976
    %v3426 = vpop.f32.mrf.mxu0
    %v3427 = vadd.f32 %v3044, %v3426
    %v3428 = vpop.f32.mrf.mxu0
    %3429 = vdwg.mxu0
    %3430 = vmatpush.bf16.msra.mxu0 0
    %3431 = vmatpush.bf16.msra.mxu0 0
    %3432 = vmatpush.bf16.msra.mxu0 0
    %3433 = vmatpush.bf16.msra.mxu0 0
    %3434 = vmatpush.bf16.msra.mxu0 0
    %3435 = vmatpush.bf16.msra.mxu0 0
    %3436 = vmatpush.bf16.msra.mxu0 %v3259
    %3437 = vmatpush.bf16.msra.mxu0 %v3254
    %3438 = vmatmul.bf16.gmra.mxu0 %v3311
    %v3439 = vpop.f32.mrf.mxu0
    %v3440 = vadd.f32 %v3427, %v3439
    %v3441 = vpop.f32.mrf.mxu0
    %3442 = vdwg.mxu0
    %v3443 = vmax.f32 %v3336, 0.0
    %v3444 = vmax.f32 %v3362, 0.0
    %v3445 = vmax.f32 %v3388, 0.0
    %v3446 = vmax.f32 %v3414, 0.0
    %v3447 = vmax.f32 %v3440, 0.0
    %v3448 = vpack.c.bf16 %v3443, %v3443
    %v3449 = vpack.c.bf16 %v3444, %v3444
    %v3450 = vpack.c.bf16 %v3445, %v3445
    %v3451 = vpack.c.bf16 %v3446, %v3446
    %v3452 = vpack.c.bf16 %v3447, %v3447
    %v3453 = vld [vmem:[%s16] sm:$0xf]
    %v3454 = vld [vmem:[%s16 + $0x4] sm:$0xf]
    %v3455 = vld [vmem:[%s16 + $0x8] sm:$0xf]
    %v3456 = vld [vmem:[%s16 + $0xc] sm:$0xf]
    %v3457 = vld [vmem:[%s16 + $0x10] sm:$0xf]
    %v3458 = vld [vmem:[%s16 + $0x14] sm:$0xf]
    %v3459 = vld [vmem:[%s16 + $0x18] sm:$0xf]
    %v3460 = vld [vmem:[%s16 + $0x1c] sm:$0xf]
    %v3461 = vld [vmem:[%s16 + $0x20] sm:$0xf]
    %v3462 = vld [vmem:[%s16 + $0x24] sm:$0xf]
    %v3463 = vld [vmem:[%s16 + $0x28] sm:$0xf]
    %v3464 = vld [vmem:[%s16 + $0x2c] sm:$0xf]
    %v3465 = vld [vmem:[%s16 + $0x30] sm:$0xf]
    %v3466 = vld [vmem:[%s16 + $0x34] sm:$0xf]
    %v3467 = vld [vmem:[%s16 + $0x38] sm:$0xf]
    %v3468 = vld [vmem:[%s16 + $0x3c] sm:$0xf]
    %v3469 = vld [vmem:[%s16 + $0x40] sm:$0xf]
    %v3470 = vld [vmem:[%s16 + $0x44] sm:$0xf]
    %v3471 = vld [vmem:[%s16 + $0x48] sm:$0xf]
    %v3472 = vld [vmem:[%s16 + $0x4c] sm:$0xf]
    %v3473 = vld [vmem:[%s16 + $0x50] sm:$0xf]
    %v3474 = vld [vmem:[%s16 + $0x54] sm:$0xf]
    %v3475 = vld [vmem:[%s16 + $0x58] sm:$0xf]
    %v3476 = vld [vmem:[%s16 + $0x5c] sm:$0xf]
    %v3477 = vld [vmem:[%s16 + $0x60] sm:$0xf]
    %v3478 = vld [vmem:[%s16 + $0x64] sm:$0xf]
    %v3479 = vld [vmem:[%s16 + $0x68] sm:$0xf]
    %v3480 = vld [vmem:[%s16 + $0x6c] sm:$0xf]
    %v3481 = vld [vmem:[%s16 + $0x70] sm:$0xf]
    %v3482 = vld [vmem:[%s16 + $0x74] sm:$0xf]
    %v3483 = vld [vmem:[%s16 + $0x78] sm:$0xf]
    %v3484 = vld [vmem:[%s16 + $0x7c] sm:$0xf]
    %v3485 = vld [vmem:[%s16 + $0x80] sm:$0xf]
    %v3486 = vld [vmem:[%s16 + $0x84] sm:$0xf]
    %v3487 = vld [vmem:[%s16 + $0x88] sm:$0xf]
    %v3488 = vld [vmem:[%s16 + $0x8c] sm:$0xf]
    %v3489 = vld [vmem:[%s16 + $0x90] sm:$0xf]
    %v3490 = vld [vmem:[%s16 + $0x94] sm:$0xf]
    %v3491 = vld [vmem:[%s16 + $0x98] sm:$0xf]
    %v3492 = vld [vmem:[%s16 + $0x9c] sm:$0xf]
    %v3493 = vld [vmem:[%s16 + $0xa0] sm:$0xf]
    %v3494 = vld [vmem:[%s16 + $0xa4] sm:$0xf]
    %v3495 = vld [vmem:[%s16 + $0xa8] sm:$0xf]
    %v3496 = vld [vmem:[%s16 + $0xac] sm:$0xf]
    %v3497 = vld [vmem:[%s16 + $0xb0] sm:$0xf]
    %v3498 = vld [vmem:[%s16 + $0xb4] sm:$0xf]
    %v3499 = vld [vmem:[%s16 + $0xb8] sm:$0xf]
    %v3500 = vld [vmem:[%s16 + $0xbc] sm:$0xf]
    %v3501 = vld [vmem:[%s16 + $0xc0] sm:$0xf]
    %v3502 = vld [vmem:[%s16 + $0xc4] sm:$0xf]
    %v3503 = vld [vmem:[%s16 + $0xc8] sm:$0xf]
    %v3504 = vld [vmem:[%s16 + $0xcc] sm:$0xf]
    %v3505 = vld [vmem:[%s16 + $0xd0] sm:$0xf]
    %v3506 = vld [vmem:[%s16 + $0xd4] sm:$0xf]
    %v3507 = vld [vmem:[%s16 + $0xd8] sm:$0xf]
    %v3508 = vld [vmem:[%s16 + $0xdc] sm:$0xf]
    %v3509 = vld [vmem:[%s16 + $0xe0] sm:$0xf]
    %v3510 = vld [vmem:[%s16 + $0xe4] sm:$0xf]
    %v3511 = vld [vmem:[%s16 + $0xe8] sm:$0xf]
    %v3512 = vld [vmem:[%s16 + $0xec] sm:$0xf]
    %v3513 = vld [vmem:[%s16 + $0xf0] sm:$0xf]
    %v3514 = vld [vmem:[%s16 + $0xf4] sm:$0xf]
    %v3515 = vld [vmem:[%s16 + $0xf8] sm:$0xf]
    %v3516 = vld [vmem:[%s16 + $0xfc] sm:$0xf]
    %v3517 = vld [vmem:[%s16 + $0x100] sm:$0xf]
    %v3518 = vld [vmem:[%s16 + $0x104] sm:$0xf]
    %v3519 = vld [vmem:[%s16 + $0x108] sm:$0xf]
    %v3520 = vld [vmem:[%s16 + $0x10c] sm:$0xf]
    %v3521 = vld [vmem:[%s16 + $0x110] sm:$0xf]
    %v3522 = vld [vmem:[%s16 + $0x114] sm:$0xf]
    %v3523 = vld [vmem:[%s16 + $0x118] sm:$0xf]
    %v3524 = vld [vmem:[%s16 + $0x11c] sm:$0xf]
    %v3525 = vld [vmem:[%s16 + $0x120] sm:$0xf]
    %v3526 = vld [vmem:[%s16 + $0x124] sm:$0xf]
    %v3527 = vld [vmem:[%s16 + $0x128] sm:$0xf]
    %v3528 = vld [vmem:[%s16 + $0x12c] sm:$0xf]
    %v3529 = vld [vmem:[%s16 + $0x130] sm:$0xf]
    %v3530 = vld [vmem:[%s16 + $0x134] sm:$0xf]
    %v3531 = vld [vmem:[%s16 + $0x138] sm:$0xf]
    %v3532 = vld [vmem:[%s16 + $0x13c] sm:$0xf]
    %v3533 = vld [vmem:[%s17] sm:$0x1]
    %v3535 = vperm.slane %v3533, 0
    %v3617 = vunpack.c.l.b16 %v3453
    %v3618 = vunpack.c.l.b16 %v3454
    %v3619 = vunpack.c.l.b16 %v3455
    %v3620 = vunpack.c.l.b16 %v3456
    %v3621 = vunpack.c.l.b16 %v3457
    %v3622 = vunpack.c.l.b16 %v3458
    %v3623 = vunpack.c.l.b16 %v3459
    %v3624 = vunpack.c.l.b16 %v3460
    %v3625 = vunpack.c.l.b16 %v3461
    %v3626 = vunpack.c.l.b16 %v3462
    %v3627 = vunpack.c.l.b16 %v3463
    %v3628 = vunpack.c.l.b16 %v3464
    %v3629 = vunpack.c.l.b16 %v3465
    %v3630 = vunpack.c.l.b16 %v3466
    %v3631 = vunpack.c.l.b16 %v3467
    %v3632 = vunpack.c.l.b16 %v3468
    %v3633 = vunpack.c.l.b16 %v3469
    %v3634 = vunpack.c.l.b16 %v3470
    %v3635 = vunpack.c.l.b16 %v3471
    %v3636 = vunpack.c.l.b16 %v3472
    %v3637 = vunpack.c.l.b16 %v3473
    %v3638 = vunpack.c.l.b16 %v3474
    %v3639 = vunpack.c.l.b16 %v3475
    %v3640 = vunpack.c.l.b16 %v3476
    %v3641 = vunpack.c.l.b16 %v3477
    %v3642 = vunpack.c.l.b16 %v3478
    %v3643 = vunpack.c.l.b16 %v3479
    %v3644 = vunpack.c.l.b16 %v3480
    %v3645 = vunpack.c.l.b16 %v3481
    %v3646 = vunpack.c.l.b16 %v3482
    %v3647 = vunpack.c.l.b16 %v3483
    %v3648 = vunpack.c.l.b16 %v3484
    %v3649 = vunpack.c.l.b16 %v3485
    %v3650 = vunpack.c.l.b16 %v3486
    %v3651 = vunpack.c.l.b16 %v3487
    %v3652 = vunpack.c.l.b16 %v3488
    %v3653 = vunpack.c.l.b16 %v3489
    %v3654 = vunpack.c.l.b16 %v3490
    %v3655 = vunpack.c.l.b16 %v3491
    %v3656 = vunpack.c.l.b16 %v3492
    %v3657 = vunpack.c.l.b16 %v3493
    %v3658 = vunpack.c.l.b16 %v3494
    %v3659 = vunpack.c.l.b16 %v3495
    %v3660 = vunpack.c.l.b16 %v3496
    %v3661 = vunpack.c.l.b16 %v3497
    %v3662 = vunpack.c.l.b16 %v3498
    %v3663 = vunpack.c.l.b16 %v3499
    %v3664 = vunpack.c.l.b16 %v3500
    %v3665 = vunpack.c.l.b16 %v3501
    %v3666 = vunpack.c.l.b16 %v3502
    %v3667 = vunpack.c.l.b16 %v3503
    %v3668 = vunpack.c.l.b16 %v3504
    %v3669 = vunpack.c.l.b16 %v3505
    %v3670 = vunpack.c.l.b16 %v3506
    %v3671 = vunpack.c.l.b16 %v3507
    %v3672 = vunpack.c.l.b16 %v3508
    %v3673 = vunpack.c.l.b16 %v3509
    %v3674 = vunpack.c.l.b16 %v3510
    %v3675 = vunpack.c.l.b16 %v3511
    %v3676 = vunpack.c.l.b16 %v3512
    %v3677 = vunpack.c.l.b16 %v3513
    %v3678 = vunpack.c.l.b16 %v3514
    %v3679 = vunpack.c.l.b16 %v3515
    %v3680 = vunpack.c.l.b16 %v3516
    %v3681 = vunpack.c.l.b16 %v3517
    %v3682 = vunpack.c.l.b16 %v3518
    %v3683 = vunpack.c.l.b16 %v3519
    %v3684 = vunpack.c.l.b16 %v3520
    %v3685 = vunpack.c.l.b16 %v3521
    %v3686 = vunpack.c.l.b16 %v3522
    %v3687 = vunpack.c.l.b16 %v3523
    %v3688 = vunpack.c.l.b16 %v3524
    %v3689 = vunpack.c.l.b16 %v3525
    %v3690 = vunpack.c.l.b16 %v3526
    %v3691 = vunpack.c.l.b16 %v3527
    %v3692 = vunpack.c.l.b16 %v3528
    %v3693 = vunpack.c.l.b16 %v3529
    %v3694 = vunpack.c.l.b16 %v3530
    %v3695 = vunpack.c.l.b16 %v3531
    %v3696 = vunpack.c.l.b16 %v3532
    %v3697 = vpack.c.b16 %v3618, %v3617
    %v3698 = vpack.c.b16 %v3620, %v3619
    %v3699 = vpack.c.b16 %v3622, %v3621
    %v3700 = vpack.c.b16 %v3624, %v3623
    %v3701 = vpack.c.b16 %v3626, %v3625
    %v3702 = vpack.c.b16 %v3628, %v3627
    %v3703 = vpack.c.b16 %v3630, %v3629
    %v3704 = vpack.c.b16 %v3632, %v3631
    %v3705 = vpack.c.b16 %v3634, %v3633
    %v3706 = vpack.c.b16 %v3636, %v3635
    %v3707 = vpack.c.b16 %v3638, %v3637
    %v3708 = vpack.c.b16 %v3640, %v3639
    %v3709 = vpack.c.b16 %v3642, %v3641
    %v3710 = vpack.c.b16 %v3644, %v3643
    %v3711 = vpack.c.b16 %v3646, %v3645
    %v3712 = vpack.c.b16 %v3648, %v3647
    %v3713 = vpack.c.b16 %v3650, %v3649
    %v3714 = vpack.c.b16 %v3652, %v3651
    %v3715 = vpack.c.b16 %v3654, %v3653
    %v3716 = vpack.c.b16 %v3656, %v3655
    %v3717 = vpack.c.b16 %v3658, %v3657
    %v3718 = vpack.c.b16 %v3660, %v3659
    %v3719 = vpack.c.b16 %v3662, %v3661
    %v3720 = vpack.c.b16 %v3664, %v3663
    %v3721 = vpack.c.b16 %v3666, %v3665
    %v3722 = vpack.c.b16 %v3668, %v3667
    %v3723 = vpack.c.b16 %v3670, %v3669
    %v3724 = vpack.c.b16 %v3672, %v3671
    %v3725 = vpack.c.b16 %v3674, %v3673
    %v3726 = vpack.c.b16 %v3676, %v3675
    %v3727 = vpack.c.b16 %v3678, %v3677
    %v3728 = vpack.c.b16 %v3680, %v3679
    %v3729 = vpack.c.b16 %v3682, %v3681
    %v3730 = vpack.c.b16 %v3684, %v3683
    %v3731 = vpack.c.b16 %v3686, %v3685
    %v3732 = vpack.c.b16 %v3688, %v3687
    %v3733 = vpack.c.b16 %v3690, %v3689
    %v3734 = vpack.c.b16 %v3692, %v3691
    %v3735 = vpack.c.b16 %v3694, %v3693
    %v3736 = vpack.c.b16 %v3696, %v3695
    %3777 = vmatpush.bf16.msra.mxu0 %v3704
    %3778 = vmatpush.bf16.msra.mxu0 %v3703
    %3779 = vmatpush.bf16.msra.mxu0 %v3702
    %3780 = vmatpush.bf16.msra.mxu0 %v3701
    %3781 = vmatpush.bf16.msra.mxu0 %v3700
    %3782 = vmatpush.bf16.msra.mxu0 %v3699
    %3783 = vmatpush.bf16.msra.mxu0 %v3698
    %3784 = vmatpush.bf16.msra.mxu0 %v3697
    %3785 = vmatmul.bf16.gmra.mxu0 %v3448
    %v3786 = vpop.f32.mrf.mxu0
    %v3787 = vadd.f32 %v3535, %v3786
    %v3788 = vpop.f32.mrf.mxu0
    %3789 = vdwg.mxu0
    %3790 = vmatpush.bf16.msra.mxu0 %v3712
    %3791 = vmatpush.bf16.msra.mxu0 %v3711
    %3792 = vmatpush.bf16.msra.mxu0 %v3710
    %3793 = vmatpush.bf16.msra.mxu0 %v3709
    %3794 = vmatpush.bf16.msra.mxu0 %v3708
    %3795 = vmatpush.bf16.msra.mxu0 %v3707
    %3796 = vmatpush.bf16.msra.mxu0 %v3706
    %3797 = vmatpush.bf16.msra.mxu0 %v3705
    %3798 = vmatmul.bf16.gmra.mxu0 %v3449
    %v3799 = vpop.f32.mrf.mxu0
    %v3800 = vadd.f32 %v3787, %v3799
    %v3801 = vpop.f32.mrf.mxu0
    %3802 = vdwg.mxu0
    %3803 = vmatpush.bf16.msra.mxu0 %v3720
    %3804 = vmatpush.bf16.msra.mxu0 %v3719
    %3805 = vmatpush.bf16.msra.mxu0 %v3718
    %3806 = vmatpush.bf16.msra.mxu0 %v3717
    %3807 = vmatpush.bf16.msra.mxu0 %v3716
    %3808 = vmatpush.bf16.msra.mxu0 %v3715
    %3809 = vmatpush.bf16.msra.mxu0 %v3714
    %3810 = vmatpush.bf16.msra.mxu0 %v3713
    %3811 = vmatmul.bf16.gmra.mxu0 %v3450
    %v3812 = vpop.f32.mrf.mxu0
    %v3813 = vadd.f32 %v3800, %v3812
    %v3814 = vpop.f32.mrf.mxu0
    %3815 = vdwg.mxu0
    %3816 = vmatpush.bf16.msra.mxu0 %v3728
    %3817 = vmatpush.bf16.msra.mxu0 %v3727
    %3818 = vmatpush.bf16.msra.mxu0 %v3726
    %3819 = vmatpush.bf16.msra.mxu0 %v3725
    %3820 = vmatpush.bf16.msra.mxu0 %v3724
    %3821 = vmatpush.bf16.msra.mxu0 %v3723
    %3822 = vmatpush.bf16.msra.mxu0 %v3722
    %3823 = vmatpush.bf16.msra.mxu0 %v3721
    %3824 = vmatmul.bf16.gmra.mxu0 %v3451
    %v3825 = vpop.f32.mrf.mxu0
    %v3826 = vadd.f32 %v3813, %v3825
    %v3827 = vpop.f32.mrf.mxu0
    %3828 = vdwg.mxu0
    %3829 = vmatpush.bf16.msra.mxu0 %v3736
    %3830 = vmatpush.bf16.msra.mxu0 %v3735
    %3831 = vmatpush.bf16.msra.mxu0 %v3734
    %3832 = vmatpush.bf16.msra.mxu0 %v3733
    %3833 = vmatpush.bf16.msra.mxu0 %v3732
    %3834 = vmatpush.bf16.msra.mxu0 %v3731
    %3835 = vmatpush.bf16.msra.mxu0 %v3730
    %3836 = vmatpush.bf16.msra.mxu0 %v3729
    %3837 = vmatmul.bf16.gmra.mxu0 %v3452
    %v3838 = vpop.f32.mrf.mxu0
    %v3839 = vadd.f32 %v3826, %v3838
    %v3840 = vpop.f32.mrf.mxu0
    %3841 = vdwg.mxu0
    %vm3842 = vcmask 58368
    %v3843 = vsel %vm3842, %v3839, -inf
    %3844 = vmax.xlane.f32.xlu0 %v3843
    %v3845 = vpop.xlane.xlu0 %3844
    %v3846 = vsub.f32 %v3839, %v3845
    %v3847 = vmul.f32 %v3846, 1.442695
    %v3848 = vpow.pop %v3847
    %v3849 = vsel %vm3842, %v3848, 0.0
    %3850 = vadd.xlane.f32.xlu0 %v3849
    %v3851 = vpop.xlane.xlu0 %3850
    %v3852 = vrcp.pop %v3851
    %v3853 = vmul.f32 %v3851, %v3852
    %v3854 = vsub.f32 1.0, %v3853
    %v3855 = vmul.f32 %v3852, %v3854
    %v3856 = vadd.f32 %v3852, %v3855
    %vm3857 = vweird.f32 %v3851
    %vm3858 = vweird.f32 %v3852
    %vm3859 = vmor %vm3857, %vm3858
    %v3860 = vsel %vm3859, %v3852, %v3856
    %v3861 = vand.u32 2147483647, %v3851
    %vm3862 = vcmp.eq.f32.partialorder %v3861, 8.507059e+37
    %v3863 = vand.u32 %v3851, 2147483648
    %v3864 = vor.u32 1.1754944e-38, %v3863
    %v3865 = vsel %vm3862, %v3864, %v3860
    %v3866 = vmul.f32 %v3848, %v3865
    %3867 = vst.msk [vmem:[#allocation7] sm:$0x3] %vm3842, %v3866
    // Predicated region
    $region78: #{tsem_forward.1} parent=1 // pred_check
      _
    $region79: #{tsem_forward.1} parent=1 // pred_check_branch
      %3869 = sbr.rel (0) target = $region81
    $region80: #{tsem_forward.1} parent=1 // pred_region
      %3871 = vsyncadd [#allocation6], 0
      %s3873 = sshll.u32 [#allocation7], 4
      %s3874 = int_to_ptr.vmem [resolvable:$true] %s3873
      %s3875 = sshll.u32 %s18, 4
      %s3876 = int_to_ptr.hbm [resolvable:$true] %s3875
      %3878 = dma.vmem_to_hbm [thread:$0]  %s3874, 32, %s3876, [#allocation6]
    $region81: #{tsem_forward.1} parent=1 // pred_fallthru
      _
    // Predicated region
    $region82: #{tsem_forward.1} parent=1 // pred_check
      _
    $region83: #{tsem_forward.1} parent=1 // pred_check_branch
      %3880 = sbr.rel (0) target = $region85
    $region84: #{tsem_forward.1} parent=1 // pred_region
      %3882 = dma.done [#allocation6], 32
    $region85: #{tsem_forward.1} parent=1 // pred_fallthru
      _
    %3883 = vsyncpa [#allocation5], 1
    %3884 = vsyncpa [#allocation6], 1

</llo_original>
